<compile_context>
chip_gen: v7x
topology: tpu7x:2x2x1
jax: 0.10.0
libtpu: 0.0.40
codegen_flags: <defaults>
</compile_context>

<pallas_src>
import functools
import math

import jax
import jax.numpy as jnp
from jax import lax
from jax.experimental import pallas as pl
from jax.experimental.pallas import tpu as pltpu


def _bottleneck_kernel(*refs, H, W, Ho, Wo, stride, has_proj):
    s = stride
    if has_proj and s != 1:
        (x_ref, w1, a1, b1, w2, a2, b2, w3, a3, b3,
         xs_ref, wsc, asc, bsc, o_ref, pad_ref, col_ref) = refs
    elif has_proj:
        (x_ref, w1, a1, b1, w2, a2, b2, w3, a3, b3,
         wsc, asc, bsc, o_ref, pad_ref, col_ref) = refs
    else:
        (x_ref, w1, a1, b1, w2, a2, b2, w3, a3, b3,
         o_ref, pad_ref, col_ref) = refs

    P = w1.shape[1]
    Hp, Wp, _ = pad_ref.shape

    # Input is channels-last (H*W, Cin) bf16 -- channels already on the lane
    # axis, no in-kernel transpose needed.
    x = x_ref[0]

    # ---- conv1 (1x1) + bn1 + relu  (bf16 MXU, f32 accumulate + epilogue) ----
    t = jnp.dot(x, w1[...], preferred_element_type=jnp.float32)
    t = jnp.maximum(t * a1[...] + b1[...], 0.0)            # (H*W, P) f32

    # ---- conv2 (3x3, stride=s, padding=1) + bn2 + relu ----------------------
    # Zero only the 1-pixel border / alignment tail (interior is fully
    # overwritten every step, so no full-buffer re-zero is needed).
    pad_ref[0:1, :, :] = jnp.zeros((1, Wp, P), pad_ref.dtype)
    pad_ref[H + 1:, :, :] = jnp.zeros((Hp - (H + 1), Wp, P), pad_ref.dtype)
    pad_ref[:, 0:1, :] = jnp.zeros((Hp, 1, P), pad_ref.dtype)
    pad_ref[:, W + 1:, :] = jnp.zeros((Hp, Wp - (W + 1), P), pad_ref.dtype)
    pad_ref[1:H + 1, 1:W + 1, :] = t.reshape(H, W, P)

    # Build the im2col slab (Ho*Wo, 9*P) in bf16, then one deep-K matmul.
    for dy in range(3):
        for dx in range(3):
            k = dy * 3 + dx
            if s == 1:
                win = pad_ref[dy:dy + H, dx:dx + W, :]
            else:
                full = pad_ref[dy:dy + s * Ho, dx:dx + s * Wo, :]
                win = full.reshape(Ho, s, Wo, s, P)[:, 0, :, 0, :]
            col_ref[:, k * P:(k + 1) * P] = (
                win.reshape(Ho * Wo, P).astype(col_ref.dtype))
    t2 = jnp.dot(col_ref[...], w2[...], preferred_element_type=jnp.float32)
    t2 = jnp.maximum(t2 * a2[...] + b2[...], 0.0)           # (Ho*Wo, P) f32

    # ---- conv3 (1x1) + bn3 ---------------------------------------------------
    main = jnp.dot(t2.astype(w3.dtype), w3[...],
                   preferred_element_type=jnp.float32)
    main = main * a3[...] + b3[...]                         # (Ho*Wo, Cout) f32

    # ---- shortcut -------------------------------------------------------------
    if has_proj:
        xs = xs_ref[0] if s != 1 else x                     # (Ho*Wo, Cin) bf16
        sc = jnp.dot(xs, wsc[...], preferred_element_type=jnp.float32)
        sc = sc * asc[...] + bsc[...]                       # (Ho*Wo, Cout) f32
    else:
        sc = x.astype(jnp.float32)                          # identity

    o_ref[0] = jnp.maximum(main + sc, 0.0).astype(o_ref.dtype)


def _fold_bn(params, prefix, eps=1e-5):
    gamma = params[f"{prefix}_gamma"].astype(jnp.float32)
    beta = params[f"{prefix}_beta"].astype(jnp.float32)
    mean = params[f"{prefix}_mean"].astype(jnp.float32)
    var = params[f"{prefix}_var"].astype(jnp.float32)
    a = gamma / jnp.sqrt(var + eps)
    b = beta - a * mean
    return a.reshape(1, -1), b.reshape(1, -1)


def bottleneck_forward(x_nchw, params, *, stride=1):
    """Pallas forward pass of the PyTorch Bottleneck block (eval-mode BN)."""
    N, Cin, H, W = x_nchw.shape
    P = params["conv1_w"].shape[0]             # planes
    Cout = params["conv3_w"].shape[0]          # expansion * planes
    s = int(stride)
    Ho = (H - 1) // s + 1
    Wo = (W - 1) // s + 1
    has_proj = "sc_conv_w" in params
    if not has_proj:
        assert s == 1 and Cin == Cout, (
            "identity shortcut requires stride == 1 and in_planes == expansion*planes")

    # One NCHW -> channels-last relayout in XLA (disappears when blocks are
    # chained / the network stays NHWC); bf16 activations for the MXU.
    x_nhwc = jnp.transpose(x_nchw, (0, 2, 3, 1)).astype(jnp.bfloat16)
    x_cl = x_nhwc.reshape(N, H * W, Cin)

    w1 = params["conv1_w"][:, :, 0, 0].T.astype(jnp.bfloat16)               # (Cin, P)
    a1, b1 = _fold_bn(params, "bn1")
    w2 = jnp.transpose(params["conv2_w"], (2, 3, 1, 0)) \
            .reshape(9 * P, P).astype(jnp.bfloat16)                          # (9P, P)
    a2, b2 = _fold_bn(params, "bn2")
    w3 = params["conv3_w"][:, :, 0, 0].T.astype(jnp.bfloat16)               # (P, Cout)
    a3, b3 = _fold_bn(params, "bn3")

    args = [x_cl, w1, a1, b1, w2, a2, b2, w3, a3, b3]
    in_specs = [
        pl.BlockSpec((1, H * W, Cin), lambda n: (n, 0, 0)),
        pl.BlockSpec((Cin, P), lambda n: (0, 0)),
        pl.BlockSpec((1, P), lambda n: (0, 0)),
        pl.BlockSpec((1, P), lambda n: (0, 0)),
        pl.BlockSpec((9 * P, P), lambda n: (0, 0)),
        pl.BlockSpec((1, P), lambda n: (0, 0)),
        pl.BlockSpec((1, P), lambda n: (0, 0)),
        pl.BlockSpec((P, Cout), lambda n: (0, 0)),
        pl.BlockSpec((1, Cout), lambda n: (0, 0)),
        pl.BlockSpec((1, Cout), lambda n: (0, 0)),
    ]
    if has_proj:
        if s != 1:
            x_sub = x_nhwc[:, ::s, ::s, :].reshape(N, Ho * Wo, Cin)
            args.append(x_sub)
            in_specs.append(pl.BlockSpec((1, Ho * Wo, Cin), lambda n: (n, 0, 0)))
        wsc = params["sc_conv_w"][:, :, 0, 0].T.astype(jnp.bfloat16)         # (Cin, Cout)
        asc, bsc = _fold_bn(params, "sc_bn")
        args += [wsc, asc, bsc]
        in_specs += [
            pl.BlockSpec((Cin, Cout), lambda n: (0, 0)),
            pl.BlockSpec((1, Cout), lambda n: (0, 0)),
            pl.BlockSpec((1, Cout), lambda n: (0, 0)),
        ]

    Hp = s * Ho + 2
    Wp = -(-(s * Wo + 2) // 8) * 8          # 8-aligned second-minor scratch dim

    kernel = functools.partial(_bottleneck_kernel, H=H, W=W, Ho=Ho, Wo=Wo,
                               stride=s, has_proj=has_proj)

    out_cl = pl.pallas_call(
        kernel,
        out_shape=jax.ShapeDtypeStruct((N, Ho * Wo, Cout), jnp.float32),
        grid_spec=pltpu.PrefetchScalarGridSpec(
            num_scalar_prefetch=0,
            grid=(N,),
            in_specs=in_specs,
            out_specs=pl.BlockSpec((1, Ho * Wo, Cout), lambda n: (n, 0, 0)),
            scratch_shapes=[
                pltpu.VMEM((Hp, Wp, P), jnp.float32),          # padded conv2 input
                pltpu.VMEM((Ho * Wo, 9 * P), jnp.bfloat16),    # im2col slab
            ],
        ),
        compiler_params=pltpu.CompilerParams(
            dimension_semantics=("parallel",)),
    )(*args)

    # Channels-last -> NCHW once at exit (folds away for chained blocks).
    return jnp.transpose(out_cl.reshape(N, Ho, Wo, Cout), (0, 3, 1, 2))


# ------------------------- pure-JAX reference & test -------------------------

def _bottleneck_reference(x, params, stride):
    eps = 1e-5

    def conv(inp, w, s=1, p=0):
        return lax.conv_general_dilated(
            inp, w, window_strides=(s, s), padding=[(p, p), (p, p)],
            dimension_numbers=("NCHW", "OIHW", "NCHW"))

    def bn(inp, prefix):
        a = params[f"{prefix}_gamma"] / jnp.sqrt(params[f"{prefix}_var"] + eps)
        b = params[f"{prefix}_beta"] - a * params[f"{prefix}_mean"]
        return inp * a[None, :, None, None] + b[None, :, None, None]

    out = jax.nn.relu(bn(conv(x, params["conv1_w"]), "bn1"))
    out = jax.nn.relu(bn(conv(out, params["conv2_w"], s=stride, p=1), "bn2"))
    out = bn(conv(out, params["conv3_w"]), "bn3")
    if "sc_conv_w" in params:
        sc = bn(conv(x, params["sc_conv_w"], s=stride), "sc_bn")
    else:
        sc = x
    return jax.nn.relu(out + sc)


def _make_bottleneck_params(key, in_planes, planes, stride):
    expansion = 4
    cout = expansion * planes
    keys = jax.random.split(key, 8)

    def conv_w(k, o, i, kh, kw):
        fan_in = i * kh * kw
        return jax.random.normal(k, (o, i, kh, kw), jnp.float32) / math.sqrt(fan_in)

    def bn_p(k, c, prefix):
        k1, k2, k3, k4 = jax.random.split(k, 4)
        return {
            f"{prefix}_gamma": jax.random.uniform(k1, (c,), jnp.float32, 0.5, 1.5),
            f"{prefix}_beta": 0.1 * jax.random.normal(k2, (c,), jnp.float32),
            f"{prefix}_mean": 0.1 * jax.random.normal(k3, (c,), jnp.float32),
            f"{prefix}_var": jax.random.uniform(k4, (c,), jnp.float32, 0.5, 1.5),
        }

    params = {"conv1_w": conv_w(keys[0], planes, in_planes, 1, 1)}
    params.update(bn_p(keys[1], planes, "bn1"))
    params["conv2_w"] = conv_w(keys[2], planes, planes, 3, 3)
    params.update(bn_p(keys[3], planes, "bn2"))
    params["conv3_w"] = conv_w(keys[4], cout, planes, 1, 1)
    params.update(bn_p(keys[5], cout, "bn3"))
    if stride != 1 or in_planes != cout:                  # same rule as PyTorch
        params["sc_conv_w"] = conv_w(keys[6], cout, in_planes, 1, 1)
        params.update(bn_p(keys[7], cout, "sc_bn"))
    return params


if __name__ == "__main__":
    root = jax.random.PRNGKey(0)
    kx1, kp1, kx2, kp2, kx3, kp3 = jax.random.split(root, 6)
    # bf16 MXU inputs + f32 accumulation -> loosen tolerance vs. the f32 reference.
    ATOL = RTOL = 5e-2

    # Case 1: projection shortcut (in_planes != expansion*planes), stride=1.
    x1 = jax.random.normal(kx1, (2, 4, 16, 16), jnp.float32)
    p1 = _make_bottleneck_params(kp1, in_planes=4, planes=4, stride=1)
    y1 = jax.block_until_ready(bottleneck_forward(x1, p1, stride=1))
    r1 = _bottleneck_reference(x1, p1, 1)
    assert y1.shape == (2, 16, 16, 16), y1.shape
    assert jnp.allclose(y1, r1, atol=ATOL, rtol=RTOL), float(jnp.max(jnp.abs(y1 - r1)))

    # Case 2: strided projection shortcut (stride=2).
    x2 = jax.random.normal(kx2, (2, 8, 16, 16), jnp.float32)
    p2 = _make_bottleneck_params(kp2, in_planes=8, planes=4, stride=2)
    y2 = jax.block_until_ready(bottleneck_forward(x2, p2, stride=2))
    r2 = _bottleneck_reference(x2, p2, 2)
    assert y2.shape == (2, 16, 8, 8), y2.shape
    assert jnp.allclose(y2, r2, atol=ATOL, rtol=RTOL), float(jnp.max(jnp.abs(y2 - r2)))

    # Case 3: identity shortcut (in_planes == expansion*planes, stride=1).
    x3 = jax.random.normal(kx3, (2, 16, 8, 8), jnp.float32)
    p3 = _make_bottleneck_params(kp3, in_planes=16, planes=4, stride=1)
    y3 = jax.block_until_ready(bottleneck_forward(x3, p3, stride=1))
    r3 = _bottleneck_reference(x3, p3, 1)
    assert y3.shape == (2, 16, 8, 8), y3.shape
    assert jnp.allclose(y3, r3, atol=ATOL, rtol=RTOL), float(jnp.max(jnp.abs(y3 - r3)))

    print("KERNEL_OK")
</pallas_src>

<mosaic_0001>
module attributes {stable_mosaic.version = 11 : i64} {
  func.func @_bottleneck_kernel(%arg0: i32, %arg1: memref<1x256x4xbf16, #tpu.memory_space<vmem>>, %arg2: memref<4x4xbf16, #tpu.memory_space<vmem>>, %arg3: memref<1x4xf32, #tpu.memory_space<vmem>>, %arg4: memref<1x4xf32, #tpu.memory_space<vmem>>, %arg5: memref<36x4xbf16, #tpu.memory_space<vmem>>, %arg6: memref<1x4xf32, #tpu.memory_space<vmem>>, %arg7: memref<1x4xf32, #tpu.memory_space<vmem>>, %arg8: memref<4x16xbf16, #tpu.memory_space<vmem>>, %arg9: memref<1x16xf32, #tpu.memory_space<vmem>>, %arg10: memref<1x16xf32, #tpu.memory_space<vmem>>, %arg11: memref<4x16xbf16, #tpu.memory_space<vmem>>, %arg12: memref<1x16xf32, #tpu.memory_space<vmem>>, %arg13: memref<1x16xf32, #tpu.memory_space<vmem>>, %arg14: memref<1x256x16xf32, #tpu.memory_space<vmem>>, %arg15: memref<18x24x4xf32, #tpu.memory_space<vmem>>, %arg16: memref<256x36xbf16, #tpu.memory_space<vmem>>) attributes {dimension_semantics = [#tpu.dimension_semantics<parallel>], iteration_bounds = array<i64: 2>, scalar_prefetch = 0 : i64, scratch_operands = 2 : i64, tpu.core_type = #tpu.core_type<tc>, window_params = [{transform_indices = @transform_0, window_bounds = array<i64: 1, 256, 4>}, {pipeline_mode = #tpu.pipeline_mode<synchronous>, transform_indices = @transform_1, window_bounds = array<i64: 4, 4>}, {pipeline_mode = #tpu.pipeline_mode<synchronous>, transform_indices = @transform_2, window_bounds = array<i64: 1, 4>}, {pipeline_mode = #tpu.pipeline_mode<synchronous>, transform_indices = @transform_3, window_bounds = array<i64: 1, 4>}, {pipeline_mode = #tpu.pipeline_mode<synchronous>, transform_indices = @transform_4, window_bounds = array<i64: 36, 4>}, {pipeline_mode = #tpu.pipeline_mode<synchronous>, transform_indices = @transform_5, window_bounds = array<i64: 1, 4>}, {pipeline_mode = #tpu.pipeline_mode<synchronous>, transform_indices = @transform_6, window_bounds = array<i64: 1, 4>}, {pipeline_mode = #tpu.pipeline_mode<synchronous>, transform_indices = @transform_7, window_bounds = array<i64: 4, 16>}, {pipeline_mode = #tpu.pipeline_mode<synchronous>, transform_indices = @transform_8, window_bounds = array<i64: 1, 16>}, {pipeline_mode = #tpu.pipeline_mode<synchronous>, transform_indices = @transform_9, window_bounds = array<i64: 1, 16>}, {pipeline_mode = #tpu.pipeline_mode<synchronous>, transform_indices = @transform_10, window_bounds = array<i64: 4, 16>}, {pipeline_mode = #tpu.pipeline_mode<synchronous>, transform_indices = @transform_11, window_bounds = array<i64: 1, 16>}, {pipeline_mode = #tpu.pipeline_mode<synchronous>, transform_indices = @transform_12, window_bounds = array<i64: 1, 16>}, {transform_indices = @transform_13, window_bounds = array<i64: 1, 256, 16>}]} {
    %c0 = arith.constant 0 : index
    %c0_0 = arith.constant 0 : index
    %c0_1 = arith.constant 0 : index
    %0 = vector.load %arg1[%c0, %c0_0, %c0_1] : memref<1x256x4xbf16, #tpu.memory_space<vmem>>, vector<1x256x4xbf16>
    %1 = vector.shape_cast %0 : vector<1x256x4xbf16> to vector<256x4xbf16>
    %c0_2 = arith.constant 0 : index
    %c0_3 = arith.constant 0 : index
    %2 = vector.load %arg2[%c0_2, %c0_3] : memref<4x4xbf16, #tpu.memory_space<vmem>>, vector<4x4xbf16>
    %cst = arith.constant dense<0.000000e+00> : vector<256x4xf32>
    %3 = tpu.matmul %1, %2, %cst {dimension_numbers = #tpu.dot_dimension_numbers<[1], [0], [0], [1], [0, 0, 1, 1], [], []>} : vector<256x4xbf16>, vector<4x4xbf16>, vector<256x4xf32> -> vector<256x4xf32>
    %c0_4 = arith.constant 0 : index
    %c0_5 = arith.constant 0 : index
    %4 = vector.load %arg3[%c0_4, %c0_5] : memref<1x4xf32, #tpu.memory_space<vmem>>, vector<1x4xf32>
    %5 = vector.broadcast %4 : vector<1x4xf32> to vector<256x4xf32>
    %6 = arith.mulf %3, %5 : vector<256x4xf32>
    %c0_6 = arith.constant 0 : index
    %c0_7 = arith.constant 0 : index
    %7 = vector.load %arg4[%c0_6, %c0_7] : memref<1x4xf32, #tpu.memory_space<vmem>>, vector<1x4xf32>
    %8 = vector.broadcast %7 : vector<1x4xf32> to vector<256x4xf32>
    %9 = arith.addf %6, %8 : vector<256x4xf32>
    %cst_8 = arith.constant 0.000000e+00 : f32
    %10 = vector.broadcast %cst_8 : f32 to vector<256x4xf32>
    %11 = arith.maximumf %9, %10 : vector<256x4xf32>
    %cst_9 = arith.constant 0.000000e+00 : f32
    %12 = vector.broadcast %cst_9 : f32 to vector<1x24x4xf32>
    %c0_10 = arith.constant 0 : index
    %c0_11 = arith.constant 0 : index
    %c0_12 = arith.constant 0 : index
    %13 = vector.load %arg15[%c0_10, %c0_11, %c0_12] : memref<18x24x4xf32, #tpu.memory_space<vmem>>, vector<1x24x4xf32>
    tpu.vector_store %arg15[%c0_10, %c0_11, %c0_12], %12 {strides = array<i32>} : memref<18x24x4xf32, #tpu.memory_space<vmem>>, vector<1x24x4xf32>,
    %cst_13 = arith.constant 0.000000e+00 : f32
    %14 = vector.broadcast %cst_13 : f32 to vector<1x24x4xf32>
    %c17 = arith.constant 17 : index
    %c0_14 = arith.constant 0 : index
    %c0_15 = arith.constant 0 : index
    %15 = vector.load %arg15[%c17, %c0_14, %c0_15] : memref<18x24x4xf32, #tpu.memory_space<vmem>>, vector<1x24x4xf32>
    tpu.vector_store %arg15[%c17, %c0_14, %c0_15], %14 {strides = array<i32>} : memref<18x24x4xf32, #tpu.memory_space<vmem>>, vector<1x24x4xf32>,
    %cst_16 = arith.constant 0.000000e+00 : f32
    %16 = vector.broadcast %cst_16 : f32 to vector<18x1x4xf32>
    %c0_17 = arith.constant 0 : index
    %c0_18 = arith.constant 0 : index
    %c0_19 = arith.constant 0 : index
    %17 = vector.load %arg15[%c0_17, %c0_18, %c0_19] : memref<18x24x4xf32, #tpu.memory_space<vmem>>, vector<18x1x4xf32>
    tpu.vector_store %arg15[%c0_17, %c0_18, %c0_19], %16 {strides = array<i32>} : memref<18x24x4xf32, #tpu.memory_space<vmem>>, vector<18x1x4xf32>,
    %cst_20 = arith.constant 0.000000e+00 : f32
    %18 = vector.broadcast %cst_20 : f32 to vector<18x7x4xf32>
    %c0_21 = arith.constant 0 : index
    %c17_22 = arith.constant 17 : index
    %c0_23 = arith.constant 0 : index
    %19 = vector.load %arg15[%c0_21, %c17_22, %c0_23] : memref<18x24x4xf32, #tpu.memory_space<vmem>>, vector<18x7x4xf32>
    tpu.vector_store %arg15[%c0_21, %c17_22, %c0_23], %18 {strides = array<i32>} : memref<18x24x4xf32, #tpu.memory_space<vmem>>, vector<18x7x4xf32>,
    %20 = vector.shape_cast %11 : vector<256x4xf32> to vector<16x16x4xf32>
    %c1 = arith.constant 1 : index
    %c1_24 = arith.constant 1 : index
    %c0_25 = arith.constant 0 : index
    %21 = vector.load %arg15[%c1, %c1_24, %c0_25] : memref<18x24x4xf32, #tpu.memory_space<vmem>>, vector<16x16x4xf32>
    tpu.vector_store %arg15[%c1, %c1_24, %c0_25], %20 {strides = array<i32>} : memref<18x24x4xf32, #tpu.memory_space<vmem>>, vector<16x16x4xf32>,
    %c0_26 = arith.constant 0 : index
    %c0_27 = arith.constant 0 : index
    %c0_28 = arith.constant 0 : index
    %22 = vector.load %arg15[%c0_26, %c0_27, %c0_28] : memref<18x24x4xf32, #tpu.memory_space<vmem>>, vector<16x16x4xf32>
    %23 = vector.shape_cast %22 : vector<16x16x4xf32> to vector<256x4xf32>
    %24 = arith.truncf %23 : vector<256x4xf32> to vector<256x4xbf16>
    %c0_29 = arith.constant 0 : index
    %c0_30 = arith.constant 0 : index
    %25 = vector.load %arg16[%c0_29, %c0_30] : memref<256x36xbf16, #tpu.memory_space<vmem>>, vector<256x4xbf16>
    tpu.vector_store %arg16[%c0_29, %c0_30], %24 {strides = array<i32>} : memref<256x36xbf16, #tpu.memory_space<vmem>>, vector<256x4xbf16>,
    %c0_31 = arith.constant 0 : index
    %c1_32 = arith.constant 1 : index
    %c0_33 = arith.constant 0 : index
    %26 = vector.load %arg15[%c0_31, %c1_32, %c0_33] : memref<18x24x4xf32, #tpu.memory_space<vmem>>, vector<16x16x4xf32>
    %27 = vector.shape_cast %26 : vector<16x16x4xf32> to vector<256x4xf32>
    %28 = arith.truncf %27 : vector<256x4xf32> to vector<256x4xbf16>
    %c0_34 = arith.constant 0 : index
    %c4 = arith.constant 4 : index
    %29 = vector.load %arg16[%c0_34, %c4] : memref<256x36xbf16, #tpu.memory_space<vmem>>, vector<256x4xbf16>
    tpu.vector_store %arg16[%c0_34, %c4], %28 {strides = array<i32>} : memref<256x36xbf16, #tpu.memory_space<vmem>>, vector<256x4xbf16>,
    %c0_35 = arith.constant 0 : index
    %c2 = arith.constant 2 : index
    %c0_36 = arith.constant 0 : index
    %30 = vector.load %arg15[%c0_35, %c2, %c0_36] : memref<18x24x4xf32, #tpu.memory_space<vmem>>, vector<16x16x4xf32>
    %31 = vector.shape_cast %30 : vector<16x16x4xf32> to vector<256x4xf32>
    %32 = arith.truncf %31 : vector<256x4xf32> to vector<256x4xbf16>
    %c0_37 = arith.constant 0 : index
    %c8 = arith.constant 8 : index
    %33 = vector.load %arg16[%c0_37, %c8] : memref<256x36xbf16, #tpu.memory_space<vmem>>, vector<256x4xbf16>
    tpu.vector_store %arg16[%c0_37, %c8], %32 {strides = array<i32>} : memref<256x36xbf16, #tpu.memory_space<vmem>>, vector<256x4xbf16>,
    %c1_38 = arith.constant 1 : index
    %c0_39 = arith.constant 0 : index
    %c0_40 = arith.constant 0 : index
    %34 = vector.load %arg15[%c1_38, %c0_39, %c0_40] : memref<18x24x4xf32, #tpu.memory_space<vmem>>, vector<16x16x4xf32>
    %35 = vector.shape_cast %34 : vector<16x16x4xf32> to vector<256x4xf32>
    %36 = arith.truncf %35 : vector<256x4xf32> to vector<256x4xbf16>
    %c0_41 = arith.constant 0 : index
    %c12 = arith.constant 12 : index
    %37 = vector.load %arg16[%c0_41, %c12] : memref<256x36xbf16, #tpu.memory_space<vmem>>, vector<256x4xbf16>
    tpu.vector_store %arg16[%c0_41, %c12], %36 {strides = array<i32>} : memref<256x36xbf16, #tpu.memory_space<vmem>>, vector<256x4xbf16>,
    %c1_42 = arith.constant 1 : index
    %c1_43 = arith.constant 1 : index
    %c0_44 = arith.constant 0 : index
    %38 = vector.load %arg15[%c1_42, %c1_43, %c0_44] : memref<18x24x4xf32, #tpu.memory_space<vmem>>, vector<16x16x4xf32>
    %39 = vector.shape_cast %38 : vector<16x16x4xf32> to vector<256x4xf32>
    %40 = arith.truncf %39 : vector<256x4xf32> to vector<256x4xbf16>
    %c0_45 = arith.constant 0 : index
    %c16 = arith.constant 16 : index
    %41 = vector.load %arg16[%c0_45, %c16] : memref<256x36xbf16, #tpu.memory_space<vmem>>, vector<256x4xbf16>
    tpu.vector_store %arg16[%c0_45, %c16], %40 {strides = array<i32>} : memref<256x36xbf16, #tpu.memory_space<vmem>>, vector<256x4xbf16>,
    %c1_46 = arith.constant 1 : index
    %c2_47 = arith.constant 2 : index
    %c0_48 = arith.constant 0 : index
    %42 = vector.load %arg15[%c1_46, %c2_47, %c0_48] : memref<18x24x4xf32, #tpu.memory_space<vmem>>, vector<16x16x4xf32>
    %43 = vector.shape_cast %42 : vector<16x16x4xf32> to vector<256x4xf32>
    %44 = arith.truncf %43 : vector<256x4xf32> to vector<256x4xbf16>
    %c0_49 = arith.constant 0 : index
    %c20 = arith.constant 20 : index
    %45 = vector.load %arg16[%c0_49, %c20] : memref<256x36xbf16, #tpu.memory_space<vmem>>, vector<256x4xbf16>
    tpu.vector_store %arg16[%c0_49, %c20], %44 {strides = array<i32>} : memref<256x36xbf16, #tpu.memory_space<vmem>>, vector<256x4xbf16>,
    %c2_50 = arith.constant 2 : index
    %c0_51 = arith.constant 0 : index
    %c0_52 = arith.constant 0 : index
    %46 = vector.load %arg15[%c2_50, %c0_51, %c0_52] : memref<18x24x4xf32, #tpu.memory_space<vmem>>, vector<16x16x4xf32>
    %47 = vector.shape_cast %46 : vector<16x16x4xf32> to vector<256x4xf32>
    %48 = arith.truncf %47 : vector<256x4xf32> to vector<256x4xbf16>
    %c0_53 = arith.constant 0 : index
    %c24 = arith.constant 24 : index
    %49 = vector.load %arg16[%c0_53, %c24] : memref<256x36xbf16, #tpu.memory_space<vmem>>, vector<256x4xbf16>
    tpu.vector_store %arg16[%c0_53, %c24], %48 {strides = array<i32>} : memref<256x36xbf16, #tpu.memory_space<vmem>>, vector<256x4xbf16>,
    %c2_54 = arith.constant 2 : index
    %c1_55 = arith.constant 1 : index
    %c0_56 = arith.constant 0 : index
    %50 = vector.load %arg15[%c2_54, %c1_55, %c0_56] : memref<18x24x4xf32, #tpu.memory_space<vmem>>, vector<16x16x4xf32>
    %51 = vector.shape_cast %50 : vector<16x16x4xf32> to vector<256x4xf32>
    %52 = arith.truncf %51 : vector<256x4xf32> to vector<256x4xbf16>
    %c0_57 = arith.constant 0 : index
    %c28 = arith.constant 28 : index
    %53 = vector.load %arg16[%c0_57, %c28] : memref<256x36xbf16, #tpu.memory_space<vmem>>, vector<256x4xbf16>
    tpu.vector_store %arg16[%c0_57, %c28], %52 {strides = array<i32>} : memref<256x36xbf16, #tpu.memory_space<vmem>>, vector<256x4xbf16>,
    %c2_58 = arith.constant 2 : index
    %c2_59 = arith.constant 2 : index
    %c0_60 = arith.constant 0 : index
    %54 = vector.load %arg15[%c2_58, %c2_59, %c0_60] : memref<18x24x4xf32, #tpu.memory_space<vmem>>, vector<16x16x4xf32>
    %55 = vector.shape_cast %54 : vector<16x16x4xf32> to vector<256x4xf32>
    %56 = arith.truncf %55 : vector<256x4xf32> to vector<256x4xbf16>
    %c0_61 = arith.constant 0 : index
    %c32 = arith.constant 32 : index
    %57 = vector.load %arg16[%c0_61, %c32] : memref<256x36xbf16, #tpu.memory_space<vmem>>, vector<256x4xbf16>
    tpu.vector_store %arg16[%c0_61, %c32], %56 {strides = array<i32>} : memref<256x36xbf16, #tpu.memory_space<vmem>>, vector<256x4xbf16>,
    %c0_62 = arith.constant 0 : index
    %c0_63 = arith.constant 0 : index
    %58 = vector.load %arg16[%c0_62, %c0_63] : memref<256x36xbf16, #tpu.memory_space<vmem>>, vector<256x36xbf16>
    %c0_64 = arith.constant 0 : index
    %c0_65 = arith.constant 0 : index
    %59 = vector.load %arg5[%c0_64, %c0_65] : memref<36x4xbf16, #tpu.memory_space<vmem>>, vector<36x4xbf16>
    %cst_66 = arith.constant dense<0.000000e+00> : vector<256x4xf32>
    %60 = tpu.matmul %58, %59, %cst_66 {dimension_numbers = #tpu.dot_dimension_numbers<[1], [0], [0], [1], [0, 0, 1, 1], [], []>} : vector<256x36xbf16>, vector<36x4xbf16>, vector<256x4xf32> -> vector<256x4xf32>
    %c0_67 = arith.constant 0 : index
    %c0_68 = arith.constant 0 : index
    %61 = vector.load %arg6[%c0_67, %c0_68] : memref<1x4xf32, #tpu.memory_space<vmem>>, vector<1x4xf32>
    %62 = vector.broadcast %61 : vector<1x4xf32> to vector<256x4xf32>
    %63 = arith.mulf %60, %62 : vector<256x4xf32>
    %c0_69 = arith.constant 0 : index
    %c0_70 = arith.constant 0 : index
    %64 = vector.load %arg7[%c0_69, %c0_70] : memref<1x4xf32, #tpu.memory_space<vmem>>, vector<1x4xf32>
    %65 = vector.broadcast %64 : vector<1x4xf32> to vector<256x4xf32>
    %66 = arith.addf %63, %65 : vector<256x4xf32>
    %cst_71 = arith.constant 0.000000e+00 : f32
    %67 = vector.broadcast %cst_71 : f32 to vector<256x4xf32>
    %68 = arith.maximumf %66, %67 : vector<256x4xf32>
    %69 = arith.truncf %68 : vector<256x4xf32> to vector<256x4xbf16>
    %c0_72 = arith.constant 0 : index
    %c0_73 = arith.constant 0 : index
    %70 = vector.load %arg8[%c0_72, %c0_73] : memref<4x16xbf16, #tpu.memory_space<vmem>>, vector<4x16xbf16>
    %cst_74 = arith.constant dense<0.000000e+00> : vector<256x16xf32>
    %71 = tpu.matmul %69, %70, %cst_74 {dimension_numbers = #tpu.dot_dimension_numbers<[1], [0], [0], [1], [0, 0, 1, 1], [], []>} : vector<256x4xbf16>, vector<4x16xbf16>, vector<256x16xf32> -> vector<256x16xf32>
    %c0_75 = arith.constant 0 : index
    %c0_76 = arith.constant 0 : index
    %72 = vector.load %arg9[%c0_75, %c0_76] : memref<1x16xf32, #tpu.memory_space<vmem>>, vector<1x16xf32>
    %73 = vector.broadcast %72 : vector<1x16xf32> to vector<256x16xf32>
    %74 = arith.mulf %71, %73 : vector<256x16xf32>
    %c0_77 = arith.constant 0 : index
    %c0_78 = arith.constant 0 : index
    %75 = vector.load %arg10[%c0_77, %c0_78] : memref<1x16xf32, #tpu.memory_space<vmem>>, vector<1x16xf32>
    %76 = vector.broadcast %75 : vector<1x16xf32> to vector<256x16xf32>
    %77 = arith.addf %74, %76 : vector<256x16xf32>
    %c0_79 = arith.constant 0 : index
    %c0_80 = arith.constant 0 : index
    %78 = vector.load %arg11[%c0_79, %c0_80] : memref<4x16xbf16, #tpu.memory_space<vmem>>, vector<4x16xbf16>
    %cst_81 = arith.constant dense<0.000000e+00> : vector<256x16xf32>
    %79 = tpu.matmul %1, %78, %cst_81 {dimension_numbers = #tpu.dot_dimension_numbers<[1], [0], [0], [1], [0, 0, 1, 1], [], []>} : vector<256x4xbf16>, vector<4x16xbf16>, vector<256x16xf32> -> vector<256x16xf32>
    %c0_82 = arith.constant 0 : index
    %c0_83 = arith.constant 0 : index
    %80 = vector.load %arg12[%c0_82, %c0_83] : memref<1x16xf32, #tpu.memory_space<vmem>>, vector<1x16xf32>
    %81 = vector.broadcast %80 : vector<1x16xf32> to vector<256x16xf32>
    %82 = arith.mulf %79, %81 : vector<256x16xf32>
    %c0_84 = arith.constant 0 : index
    %c0_85 = arith.constant 0 : index
    %83 = vector.load %arg13[%c0_84, %c0_85] : memref<1x16xf32, #tpu.memory_space<vmem>>, vector<1x16xf32>
    %84 = vector.broadcast %83 : vector<1x16xf32> to vector<256x16xf32>
    %85 = arith.addf %82, %84 : vector<256x16xf32>
    %86 = arith.addf %77, %85 : vector<256x16xf32>
    %cst_86 = arith.constant 0.000000e+00 : f32
    %87 = vector.broadcast %cst_86 : f32 to vector<256x16xf32>
    %88 = arith.maximumf %86, %87 : vector<256x16xf32>
    %c0_87 = arith.constant 0 : index
    %c0_88 = arith.constant 0 : index
    %c0_89 = arith.constant 0 : index
    %89 = vector.load %arg14[%c0_87, %c0_88, %c0_89] : memref<1x256x16xf32, #tpu.memory_space<vmem>>, vector<1x256x16xf32>
    %90 = vector.shape_cast %89 : vector<1x256x16xf32> to vector<256x16xf32>
    %91 = vector.shape_cast %88 : vector<256x16xf32> to vector<1x256x16xf32>
    tpu.vector_store %arg14[%c0_87, %c0_88, %c0_89], %91 {strides = array<i32>} : memref<1x256x16xf32, #tpu.memory_space<vmem>>, vector<1x256x16xf32>,
    return
  }
  func.func @transform_0(%arg0: i32) -> (i32, i32, i32) {
    %c0_i32 = arith.constant 0 : i32
    %c0_i32_0 = arith.constant 0 : i32
    %c0_i32_1 = arith.constant 0 : i32
    return %arg0, %c0_i32, %c0_i32_0 : i32, i32, i32
  }
  func.func @transform_1(%arg0: i32) -> (i32, i32) {
    %c0_i32 = arith.constant 0 : i32
    %c0_i32_0 = arith.constant 0 : i32
    %c0_i32_1 = arith.constant 0 : i32
    return %c0_i32, %c0_i32_0 : i32, i32
  }
  func.func @transform_2(%arg0: i32) -> (i32, i32) {
    %c0_i32 = arith.constant 0 : i32
    %c0_i32_0 = arith.constant 0 : i32
    %c0_i32_1 = arith.constant 0 : i32
    return %c0_i32, %c0_i32_0 : i32, i32
  }
  func.func @transform_3(%arg0: i32) -> (i32, i32) {
    %c0_i32 = arith.constant 0 : i32
    %c0_i32_0 = arith.constant 0 : i32
    %c0_i32_1 = arith.constant 0 : i32
    return %c0_i32, %c0_i32_0 : i32, i32
  }
  func.func @transform_4(%arg0: i32) -> (i32, i32) {
    %c0_i32 = arith.constant 0 : i32
    %c0_i32_0 = arith.constant 0 : i32
    %c0_i32_1 = arith.constant 0 : i32
    return %c0_i32, %c0_i32_0 : i32, i32
  }
  func.func @transform_5(%arg0: i32) -> (i32, i32) {
    %c0_i32 = arith.constant 0 : i32
    %c0_i32_0 = arith.constant 0 : i32
    %c0_i32_1 = arith.constant 0 : i32
    return %c0_i32, %c0_i32_0 : i32, i32
  }
  func.func @transform_6(%arg0: i32) -> (i32, i32) {
    %c0_i32 = arith.constant 0 : i32
    %c0_i32_0 = arith.constant 0 : i32
    %c0_i32_1 = arith.constant 0 : i32
    return %c0_i32, %c0_i32_0 : i32, i32
  }
  func.func @transform_7(%arg0: i32) -> (i32, i32) {
    %c0_i32 = arith.constant 0 : i32
    %c0_i32_0 = arith.constant 0 : i32
    %c0_i32_1 = arith.constant 0 : i32
    return %c0_i32, %c0_i32_0 : i32, i32
  }
  func.func @transform_8(%arg0: i32) -> (i32, i32) {
    %c0_i32 = arith.constant 0 : i32
    %c0_i32_0 = arith.constant 0 : i32
    %c0_i32_1 = arith.constant 0 : i32
    return %c0_i32, %c0_i32_0 : i32, i32
  }
  func.func @transform_9(%arg0: i32) -> (i32, i32) {
    %c0_i32 = arith.constant 0 : i32
    %c0_i32_0 = arith.constant 0 : i32
    %c0_i32_1 = arith.constant 0 : i32
    return %c0_i32, %c0_i32_0 : i32, i32
  }
  func.func @transform_10(%arg0: i32) -> (i32, i32) {
    %c0_i32 = arith.constant 0 : i32
    %c0_i32_0 = arith.constant 0 : i32
    %c0_i32_1 = arith.constant 0 : i32
    return %c0_i32, %c0_i32_0 : i32, i32
  }
  func.func @transform_11(%arg0: i32) -> (i32, i32) {
    %c0_i32 = arith.constant 0 : i32
    %c0_i32_0 = arith.constant 0 : i32
    %c0_i32_1 = arith.constant 0 : i32
    return %c0_i32, %c0_i32_0 : i32, i32
  }
  func.func @transform_12(%arg0: i32) -> (i32, i32) {
    %c0_i32 = arith.constant 0 : i32
    %c0_i32_0 = arith.constant 0 : i32
    %c0_i32_1 = arith.constant 0 : i32
    return %c0_i32, %c0_i32_0 : i32, i32
  }
  func.func @transform_13(%arg0: i32) -> (i32, i32, i32) {
    %c0_i32 = arith.constant 0 : i32
    %c0_i32_0 = arith.constant 0 : i32
    %c0_i32_1 = arith.constant 0 : i32
    return %arg0, %c0_i32, %c0_i32_0 : i32, i32, i32
  }
}

</mosaic_0001>

<llo_original>
// kernel: tpu_custom_call.1
$region0: #{tpu_custom_call.1}
  #allocation0 [shape = 'u32[]', space=smem, size = 0x4, offset = 0x4, fixed_abs, tag = 'smem constant byte address 0x4 - core index']
  #allocation1 [shape = 'u32[144,128]{1,0:T(1,128)}', space=vmem, size = 0x12000, scoped, tag = 'internal scratch']
  #allocation2 [shape = 'f32[18,24,4]{2,1,0:T(8,128)}', space=vmem, size = 0x36000, scoped, tag = 'scratch operand']
  #allocation3 [shape = 'bf16[256,36]{1,0:T(16,128)(2,1)}', space=vmem, size = 0x10000, scoped, tag = 'scratch operand']
  %s0 = inlined_call_operand.vmem [shape: bf16[2,256,4], index: 0, kind: input, shape index: {}]
  %s1 = inlined_call_operand.vmem [shape: bf16[4,4], index: 1, kind: input, shape index: {}]
  %s2 = inlined_call_operand.vmem [shape: f32[1,4], index: 2, kind: input, shape index: {}]
  %s3 = inlined_call_operand.vmem [shape: f32[1,4], index: 3, kind: input, shape index: {}]
  %s4 = inlined_call_operand.vmem [shape: bf16[36,4], index: 4, kind: input, shape index: {}]
  %s5 = inlined_call_operand.vmem [shape: f32[1,4], index: 5, kind: input, shape index: {}]
  %s6 = inlined_call_operand.vmem [shape: f32[1,4], index: 6, kind: input, shape index: {}]
  %s7 = inlined_call_operand.vmem [shape: bf16[4,16], index: 7, kind: input, shape index: {}]
  %s8 = inlined_call_operand.vmem [shape: f32[1,16], index: 8, kind: input, shape index: {}]
  %s9 = inlined_call_operand.vmem [shape: f32[1,16], index: 9, kind: input, shape index: {}]
  %s10 = inlined_call_operand.vmem [shape: bf16[4,16], index: 10, kind: input, shape index: {}]
  %s11 = inlined_call_operand.vmem [shape: f32[1,16], index: 11, kind: input, shape index: {}]
  %s12 = inlined_call_operand.vmem [shape: f32[1,16], index: 12, kind: input, shape index: {}]
  %s13 = inlined_call_operand.vmem [shape: f32[2,256,16], index: 13, kind: output, shape index: {}]
  %s14 = sld [smem:[#allocation0]]
  $region85: #{tpu_custom_call.1} parent=0
    _
  %s16 = ssub.s32 1, %s14
  %s17 = scalar_select 0, %s16, %s14
  loop: start=0, step=1, limit=4
  $region2: #{tpu_custom_call.1} parent=0 // loop_pre_header
    _
  $region3: #{tpu_custom_call.1} parent=0 // loop_header
    %s19 = sphi 0, %s23
    %p20 = scmp.ge.s32.totalorder %s19, 4
    %s29 = sphi 0, %s31
    %s32 = sphi 0, %s29
    %s33 = sphi 0, %s32
    %s49 = sphi 0, %s33
    %s53 = sphi 0, %s53
    %s55 = sphi 0, %s53
    %s56 = sphi 0, %s55
    %s70 = sphi 0, %s56
    %s74 = sphi 0, %s74
    %s76 = sphi 0, %s74
    %s77 = sphi 0, %s76
    %s91 = sphi 0, %s77
    %s95 = sphi 0, %s95
    %s97 = sphi 0, %s95
    %s98 = sphi 0, %s97
    %s112 = sphi 0, %s98
    %s116 = sphi 0, %s116
    %s118 = sphi 0, %s116
    %s119 = sphi 0, %s118
    %s133 = sphi 0, %s119
    %s137 = sphi 0, %s137
    %s139 = sphi 0, %s137
    %s140 = sphi 0, %s139
    %s154 = sphi 0, %s140
    %s158 = sphi 0, %s158
    %s160 = sphi 0, %s158
    %s161 = sphi 0, %s160
    %s175 = sphi 0, %s161
    %s179 = sphi 0, %s179
    %s181 = sphi 0, %s179
    %s182 = sphi 0, %s181
    %s196 = sphi 0, %s182
    %s200 = sphi 0, %s200
    %s202 = sphi 0, %s200
    %s203 = sphi 0, %s202
    %s217 = sphi 0, %s203
    %s221 = sphi 0, %s221
    %s223 = sphi 0, %s221
    %s224 = sphi 0, %s223
    %s238 = sphi 0, %s224
    %s242 = sphi 0, %s242
    %s244 = sphi 0, %s242
    %s245 = sphi 0, %s244
    %s259 = sphi 0, %s245
    %s263 = sphi 0, %s263
    %s265 = sphi 0, %s263
    %s266 = sphi 0, %s265
    %s280 = sphi 0, %s266
    %s284 = sphi 0, %s284
    %s286 = sphi 0, %s284
    %s287 = sphi 0, %s286
    %s301 = sphi 0, %s287
    %s307 = sphi 0, %s309
    %s310 = sphi 0, %s307
    %s311 = sphi 0, %s310
    %s327 = sphi 0, %s311
  $region4: #{tpu_custom_call.1} parent=0 // loop_header_branch
    %22 = sbr.rel (%p20) target = $region8
  $region5: #{tpu_custom_call.1} parent=0 // loop_body
    %s24 = ssub.s32 %s19, 1
    %s25 = ssub.s32 %s19, 2
    %s26 = sadd.s32 %s19, 1
    %s27 = ssub.s32 %s19, %s26
    %p28 = scmp.eq.s32.totalorder %s27, 0
    %s30 = sadd.s32 %s29, 1
    %s31 = scalar_select %p28, %s29, %s30
    %p34 = pneg %p28
    %p35 = scmp.eq.s32.totalorder %s19, 1
    %p36 = por %p34, %p35
    %p37 = scmp.ne.s32.totalorder %s29, %s32
    %p38 = scmp.eq.s32.totalorder %s19, 0
    %p39 = por %p37, %p38
    %p40 = scmp.ne.s32.totalorder %s29, %s32
    %p41 = scmp.eq.s32.totalorder %s24, 1
    %p42 = por %p40, %p41
    %p43 = scmp.ne.s32.totalorder %s32, %s33
    %p44 = scmp.eq.s32.totalorder %s24, 0
    %p45 = por %p43, %p44
    %p46 = scmp.ne.s32.totalorder %s32, %s33
    %p47 = scmp.eq.s32.totalorder %s25, 1
    %p48 = por %p46, %p47
    %p50 = scmp.ne.s32.totalorder %s33, %s49
    %p51 = scmp.eq.s32.totalorder %s25, 0
    %p52 = por %p50, %p51
    %s54 = sadd.s32 %s53, 1
    %p57 = scmp.eq.s32.totalorder %s19, 1
    %p58 = scmp.ne.s32.totalorder %s53, %s55
    %p59 = scmp.eq.s32.totalorder %s19, 0
    %p60 = por %p58, %p59
    %p61 = scmp.ne.s32.totalorder %s53, %s55
    %p62 = scmp.eq.s32.totalorder %s24, 1
    %p63 = por %p61, %p62
    %p64 = scmp.ne.s32.totalorder %s55, %s56
    %p65 = scmp.eq.s32.totalorder %s24, 0
    %p66 = por %p64, %p65
    %p67 = scmp.ne.s32.totalorder %s55, %s56
    %p68 = scmp.eq.s32.totalorder %s25, 1
    %p69 = por %p67, %p68
    %p71 = scmp.ne.s32.totalorder %s56, %s70
    %p72 = scmp.eq.s32.totalorder %s25, 0
    %p73 = por %p71, %p72
    %s75 = sadd.s32 %s74, 1
    %p78 = scmp.eq.s32.totalorder %s19, 1
    %p79 = scmp.ne.s32.totalorder %s74, %s76
    %p80 = scmp.eq.s32.totalorder %s19, 0
    %p81 = por %p79, %p80
    %p82 = scmp.ne.s32.totalorder %s74, %s76
    %p83 = scmp.eq.s32.totalorder %s24, 1
    %p84 = por %p82, %p83
    %p85 = scmp.ne.s32.totalorder %s76, %s77
    %p86 = scmp.eq.s32.totalorder %s24, 0
    %p87 = por %p85, %p86
    %p88 = scmp.ne.s32.totalorder %s76, %s77
    %p89 = scmp.eq.s32.totalorder %s25, 1
    %p90 = por %p88, %p89
    %p92 = scmp.ne.s32.totalorder %s77, %s91
    %p93 = scmp.eq.s32.totalorder %s25, 0
    %p94 = por %p92, %p93
    %s96 = sadd.s32 %s95, 1
    %p99 = scmp.eq.s32.totalorder %s19, 1
    %p100 = scmp.ne.s32.totalorder %s95, %s97
    %p101 = scmp.eq.s32.totalorder %s19, 0
    %p102 = por %p100, %p101
    %p103 = scmp.ne.s32.totalorder %s95, %s97
    %p104 = scmp.eq.s32.totalorder %s24, 1
    %p105 = por %p103, %p104
    %p106 = scmp.ne.s32.totalorder %s97, %s98
    %p107 = scmp.eq.s32.totalorder %s24, 0
    %p108 = por %p106, %p107
    %p109 = scmp.ne.s32.totalorder %s97, %s98
    %p110 = scmp.eq.s32.totalorder %s25, 1
    %p111 = por %p109, %p110
    %p113 = scmp.ne.s32.totalorder %s98, %s112
    %p114 = scmp.eq.s32.totalorder %s25, 0
    %p115 = por %p113, %p114
    %s117 = sadd.s32 %s116, 1
    %p120 = scmp.eq.s32.totalorder %s19, 1
    %p121 = scmp.ne.s32.totalorder %s116, %s118
    %p122 = scmp.eq.s32.totalorder %s19, 0
    %p123 = por %p121, %p122
    %p124 = scmp.ne.s32.totalorder %s116, %s118
    %p125 = scmp.eq.s32.totalorder %s24, 1
    %p126 = por %p124, %p125
    %p127 = scmp.ne.s32.totalorder %s118, %s119
    %p128 = scmp.eq.s32.totalorder %s24, 0
    %p129 = por %p127, %p128
    %p130 = scmp.ne.s32.totalorder %s118, %s119
    %p131 = scmp.eq.s32.totalorder %s25, 1
    %p132 = por %p130, %p131
    %p134 = scmp.ne.s32.totalorder %s119, %s133
    %p135 = scmp.eq.s32.totalorder %s25, 0
    %p136 = por %p134, %p135
    %s138 = sadd.s32 %s137, 1
    %p141 = scmp.eq.s32.totalorder %s19, 1
    %p142 = scmp.ne.s32.totalorder %s137, %s139
    %p143 = scmp.eq.s32.totalorder %s19, 0
    %p144 = por %p142, %p143
    %p145 = scmp.ne.s32.totalorder %s137, %s139
    %p146 = scmp.eq.s32.totalorder %s24, 1
    %p147 = por %p145, %p146
    %p148 = scmp.ne.s32.totalorder %s139, %s140
    %p149 = scmp.eq.s32.totalorder %s24, 0
    %p150 = por %p148, %p149
    %p151 = scmp.ne.s32.totalorder %s139, %s140
    %p152 = scmp.eq.s32.totalorder %s25, 1
    %p153 = por %p151, %p152
    %p155 = scmp.ne.s32.totalorder %s140, %s154
    %p156 = scmp.eq.s32.totalorder %s25, 0
    %p157 = por %p155, %p156
    %s159 = sadd.s32 %s158, 1
    %p162 = scmp.eq.s32.totalorder %s19, 1
    %p163 = scmp.ne.s32.totalorder %s158, %s160
    %p164 = scmp.eq.s32.totalorder %s19, 0
    %p165 = por %p163, %p164
    %p166 = scmp.ne.s32.totalorder %s158, %s160
    %p167 = scmp.eq.s32.totalorder %s24, 1
    %p168 = por %p166, %p167
    %p169 = scmp.ne.s32.totalorder %s160, %s161
    %p170 = scmp.eq.s32.totalorder %s24, 0
    %p171 = por %p169, %p170
    %p172 = scmp.ne.s32.totalorder %s160, %s161
    %p173 = scmp.eq.s32.totalorder %s25, 1
    %p174 = por %p172, %p173
    %p176 = scmp.ne.s32.totalorder %s161, %s175
    %p177 = scmp.eq.s32.totalorder %s25, 0
    %p178 = por %p176, %p177
    %s180 = sadd.s32 %s179, 1
    %p183 = scmp.eq.s32.totalorder %s19, 1
    %p184 = scmp.ne.s32.totalorder %s179, %s181
    %p185 = scmp.eq.s32.totalorder %s19, 0
    %p186 = por %p184, %p185
    %p187 = scmp.ne.s32.totalorder %s179, %s181
    %p188 = scmp.eq.s32.totalorder %s24, 1
    %p189 = por %p187, %p188
    %p190 = scmp.ne.s32.totalorder %s181, %s182
    %p191 = scmp.eq.s32.totalorder %s24, 0
    %p192 = por %p190, %p191
    %p193 = scmp.ne.s32.totalorder %s181, %s182
    %p194 = scmp.eq.s32.totalorder %s25, 1
    %p195 = por %p193, %p194
    %p197 = scmp.ne.s32.totalorder %s182, %s196
    %p198 = scmp.eq.s32.totalorder %s25, 0
    %p199 = por %p197, %p198
    %s201 = sadd.s32 %s200, 1
    %p204 = scmp.eq.s32.totalorder %s19, 1
    %p205 = scmp.ne.s32.totalorder %s200, %s202
    %p206 = scmp.eq.s32.totalorder %s19, 0
    %p207 = por %p205, %p206
    %p208 = scmp.ne.s32.totalorder %s200, %s202
    %p209 = scmp.eq.s32.totalorder %s24, 1
    %p210 = por %p208, %p209
    %p211 = scmp.ne.s32.totalorder %s202, %s203
    %p212 = scmp.eq.s32.totalorder %s24, 0
    %p213 = por %p211, %p212
    %p214 = scmp.ne.s32.totalorder %s202, %s203
    %p215 = scmp.eq.s32.totalorder %s25, 1
    %p216 = por %p214, %p215
    %p218 = scmp.ne.s32.totalorder %s203, %s217
    %p219 = scmp.eq.s32.totalorder %s25, 0
    %p220 = por %p218, %p219
    %s222 = sadd.s32 %s221, 1
    %p225 = scmp.eq.s32.totalorder %s19, 1
    %p226 = scmp.ne.s32.totalorder %s221, %s223
    %p227 = scmp.eq.s32.totalorder %s19, 0
    %p228 = por %p226, %p227
    %p229 = scmp.ne.s32.totalorder %s221, %s223
    %p230 = scmp.eq.s32.totalorder %s24, 1
    %p231 = por %p229, %p230
    %p232 = scmp.ne.s32.totalorder %s223, %s224
    %p233 = scmp.eq.s32.totalorder %s24, 0
    %p234 = por %p232, %p233
    %p235 = scmp.ne.s32.totalorder %s223, %s224
    %p236 = scmp.eq.s32.totalorder %s25, 1
    %p237 = por %p235, %p236
    %p239 = scmp.ne.s32.totalorder %s224, %s238
    %p240 = scmp.eq.s32.totalorder %s25, 0
    %p241 = por %p239, %p240
    %s243 = sadd.s32 %s242, 1
    %p246 = scmp.eq.s32.totalorder %s19, 1
    %p247 = scmp.ne.s32.totalorder %s242, %s244
    %p248 = scmp.eq.s32.totalorder %s19, 0
    %p249 = por %p247, %p248
    %p250 = scmp.ne.s32.totalorder %s242, %s244
    %p251 = scmp.eq.s32.totalorder %s24, 1
    %p252 = por %p250, %p251
    %p253 = scmp.ne.s32.totalorder %s244, %s245
    %p254 = scmp.eq.s32.totalorder %s24, 0
    %p255 = por %p253, %p254
    %p256 = scmp.ne.s32.totalorder %s244, %s245
    %p257 = scmp.eq.s32.totalorder %s25, 1
    %p258 = por %p256, %p257
    %p260 = scmp.ne.s32.totalorder %s245, %s259
    %p261 = scmp.eq.s32.totalorder %s25, 0
    %p262 = por %p260, %p261
    %s264 = sadd.s32 %s263, 1
    %p267 = scmp.eq.s32.totalorder %s19, 1
    %p268 = scmp.ne.s32.totalorder %s263, %s265
    %p269 = scmp.eq.s32.totalorder %s19, 0
    %p270 = por %p268, %p269
    %p271 = scmp.ne.s32.totalorder %s263, %s265
    %p272 = scmp.eq.s32.totalorder %s24, 1
    %p273 = por %p271, %p272
    %p274 = scmp.ne.s32.totalorder %s265, %s266
    %p275 = scmp.eq.s32.totalorder %s24, 0
    %p276 = por %p274, %p275
    %p277 = scmp.ne.s32.totalorder %s265, %s266
    %p278 = scmp.eq.s32.totalorder %s25, 1
    %p279 = por %p277, %p278
    %p281 = scmp.ne.s32.totalorder %s266, %s280
    %p282 = scmp.eq.s32.totalorder %s25, 0
    %p283 = por %p281, %p282
    %s285 = sadd.s32 %s284, 1
    %p288 = scmp.eq.s32.totalorder %s19, 1
    %p289 = scmp.ne.s32.totalorder %s284, %s286
    %p290 = scmp.eq.s32.totalorder %s19, 0
    %p291 = por %p289, %p290
    %p292 = scmp.ne.s32.totalorder %s284, %s286
    %p293 = scmp.eq.s32.totalorder %s24, 1
    %p294 = por %p292, %p293
    %p295 = scmp.ne.s32.totalorder %s286, %s287
    %p296 = scmp.eq.s32.totalorder %s24, 0
    %p297 = por %p295, %p296
    %p298 = scmp.ne.s32.totalorder %s286, %s287
    %p299 = scmp.eq.s32.totalorder %s25, 1
    %p300 = por %p298, %p299
    %p302 = scmp.ne.s32.totalorder %s287, %s301
    %p303 = scmp.eq.s32.totalorder %s25, 0
    %p304 = por %p302, %p303
    %s305 = ssub.s32 %s19, %s26
    %p306 = scmp.eq.s32.totalorder %s305, 0
    %s308 = sadd.s32 %s307, 1
    %s309 = scalar_select %p306, %s307, %s308
    %p312 = pneg %p306
    %p313 = scmp.eq.s32.totalorder %s19, 1
    %p314 = por %p312, %p313
    %p315 = scmp.ne.s32.totalorder %s307, %s310
    %p316 = scmp.eq.s32.totalorder %s19, 0
    %p317 = por %p315, %p316
    %p318 = scmp.ne.s32.totalorder %s307, %s310
    %p319 = scmp.eq.s32.totalorder %s24, 1
    %p320 = por %p318, %p319
    %p321 = scmp.ne.s32.totalorder %s310, %s311
    %p322 = scmp.eq.s32.totalorder %s24, 0
    %p323 = por %p321, %p322
    %p324 = scmp.ne.s32.totalorder %s310, %s311
    %p325 = scmp.eq.s32.totalorder %s25, 1
    %p326 = por %p324, %p325
    %p328 = scmp.ne.s32.totalorder %s311, %s327
    %p329 = scmp.eq.s32.totalorder %s25, 0
    %p330 = por %p328, %p329
    %p331 = scmp.le.s32.totalorder 1, %s19
    %p332 = scmp.lt.s32.totalorder %s19, 3
    %p333 = pnand %p331, %p332
    %p334 = pneg %p333
    // Predicated region
    $region9: #{tpu_custom_call.1} parent=5 // pred_check
      _
    $region10: #{tpu_custom_call.1} parent=5 // pred_check_branch
      %336 = sbr.rel (%p333) target = $region12
    $region11: #{tpu_custom_call.1} parent=5 // pred_region
      %s337 = ssub.s32 %s19, 1
      // Predicated region
      $region13: #{tpu_custom_call.1} parent=11 // pred_check
        %p338 = pneg %p66
      $region14: #{tpu_custom_call.1} parent=11 // pred_check_branch
        %340 = sbr.rel (%p338) target = $region16
      $region15: #{tpu_custom_call.1} parent=11 // pred_region
        _
      $region16: #{tpu_custom_call.1} parent=11 // pred_fallthru
        _
      // Predicated region
      $region17: #{tpu_custom_call.1} parent=11 // pred_check
        %p341 = pneg %p87
      $region18: #{tpu_custom_call.1} parent=11 // pred_check_branch
        %343 = sbr.rel (%p341) target = $region20
      $region19: #{tpu_custom_call.1} parent=11 // pred_region
        _
      $region20: #{tpu_custom_call.1} parent=11 // pred_fallthru
        _
      // Predicated region
      $region21: #{tpu_custom_call.1} parent=11 // pred_check
        %p344 = pneg %p108
      $region22: #{tpu_custom_call.1} parent=11 // pred_check_branch
        %346 = sbr.rel (%p344) target = $region24
      $region23: #{tpu_custom_call.1} parent=11 // pred_region
        _
      $region24: #{tpu_custom_call.1} parent=11 // pred_fallthru
        _
      // Predicated region
      $region25: #{tpu_custom_call.1} parent=11 // pred_check
        %p347 = pneg %p129
      $region26: #{tpu_custom_call.1} parent=11 // pred_check_branch
        %349 = sbr.rel (%p347) target = $region28
      $region27: #{tpu_custom_call.1} parent=11 // pred_region
        _
      $region28: #{tpu_custom_call.1} parent=11 // pred_fallthru
        _
      // Predicated region
      $region29: #{tpu_custom_call.1} parent=11 // pred_check
        %p350 = pneg %p150
      $region30: #{tpu_custom_call.1} parent=11 // pred_check_branch
        %352 = sbr.rel (%p350) target = $region32
      $region31: #{tpu_custom_call.1} parent=11 // pred_region
        _
      $region32: #{tpu_custom_call.1} parent=11 // pred_fallthru
        _
      // Predicated region
      $region33: #{tpu_custom_call.1} parent=11 // pred_check
        %p353 = pneg %p171
      $region34: #{tpu_custom_call.1} parent=11 // pred_check_branch
        %355 = sbr.rel (%p353) target = $region36
      $region35: #{tpu_custom_call.1} parent=11 // pred_region
        _
      $region36: #{tpu_custom_call.1} parent=11 // pred_fallthru
        _
      // Predicated region
      $region37: #{tpu_custom_call.1} parent=11 // pred_check
        %p356 = pneg %p192
      $region38: #{tpu_custom_call.1} parent=11 // pred_check_branch
        %358 = sbr.rel (%p356) target = $region40
      $region39: #{tpu_custom_call.1} parent=11 // pred_region
        _
      $region40: #{tpu_custom_call.1} parent=11 // pred_fallthru
        _
      // Predicated region
      $region41: #{tpu_custom_call.1} parent=11 // pred_check
        %p359 = pneg %p213
      $region42: #{tpu_custom_call.1} parent=11 // pred_check_branch
        %361 = sbr.rel (%p359) target = $region44
      $region43: #{tpu_custom_call.1} parent=11 // pred_region
        _
      $region44: #{tpu_custom_call.1} parent=11 // pred_fallthru
        _
      // Predicated region
      $region45: #{tpu_custom_call.1} parent=11 // pred_check
        %p362 = pneg %p234
      $region46: #{tpu_custom_call.1} parent=11 // pred_check_branch
        %364 = sbr.rel (%p362) target = $region48
      $region47: #{tpu_custom_call.1} parent=11 // pred_region
        _
      $region48: #{tpu_custom_call.1} parent=11 // pred_fallthru
        _
      // Predicated region
      $region49: #{tpu_custom_call.1} parent=11 // pred_check
        %p365 = pneg %p255
      $region50: #{tpu_custom_call.1} parent=11 // pred_check_branch
        %367 = sbr.rel (%p365) target = $region52
      $region51: #{tpu_custom_call.1} parent=11 // pred_region
        _
      $region52: #{tpu_custom_call.1} parent=11 // pred_fallthru
        _
      // Predicated region
      $region53: #{tpu_custom_call.1} parent=11 // pred_check
        %p368 = pneg %p276
      $region54: #{tpu_custom_call.1} parent=11 // pred_check_branch
        %370 = sbr.rel (%p368) target = $region56
      $region55: #{tpu_custom_call.1} parent=11 // pred_region
        _
      $region56: #{tpu_custom_call.1} parent=11 // pred_fallthru
        _
      // Predicated region
      $region57: #{tpu_custom_call.1} parent=11 // pred_check
        %p371 = pneg %p297
      $region58: #{tpu_custom_call.1} parent=11 // pred_check_branch
        %373 = sbr.rel (%p371) target = $region60
      $region59: #{tpu_custom_call.1} parent=11 // pred_region
        _
      $region60: #{tpu_custom_call.1} parent=11 // pred_fallthru
        _
    $region12: #{tpu_custom_call.1} parent=5 // pred_fallthru
      _
    %p374 = scmp.lt.s32.totalorder %s19, 2
    // Predicated region
    $region61: #{tpu_custom_call.1} parent=5 // pred_check
      %p375 = pneg %p374
    $region62: #{tpu_custom_call.1} parent=5 // pred_check_branch
      %377 = sbr.rel (%p375) target = $region64
    $region63: #{tpu_custom_call.1} parent=5 // pred_region
      // Predicated region
      $region65: #{tpu_custom_call.1} parent=63 // pred_check
        %p378 = pneg %p39
      $region66: #{tpu_custom_call.1} parent=63 // pred_check_branch
        %380 = sbr.rel (%p378) target = $region68
      $region67: #{tpu_custom_call.1} parent=63 // pred_region
        %p381 = scmp.lt.s32.totalorder %s19, 1
        %s382 = scalar_select %p381, %s19, 1
        %s383 = smul.addr %s382, 32
        %s384 = smul.addr %s383, 4
        %s385 = scalar_lea.vmem %s0, %s384
      $region68: #{tpu_custom_call.1} parent=63 // pred_fallthru
        _
    $region64: #{tpu_custom_call.1} parent=5 // pred_fallthru
      _
    %p386 = scmp.le.s32.totalorder 1, %s19
    %p387 = scmp.lt.s32.totalorder %s19, 3
    %p388 = pnand %p386, %p387
    %p389 = pneg %p388
    // Predicated region
    $region69: #{tpu_custom_call.1} parent=5 // pred_check
      _
    $region70: #{tpu_custom_call.1} parent=5 // pred_check_branch
      %391 = sbr.rel (%p388) target = $region72
    $region71: #{tpu_custom_call.1} parent=5 // pred_region
      %s392 = ssub.s32 %s19, 1
      %p393 = scmp.lt.s32.totalorder %s24, 1
      %s394 = scalar_select %p393, %s24, 1
      %s395 = smul.addr %s394, 32
      %s396 = smul.addr %s395, 4
      %s397 = scalar_lea.vmem %s0, %s396
      %p398 = pneg %p45
      %p399 = pneg %p42
      %p400 = pneg %p66
      %p401 = pneg %p63
      %p402 = pneg %p87
      %p403 = pneg %p84
      %p404 = pneg %p108
      %p405 = pneg %p105
      %p406 = pneg %p129
      %p407 = pneg %p126
      %p408 = pneg %p150
      %p409 = pneg %p147
      %p410 = pneg %p171
      %p411 = pneg %p168
      %p412 = pneg %p192
      %p413 = pneg %p189
      %p414 = pneg %p213
      %p415 = pneg %p210
      %p416 = pneg %p234
      %p417 = pneg %p231
      %p418 = pneg %p255
      %p419 = pneg %p252
      %p420 = pneg %p276
      %p421 = pneg %p273
      %p422 = pneg %p297
      %p423 = pneg %p294
      %p424 = pneg %p323
      %p425 = pneg %p320
      %p426 = scmp.lt.s32.totalorder %s24, 1
      %s427 = scalar_select %p426, %s24, 1
      %s428 = smul.addr %s427, 32
      %s429 = smul.addr %s428, 8
      %s430 = scalar_lea.vmem %s13, %s429
      %p431 = scmp.lt.s32.totalorder %s24, 1
      %s432 = scalar_select %p431, %s24, 1
      %s433 = smul.addr %s432, 32
      %s434 = smul.addr %s433, 4
      %s435 = scalar_lea.vmem %s0, %s434
      %p436 = scmp.lt.s32.totalorder %s24, 1
      %s437 = scalar_select %p436, %s24, 1
      %s438 = smul.addr %s437, 32
      %s439 = smul.addr %s438, 8
      %s440 = scalar_lea.vmem %s13, %s439
      %v442 = vld [vmem:[%s435] sm:$0xf]
      %v443 = vld [vmem:[%s435 + $0x4] sm:$0xf]
      %v444 = vld [vmem:[%s435 + $0x8] sm:$0xf]
      %v445 = vld [vmem:[%s435 + $0xc] sm:$0xf]
      %v446 = vld [vmem:[%s435 + $0x10] sm:$0xf]
      %v447 = vld [vmem:[%s435 + $0x14] sm:$0xf]
      %v448 = vld [vmem:[%s435 + $0x18] sm:$0xf]
      %v449 = vld [vmem:[%s435 + $0x1c] sm:$0xf]
      %v450 = vld [vmem:[%s435 + $0x20] sm:$0xf]
      %v451 = vld [vmem:[%s435 + $0x24] sm:$0xf]
      %v452 = vld [vmem:[%s435 + $0x28] sm:$0xf]
      %v453 = vld [vmem:[%s435 + $0x2c] sm:$0xf]
      %v454 = vld [vmem:[%s435 + $0x30] sm:$0xf]
      %v455 = vld [vmem:[%s435 + $0x34] sm:$0xf]
      %v456 = vld [vmem:[%s435 + $0x38] sm:$0xf]
      %v457 = vld [vmem:[%s435 + $0x3c] sm:$0xf]
      %v458 = vld [vmem:[%s435 + $0x40] sm:$0xf]
      %v459 = vld [vmem:[%s435 + $0x44] sm:$0xf]
      %v460 = vld [vmem:[%s435 + $0x48] sm:$0xf]
      %v461 = vld [vmem:[%s435 + $0x4c] sm:$0xf]
      %v462 = vld [vmem:[%s435 + $0x50] sm:$0xf]
      %v463 = vld [vmem:[%s435 + $0x54] sm:$0xf]
      %v464 = vld [vmem:[%s435 + $0x58] sm:$0xf]
      %v465 = vld [vmem:[%s435 + $0x5c] sm:$0xf]
      %v466 = vld [vmem:[%s435 + $0x60] sm:$0xf]
      %v467 = vld [vmem:[%s435 + $0x64] sm:$0xf]
      %v468 = vld [vmem:[%s435 + $0x68] sm:$0xf]
      %v469 = vld [vmem:[%s435 + $0x6c] sm:$0xf]
      %v470 = vld [vmem:[%s435 + $0x70] sm:$0xf]
      %v471 = vld [vmem:[%s435 + $0x74] sm:$0xf]
      %v472 = vld [vmem:[%s435 + $0x78] sm:$0xf]
      %v473 = vld [vmem:[%s435 + $0x7c] sm:$0xf]
      %v474 = vld [vmem:[%s1] sm:$0x3]
      %v507 = vunpack.c.l.b16 %v442
      %v508 = vunpack.c.l.b16 %v443
      %v509 = vunpack.c.l.b16 %v444
      %v510 = vunpack.c.l.b16 %v445
      %v511 = vunpack.c.l.b16 %v446
      %v512 = vunpack.c.l.b16 %v447
      %v513 = vunpack.c.l.b16 %v448
      %v514 = vunpack.c.l.b16 %v449
      %v515 = vunpack.c.l.b16 %v450
      %v516 = vunpack.c.l.b16 %v451
      %v517 = vunpack.c.l.b16 %v452
      %v518 = vunpack.c.l.b16 %v453
      %v519 = vunpack.c.l.b16 %v454
      %v520 = vunpack.c.l.b16 %v455
      %v521 = vunpack.c.l.b16 %v456
      %v522 = vunpack.c.l.b16 %v457
      %v523 = vunpack.c.l.b16 %v458
      %v524 = vunpack.c.l.b16 %v459
      %v525 = vunpack.c.l.b16 %v460
      %v526 = vunpack.c.l.b16 %v461
      %v527 = vunpack.c.l.b16 %v462
      %v528 = vunpack.c.l.b16 %v463
      %v529 = vunpack.c.l.b16 %v464
      %v530 = vunpack.c.l.b16 %v465
      %v531 = vunpack.c.l.b16 %v466
      %v532 = vunpack.c.l.b16 %v467
      %v533 = vunpack.c.l.b16 %v468
      %v534 = vunpack.c.l.b16 %v469
      %v535 = vunpack.c.l.b16 %v470
      %v536 = vunpack.c.l.b16 %v471
      %v537 = vunpack.c.l.b16 %v472
      %v538 = vunpack.c.l.b16 %v473
      %v539 = vpack.c.b16 %v508, %v507
      %v540 = vpack.c.b16 %v510, %v509
      %v541 = vpack.c.b16 %v512, %v511
      %v542 = vpack.c.b16 %v514, %v513
      %v543 = vpack.c.b16 %v516, %v515
      %v544 = vpack.c.b16 %v518, %v517
      %v545 = vpack.c.b16 %v520, %v519
      %v546 = vpack.c.b16 %v522, %v521
      %v547 = vpack.c.b16 %v524, %v523
      %v548 = vpack.c.b16 %v526, %v525
      %v549 = vpack.c.b16 %v528, %v527
      %v550 = vpack.c.b16 %v530, %v529
      %v551 = vpack.c.b16 %v532, %v531
      %v552 = vpack.c.b16 %v534, %v533
      %v553 = vpack.c.b16 %v536, %v535
      %v554 = vpack.c.b16 %v538, %v537
      %vm555 = vcmask 31744
      %v557 = vsel %vm555, %v539, 0
      %v560 = vsel %vm555, %v540, 0
      %v563 = vsel %vm555, %v541, 0
      %v566 = vsel %vm555, %v542, 0
      %v569 = vsel %vm555, %v543, 0
      %v572 = vsel %vm555, %v544, 0
      %v575 = vsel %vm555, %v545, 0
      %v578 = vsel %vm555, %v546, 0
      %v581 = vsel %vm555, %v547, 0
      %v584 = vsel %vm555, %v548, 0
      %v587 = vsel %vm555, %v549, 0
      %v590 = vsel %vm555, %v550, 0
      %v593 = vsel %vm555, %v551, 0
      %v596 = vsel %vm555, %v552, 0
      %v599 = vsel %vm555, %v553, 0
      %v602 = vsel %vm555, %v554, 0
      %vm604 = vcmask 1041408
      %v606 = vsel %vm604, %v474, 0
      %608 = vmatprep.subr.bf16.mxu0 0
      %609 = vmatpush1.bf16.msra.mxu0 %v606
      %610 = vmatprep.subr.bf16.mxu0 0
      %611 = vmatpush1.bf16.msra.mxu0 0
      %612 = vmatprep.subr.bf16.mxu0 0
      %613 = vmatpush1.bf16.msra.mxu0 0
      %614 = vmatprep.subr.bf16.mxu0 0
      %615 = vmatpush1.bf16.msra.mxu0 0
      %616 = vmatprep.subr.bf16.mxu0 0
      %617 = vmatpush1.bf16.msra.mxu0 0
      %618 = vmatprep.subr.bf16.mxu0 0
      %619 = vmatpush1.bf16.msra.mxu0 0
      %620 = vmatprep.subr.bf16.mxu0 0
      %621 = vmatpush1.bf16.msra.mxu0 0
      %622 = vmatprep.subr.bf16.mxu0 0
      %623 = vmatpush1.bf16.msra.mxu0 0
      %624 = vmatprep.subr.bf16.mxu0 0
      %625 = vmatpush1.bf16.msra.mxu0 0
      %626 = vmatprep.subr.bf16.mxu0 0
      %627 = vmatpush1.bf16.msra.mxu0 0
      %628 = vmatprep.subr.bf16.mxu0 0
      %629 = vmatpush1.bf16.msra.mxu0 0
      %630 = vmatprep.subr.bf16.mxu0 0
      %631 = vmatpush1.bf16.msra.mxu0 0
      %632 = vmatprep.subr.bf16.mxu0 0
      %633 = vmatpush1.bf16.msra.mxu0 0
      %634 = vmatprep.subr.bf16.mxu0 0
      %635 = vmatpush1.bf16.msra.mxu0 0
      %636 = vmatprep.subr.bf16.mxu0 0
      %637 = vmatpush1.bf16.msra.mxu0 0
      %638 = vmatprep.subr.bf16.mxu0 0
      %639 = vmatpush1.bf16.msra.mxu0 0
      %640 = vmatprep.mubr.bf16.mxu0 0
      %641 = vmatmul.mubr.bf16.gmra.mrb[0].mxu0 %v557
      %v642 = vpop.f32.mrb[0].mxu0
      %v643 = vadd.f32 0.0, %v642
      %v644 = vpop.f32.mrb[0].mxu0
      %v645 = vpop.f32.mrb[0].mxu0
      %v646 = vadd.f32 0.0, %v645
      %v647 = vpop.f32.mrb[0].mxu0
      %648 = vmatprep.mubr.bf16.mxu0 0
      %649 = vmatmul.mubr.bf16.gmra.mrb[0].mxu0 %v560
      %v650 = vpop.f32.mrb[0].mxu0
      %v651 = vadd.f32 0.0, %v650
      %v652 = vpop.f32.mrb[0].mxu0
      %v653 = vpop.f32.mrb[0].mxu0
      %v654 = vadd.f32 0.0, %v653
      %v655 = vpop.f32.mrb[0].mxu0
      %656 = vmatprep.mubr.bf16.mxu0 0
      %657 = vmatmul.mubr.bf16.gmra.mrb[0].mxu0 %v563
      %v658 = vpop.f32.mrb[0].mxu0
      %v659 = vadd.f32 0.0, %v658
      %v660 = vpop.f32.mrb[0].mxu0
      %v661 = vpop.f32.mrb[0].mxu0
      %v662 = vadd.f32 0.0, %v661
      %v663 = vpop.f32.mrb[0].mxu0
      %664 = vmatprep.mubr.bf16.mxu0 0
      %665 = vmatmul.mubr.bf16.gmra.mrb[0].mxu0 %v566
      %v666 = vpop.f32.mrb[0].mxu0
      %v667 = vadd.f32 0.0, %v666
      %v668 = vpop.f32.mrb[0].mxu0
      %v669 = vpop.f32.mrb[0].mxu0
      %v670 = vadd.f32 0.0, %v669
      %v671 = vpop.f32.mrb[0].mxu0
      %672 = vmatprep.mubr.bf16.mxu0 0
      %673 = vmatmul.mubr.bf16.gmra.mrb[0].mxu0 %v569
      %v674 = vpop.f32.mrb[0].mxu0
      %v675 = vadd.f32 0.0, %v674
      %v676 = vpop.f32.mrb[0].mxu0
      %v677 = vpop.f32.mrb[0].mxu0
      %v678 = vadd.f32 0.0, %v677
      %v679 = vpop.f32.mrb[0].mxu0
      %680 = vmatprep.mubr.bf16.mxu0 0
      %681 = vmatmul.mubr.bf16.gmra.mrb[0].mxu0 %v572
      %v682 = vpop.f32.mrb[0].mxu0
      %v683 = vadd.f32 0.0, %v682
      %v684 = vpop.f32.mrb[0].mxu0
      %v685 = vpop.f32.mrb[0].mxu0
      %v686 = vadd.f32 0.0, %v685
      %v687 = vpop.f32.mrb[0].mxu0
      %688 = vmatprep.mubr.bf16.mxu0 0
      %689 = vmatmul.mubr.bf16.gmra.mrb[0].mxu0 %v575
      %v690 = vpop.f32.mrb[0].mxu0
      %v691 = vadd.f32 0.0, %v690
      %v692 = vpop.f32.mrb[0].mxu0
      %v693 = vpop.f32.mrb[0].mxu0
      %v694 = vadd.f32 0.0, %v693
      %v695 = vpop.f32.mrb[0].mxu0
      %696 = vmatprep.mubr.bf16.mxu0 0
      %697 = vmatmul.mubr.bf16.gmra.mrb[0].mxu0 %v578
      %v698 = vpop.f32.mrb[0].mxu0
      %v699 = vadd.f32 0.0, %v698
      %v700 = vpop.f32.mrb[0].mxu0
      %v701 = vpop.f32.mrb[0].mxu0
      %v702 = vadd.f32 0.0, %v701
      %v703 = vpop.f32.mrb[0].mxu0
      %704 = vmatprep.mubr.bf16.mxu0 0
      %705 = vmatmul.mubr.bf16.gmra.mrb[0].mxu0 %v581
      %v706 = vpop.f32.mrb[0].mxu0
      %v707 = vadd.f32 0.0, %v706
      %v708 = vpop.f32.mrb[0].mxu0
      %v709 = vpop.f32.mrb[0].mxu0
      %v710 = vadd.f32 0.0, %v709
      %v711 = vpop.f32.mrb[0].mxu0
      %712 = vmatprep.mubr.bf16.mxu0 0
      %713 = vmatmul.mubr.bf16.gmra.mrb[0].mxu0 %v584
      %v714 = vpop.f32.mrb[0].mxu0
      %v715 = vadd.f32 0.0, %v714
      %v716 = vpop.f32.mrb[0].mxu0
      %v717 = vpop.f32.mrb[0].mxu0
      %v718 = vadd.f32 0.0, %v717
      %v719 = vpop.f32.mrb[0].mxu0
      %720 = vmatprep.mubr.bf16.mxu0 0
      %721 = vmatmul.mubr.bf16.gmra.mrb[0].mxu0 %v587
      %v722 = vpop.f32.mrb[0].mxu0
      %v723 = vadd.f32 0.0, %v722
      %v724 = vpop.f32.mrb[0].mxu0
      %v725 = vpop.f32.mrb[0].mxu0
      %v726 = vadd.f32 0.0, %v725
      %v727 = vpop.f32.mrb[0].mxu0
      %728 = vmatprep.mubr.bf16.mxu0 0
      %729 = vmatmul.mubr.bf16.gmra.mrb[0].mxu0 %v590
      %v730 = vpop.f32.mrb[0].mxu0
      %v731 = vadd.f32 0.0, %v730
      %v732 = vpop.f32.mrb[0].mxu0
      %v733 = vpop.f32.mrb[0].mxu0
      %v734 = vadd.f32 0.0, %v733
      %v735 = vpop.f32.mrb[0].mxu0
      %736 = vmatprep.mubr.bf16.mxu0 0
      %737 = vmatmul.mubr.bf16.gmra.mrb[0].mxu0 %v593
      %v738 = vpop.f32.mrb[0].mxu0
      %v739 = vadd.f32 0.0, %v738
      %v740 = vpop.f32.mrb[0].mxu0
      %v741 = vpop.f32.mrb[0].mxu0
      %v742 = vadd.f32 0.0, %v741
      %v743 = vpop.f32.mrb[0].mxu0
      %744 = vmatprep.mubr.bf16.mxu0 0
      %745 = vmatmul.mubr.bf16.gmra.mrb[0].mxu0 %v596
      %v746 = vpop.f32.mrb[0].mxu0
      %v747 = vadd.f32 0.0, %v746
      %v748 = vpop.f32.mrb[0].mxu0
      %v749 = vpop.f32.mrb[0].mxu0
      %v750 = vadd.f32 0.0, %v749
      %v751 = vpop.f32.mrb[0].mxu0
      %752 = vmatprep.mubr.bf16.mxu0 0
      %753 = vmatmul.mubr.bf16.gmra.mrb[0].mxu0 %v599
      %v754 = vpop.f32.mrb[0].mxu0
      %v755 = vadd.f32 0.0, %v754
      %v756 = vpop.f32.mrb[0].mxu0
      %v757 = vpop.f32.mrb[0].mxu0
      %v758 = vadd.f32 0.0, %v757
      %v759 = vpop.f32.mrb[0].mxu0
      %760 = vmatprep.mubr.bf16.mxu0 0
      %761 = vmatmul.mubr.bf16.gmra.mrb[0].mxu0 %v602
      %v762 = vpop.f32.mrb[0].mxu0
      %v763 = vadd.f32 0.0, %v762
      %v764 = vpop.f32.mrb[0].mxu0
      %v765 = vpop.f32.mrb[0].mxu0
      %v766 = vadd.f32 0.0, %v765
      %v767 = vpop.f32.mrb[0].mxu0
      %768 = vdwg.mxu0
      %v769 = vld [vmem:[%s2] sm:$0x1]
      %v771 = vlaneseq
      %v772 = vshrl.u32 %v771, 7
      %v773 = vsub.s32 0, %v772
      %v774 = vrot.slane %v769, %v773
      %v776 = vmul.f32 %v643, %v774
      %v777 = vmul.f32 %v646, %v774
      %v778 = vmul.f32 %v651, %v774
      %v779 = vmul.f32 %v654, %v774
      %v780 = vmul.f32 %v659, %v774
      %v781 = vmul.f32 %v662, %v774
      %v782 = vmul.f32 %v667, %v774
      %v783 = vmul.f32 %v670, %v774
      %v784 = vmul.f32 %v675, %v774
      %v785 = vmul.f32 %v678, %v774
      %v786 = vmul.f32 %v683, %v774
      %v787 = vmul.f32 %v686, %v774
      %v788 = vmul.f32 %v691, %v774
      %v789 = vmul.f32 %v694, %v774
      %v790 = vmul.f32 %v699, %v774
      %v791 = vmul.f32 %v702, %v774
      %v792 = vmul.f32 %v707, %v774
      %v793 = vmul.f32 %v710, %v774
      %v794 = vmul.f32 %v715, %v774
      %v795 = vmul.f32 %v718, %v774
      %v796 = vmul.f32 %v723, %v774
      %v797 = vmul.f32 %v726, %v774
      %v798 = vmul.f32 %v731, %v774
      %v799 = vmul.f32 %v734, %v774
      %v800 = vmul.f32 %v739, %v774
      %v801 = vmul.f32 %v742, %v774
      %v802 = vmul.f32 %v747, %v774
      %v803 = vmul.f32 %v750, %v774
      %v804 = vmul.f32 %v755, %v774
      %v805 = vmul.f32 %v758, %v774
      %v806 = vmul.f32 %v763, %v774
      %v807 = vmul.f32 %v766, %v774
      %v808 = vld [vmem:[%s3] sm:$0x1]
      %v810 = vlaneseq
      %v811 = vshrl.u32 %v810, 7
      %v812 = vsub.s32 0, %v811
      %v813 = vrot.slane %v808, %v812
      %v815 = vadd.f32 %v776, %v813
      %v816 = vadd.f32 %v777, %v813
      %v817 = vadd.f32 %v778, %v813
      %v818 = vadd.f32 %v779, %v813
      %v819 = vadd.f32 %v780, %v813
      %v820 = vadd.f32 %v781, %v813
      %v821 = vadd.f32 %v782, %v813
      %v822 = vadd.f32 %v783, %v813
      %v823 = vadd.f32 %v784, %v813
      %v824 = vadd.f32 %v785, %v813
      %v825 = vadd.f32 %v786, %v813
      %v826 = vadd.f32 %v787, %v813
      %v827 = vadd.f32 %v788, %v813
      %v828 = vadd.f32 %v789, %v813
      %v829 = vadd.f32 %v790, %v813
      %v830 = vadd.f32 %v791, %v813
      %v831 = vadd.f32 %v792, %v813
      %v832 = vadd.f32 %v793, %v813
      %v833 = vadd.f32 %v794, %v813
      %v834 = vadd.f32 %v795, %v813
      %v835 = vadd.f32 %v796, %v813
      %v836 = vadd.f32 %v797, %v813
      %v837 = vadd.f32 %v798, %v813
      %v838 = vadd.f32 %v799, %v813
      %v839 = vadd.f32 %v800, %v813
      %v840 = vadd.f32 %v801, %v813
      %v841 = vadd.f32 %v802, %v813
      %v842 = vadd.f32 %v803, %v813
      %v843 = vadd.f32 %v804, %v813
      %v844 = vadd.f32 %v805, %v813
      %v845 = vadd.f32 %v806, %v813
      %v846 = vadd.f32 %v807, %v813
      %v847 = vmax.f32 %v815, 0.0
      %v848 = vmax.f32 %v816, 0.0
      %v849 = vmax.f32 %v817, 0.0
      %v850 = vmax.f32 %v818, 0.0
      %v851 = vmax.f32 %v819, 0.0
      %v852 = vmax.f32 %v820, 0.0
      %v853 = vmax.f32 %v821, 0.0
      %v854 = vmax.f32 %v822, 0.0
      %v855 = vmax.f32 %v823, 0.0
      %v856 = vmax.f32 %v824, 0.0
      %v857 = vmax.f32 %v825, 0.0
      %v858 = vmax.f32 %v826, 0.0
      %v859 = vmax.f32 %v827, 0.0
      %v860 = vmax.f32 %v828, 0.0
      %v861 = vmax.f32 %v829, 0.0
      %v862 = vmax.f32 %v830, 0.0
      %v863 = vmax.f32 %v831, 0.0
      %v864 = vmax.f32 %v832, 0.0
      %v865 = vmax.f32 %v833, 0.0
      %v866 = vmax.f32 %v834, 0.0
      %v867 = vmax.f32 %v835, 0.0
      %v868 = vmax.f32 %v836, 0.0
      %v869 = vmax.f32 %v837, 0.0
      %v870 = vmax.f32 %v838, 0.0
      %v871 = vmax.f32 %v839, 0.0
      %v872 = vmax.f32 %v840, 0.0
      %v873 = vmax.f32 %v841, 0.0
      %v874 = vmax.f32 %v842, 0.0
      %v875 = vmax.f32 %v843, 0.0
      %v876 = vmax.f32 %v844, 0.0
      %v877 = vmax.f32 %v845, 0.0
      %v878 = vmax.f32 %v846, 0.0
      %879 = vst.msk [vmem:[#allocation2] sm:$0xff] %vm555, 0.0
      %880 = vst.msk [vmem:[#allocation2 + $0x8] sm:$0xff] %vm555, 0.0
      %881 = vst.msk [vmem:[#allocation2 + $0x10] sm:$0xff] %vm555, 0.0
      %s882 = scalar_lea.vmem [#allocation2], 408
      %883 = vst.msk [vmem:[%s882] sm:$0xff] %vm555, 0.0
      %884 = vst.msk [vmem:[%s882 + $0x8] sm:$0xff] %vm555, 0.0
      %885 = vst.msk [vmem:[%s882 + $0x10] sm:$0xff] %vm555, 0.0
      %vm886 = vcmask 24576
      %887 = vst.msk [vmem:[#allocation2] sm:$0x1] %vm886, 0.0
      %888 = vst.msk [vmem:[#allocation2 + $0x18] sm:$0x1] %vm886, 0.0
      %889 = vst.msk [vmem:[#allocation2 + $0x30] sm:$0x1] %vm886, 0.0
      %890 = vst.msk [vmem:[#allocation2 + $0x48] sm:$0x1] %vm886, 0.0
      %891 = vst.msk [vmem:[#allocation2 + $0x60] sm:$0x1] %vm886, 0.0
      %892 = vst.msk [vmem:[#allocation2 + $0x78] sm:$0x1] %vm886, 0.0
      %893 = vst.msk [vmem:[#allocation2 + $0x90] sm:$0x1] %vm886, 0.0
      %894 = vst.msk [vmem:[#allocation2 + $0xa8] sm:$0x1] %vm886, 0.0
      %895 = vst.msk [vmem:[#allocation2 + $0xc0] sm:$0x1] %vm886, 0.0
      %896 = vst.msk [vmem:[#allocation2 + $0xd8] sm:$0x1] %vm886, 0.0
      %897 = vst.msk [vmem:[#allocation2 + $0xf0] sm:$0x1] %vm886, 0.0
      %898 = vst.msk [vmem:[#allocation2 + $0x108] sm:$0x1] %vm886, 0.0
      %899 = vst.msk [vmem:[#allocation2 + $0x120] sm:$0x1] %vm886, 0.0
      %900 = vst.msk [vmem:[#allocation2 + $0x138] sm:$0x1] %vm886, 0.0
      %901 = vst.msk [vmem:[#allocation2 + $0x150] sm:$0x1] %vm886, 0.0
      %902 = vst.msk [vmem:[#allocation2 + $0x168] sm:$0x1] %vm886, 0.0
      %903 = vst.msk [vmem:[#allocation2 + $0x180] sm:$0x1] %vm886, 0.0
      %904 = vst.msk [vmem:[#allocation2 + $0x198] sm:$0x1] %vm886, 0.0
      %vm905 = vcmask 30720
      %906 = vst.msk [vmem:[#allocation2 + $0x11] sm:$0x7f] %vm905, 0.0
      %907 = vst.msk [vmem:[#allocation2 + $0x29] sm:$0x7f] %vm905, 0.0
      %908 = vst.msk [vmem:[#allocation2 + $0x41] sm:$0x7f] %vm905, 0.0
      %909 = vst.msk [vmem:[#allocation2 + $0x59] sm:$0x7f] %vm905, 0.0
      %910 = vst.msk [vmem:[#allocation2 + $0x71] sm:$0x7f] %vm905, 0.0
      %911 = vst.msk [vmem:[#allocation2 + $0x89] sm:$0x7f] %vm905, 0.0
      %912 = vst.msk [vmem:[#allocation2 + $0xa1] sm:$0x7f] %vm905, 0.0
      %913 = vst.msk [vmem:[#allocation2 + $0xb9] sm:$0x7f] %vm905, 0.0
      %914 = vst.msk [vmem:[#allocation2 + $0xd1] sm:$0x7f] %vm905, 0.0
      %915 = vst.msk [vmem:[#allocation2 + $0xe9] sm:$0x7f] %vm905, 0.0
      %916 = vst.msk [vmem:[#allocation2 + $0x101] sm:$0x7f] %vm905, 0.0
      %917 = vst.msk [vmem:[#allocation2 + $0x119] sm:$0x7f] %vm905, 0.0
      %918 = vst.msk [vmem:[#allocation2 + $0x131] sm:$0x7f] %vm905, 0.0
      %919 = vst.msk [vmem:[#allocation2 + $0x149] sm:$0x7f] %vm905, 0.0
      %920 = vst.msk [vmem:[#allocation2 + $0x161] sm:$0x7f] %vm905, 0.0
      %921 = vst.msk [vmem:[#allocation2 + $0x179] sm:$0x7f] %vm905, 0.0
      %922 = vst.msk [vmem:[#allocation2 + $0x191] sm:$0x7f] %vm905, 0.0
      %923 = vst.msk [vmem:[#allocation2 + $0x1a9] sm:$0x7f] %vm905, 0.0
      %s924 = scalar_lea.vmem [#allocation2], 24
      %925 = vst.msk [vmem:[%s924 + $0x1] sm:$0xff] %vm555, %v847
      %926 = vst.msk [vmem:[%s924 + $0x9] sm:$0xff] %vm555, %v848
      %927 = vst.msk [vmem:[%s924 + $0x19] sm:$0xff] %vm555, %v849
      %928 = vst.msk [vmem:[%s924 + $0x21] sm:$0xff] %vm555, %v850
      %929 = vst.msk [vmem:[%s924 + $0x31] sm:$0xff] %vm555, %v851
      %930 = vst.msk [vmem:[%s924 + $0x39] sm:$0xff] %vm555, %v852
      %931 = vst.msk [vmem:[%s924 + $0x49] sm:$0xff] %vm555, %v853
      %932 = vst.msk [vmem:[%s924 + $0x51] sm:$0xff] %vm555, %v854
      %933 = vst.msk [vmem:[%s924 + $0x61] sm:$0xff] %vm555, %v855
      %934 = vst.msk [vmem:[%s924 + $0x69] sm:$0xff] %vm555, %v856
      %935 = vst.msk [vmem:[%s924 + $0x79] sm:$0xff] %vm555, %v857
      %936 = vst.msk [vmem:[%s924 + $0x81] sm:$0xff] %vm555, %v858
      %937 = vst.msk [vmem:[%s924 + $0x91] sm:$0xff] %vm555, %v859
      %938 = vst.msk [vmem:[%s924 + $0x99] sm:$0xff] %vm555, %v860
      %939 = vst.msk [vmem:[%s924 + $0xa9] sm:$0xff] %vm555, %v861
      %940 = vst.msk [vmem:[%s924 + $0xb1] sm:$0xff] %vm555, %v862
      %941 = vst.msk [vmem:[%s924 + $0xc1] sm:$0xff] %vm555, %v863
      %942 = vst.msk [vmem:[%s924 + $0xc9] sm:$0xff] %vm555, %v864
      %943 = vst.msk [vmem:[%s924 + $0xd9] sm:$0xff] %vm555, %v865
      %944 = vst.msk [vmem:[%s924 + $0xe1] sm:$0xff] %vm555, %v866
      %945 = vst.msk [vmem:[%s924 + $0xf1] sm:$0xff] %vm555, %v867
      %946 = vst.msk [vmem:[%s924 + $0xf9] sm:$0xff] %vm555, %v868
      %947 = vst.msk [vmem:[%s924 + $0x109] sm:$0xff] %vm555, %v869
      %948 = vst.msk [vmem:[%s924 + $0x111] sm:$0xff] %vm555, %v870
      %949 = vst.msk [vmem:[%s924 + $0x121] sm:$0xff] %vm555, %v871
      %950 = vst.msk [vmem:[%s924 + $0x129] sm:$0xff] %vm555, %v872
      %951 = vst.msk [vmem:[%s924 + $0x139] sm:$0xff] %vm555, %v873
      %952 = vst.msk [vmem:[%s924 + $0x141] sm:$0xff] %vm555, %v874
      %953 = vst.msk [vmem:[%s924 + $0x151] sm:$0xff] %vm555, %v875
      %954 = vst.msk [vmem:[%s924 + $0x159] sm:$0xff] %vm555, %v876
      %955 = vst.msk [vmem:[%s924 + $0x169] sm:$0xff] %vm555, %v877
      %956 = vst.msk [vmem:[%s924 + $0x171] sm:$0xff] %vm555, %v878
      %v957 = vld [vmem:[#allocation2] sm:$0xff]
      %v958 = vld [vmem:[#allocation2 + $0x8] sm:$0xff]
      %v959 = vld [vmem:[#allocation2 + $0x18] sm:$0xff]
      %v960 = vld [vmem:[#allocation2 + $0x20] sm:$0xff]
      %v961 = vld [vmem:[#allocation2 + $0x30] sm:$0xff]
      %v962 = vld [vmem:[#allocation2 + $0x38] sm:$0xff]
      %v963 = vld [vmem:[#allocation2 + $0x48] sm:$0xff]
      %v964 = vld [vmem:[#allocation2 + $0x50] sm:$0xff]
      %v965 = vld [vmem:[#allocation2 + $0x60] sm:$0xff]
      %v966 = vld [vmem:[#allocation2 + $0x68] sm:$0xff]
      %v967 = vld [vmem:[#allocation2 + $0x78] sm:$0xff]
      %v968 = vld [vmem:[#allocation2 + $0x80] sm:$0xff]
      %v969 = vld [vmem:[#allocation2 + $0x90] sm:$0xff]
      %v970 = vld [vmem:[#allocation2 + $0x98] sm:$0xff]
      %v971 = vld [vmem:[#allocation2 + $0xa8] sm:$0xff]
      %v972 = vld [vmem:[#allocation2 + $0xb0] sm:$0xff]
      %v973 = vld [vmem:[#allocation2 + $0xc0] sm:$0xff]
      %v974 = vld [vmem:[#allocation2 + $0xc8] sm:$0xff]
      %v975 = vld [vmem:[#allocation2 + $0xd8] sm:$0xff]
      %v976 = vld [vmem:[#allocation2 + $0xe0] sm:$0xff]
      %v977 = vld [vmem:[#allocation2 + $0xf0] sm:$0xff]
      %v978 = vld [vmem:[#allocation2 + $0xf8] sm:$0xff]
      %v979 = vld [vmem:[#allocation2 + $0x108] sm:$0xff]
      %v980 = vld [vmem:[#allocation2 + $0x110] sm:$0xff]
      %v981 = vld [vmem:[#allocation2 + $0x120] sm:$0xff]
      %v982 = vld [vmem:[#allocation2 + $0x128] sm:$0xff]
      %v983 = vld [vmem:[#allocation2 + $0x138] sm:$0xff]
      %v984 = vld [vmem:[#allocation2 + $0x140] sm:$0xff]
      %v985 = vld [vmem:[#allocation2 + $0x150] sm:$0xff]
      %v986 = vld [vmem:[#allocation2 + $0x158] sm:$0xff]
      %v987 = vld [vmem:[#allocation2 + $0x168] sm:$0xff]
      %v988 = vld [vmem:[#allocation2 + $0x170] sm:$0xff]
      %v989 = vpack.c.bf16 %v958, %v957
      %v990 = vpack.c.bf16 %v960, %v959
      %v991 = vpack.c.bf16 %v962, %v961
      %v992 = vpack.c.bf16 %v964, %v963
      %v993 = vpack.c.bf16 %v966, %v965
      %v994 = vpack.c.bf16 %v968, %v967
      %v995 = vpack.c.bf16 %v970, %v969
      %v996 = vpack.c.bf16 %v972, %v971
      %v997 = vpack.c.bf16 %v974, %v973
      %v998 = vpack.c.bf16 %v976, %v975
      %v999 = vpack.c.bf16 %v978, %v977
      %v1000 = vpack.c.bf16 %v980, %v979
      %v1001 = vpack.c.bf16 %v982, %v981
      %v1002 = vpack.c.bf16 %v984, %v983
      %v1003 = vpack.c.bf16 %v986, %v985
      %v1004 = vpack.c.bf16 %v988, %v987
      %1005 = vst.msk [vmem:[#allocation3] sm:$0xff] %vm555, %v989
      %1006 = vst.msk [vmem:[#allocation3 + $0x8] sm:$0xff] %vm555, %v990
      %1007 = vst.msk [vmem:[#allocation3 + $0x10] sm:$0xff] %vm555, %v991
      %1008 = vst.msk [vmem:[#allocation3 + $0x18] sm:$0xff] %vm555, %v992
      %1009 = vst.msk [vmem:[#allocation3 + $0x20] sm:$0xff] %vm555, %v993
      %1010 = vst.msk [vmem:[#allocation3 + $0x28] sm:$0xff] %vm555, %v994
      %1011 = vst.msk [vmem:[#allocation3 + $0x30] sm:$0xff] %vm555, %v995
      %1012 = vst.msk [vmem:[#allocation3 + $0x38] sm:$0xff] %vm555, %v996
      %1013 = vst.msk [vmem:[#allocation3 + $0x40] sm:$0xff] %vm555, %v997
      %1014 = vst.msk [vmem:[#allocation3 + $0x48] sm:$0xff] %vm555, %v998
      %1015 = vst.msk [vmem:[#allocation3 + $0x50] sm:$0xff] %vm555, %v999
      %1016 = vst.msk [vmem:[#allocation3 + $0x58] sm:$0xff] %vm555, %v1000
      %1017 = vst.msk [vmem:[#allocation3 + $0x60] sm:$0xff] %vm555, %v1001
      %1018 = vst.msk [vmem:[#allocation3 + $0x68] sm:$0xff] %vm555, %v1002
      %1019 = vst.msk [vmem:[#allocation3 + $0x70] sm:$0xff] %vm555, %v1003
      %1020 = vst.msk [vmem:[#allocation3 + $0x78] sm:$0xff] %vm555, %v1004
      %v1021 = vld [vmem:[#allocation2 + $0x1] sm:$0xff]
      %v1022 = vld [vmem:[#allocation2 + $0x9] sm:$0xff]
      %v1023 = vld [vmem:[#allocation2 + $0x19] sm:$0xff]
      %v1024 = vld [vmem:[#allocation2 + $0x21] sm:$0xff]
      %v1025 = vld [vmem:[#allocation2 + $0x31] sm:$0xff]
      %v1026 = vld [vmem:[#allocation2 + $0x39] sm:$0xff]
      %v1027 = vld [vmem:[#allocation2 + $0x49] sm:$0xff]
      %v1028 = vld [vmem:[#allocation2 + $0x51] sm:$0xff]
      %v1029 = vld [vmem:[#allocation2 + $0x61] sm:$0xff]
      %v1030 = vld [vmem:[#allocation2 + $0x69] sm:$0xff]
      %v1031 = vld [vmem:[#allocation2 + $0x79] sm:$0xff]
      %v1032 = vld [vmem:[#allocation2 + $0x81] sm:$0xff]
      %v1033 = vld [vmem:[#allocation2 + $0x91] sm:$0xff]
      %v1034 = vld [vmem:[#allocation2 + $0x99] sm:$0xff]
      %v1035 = vld [vmem:[#allocation2 + $0xa9] sm:$0xff]
      %v1036 = vld [vmem:[#allocation2 + $0xb1] sm:$0xff]
      %v1037 = vld [vmem:[#allocation2 + $0xc1] sm:$0xff]
      %v1038 = vld [vmem:[#allocation2 + $0xc9] sm:$0xff]
      %v1039 = vld [vmem:[#allocation2 + $0xd9] sm:$0xff]
      %v1040 = vld [vmem:[#allocation2 + $0xe1] sm:$0xff]
      %v1041 = vld [vmem:[#allocation2 + $0xf1] sm:$0xff]
      %v1042 = vld [vmem:[#allocation2 + $0xf9] sm:$0xff]
      %v1043 = vld [vmem:[#allocation2 + $0x109] sm:$0xff]
      %v1044 = vld [vmem:[#allocation2 + $0x111] sm:$0xff]
      %v1045 = vld [vmem:[#allocation2 + $0x121] sm:$0xff]
      %v1046 = vld [vmem:[#allocation2 + $0x129] sm:$0xff]
      %v1047 = vld [vmem:[#allocation2 + $0x139] sm:$0xff]
      %v1048 = vld [vmem:[#allocation2 + $0x141] sm:$0xff]
      %v1049 = vld [vmem:[#allocation2 + $0x151] sm:$0xff]
      %v1050 = vld [vmem:[#allocation2 + $0x159] sm:$0xff]
      %v1051 = vld [vmem:[#allocation2 + $0x169] sm:$0xff]
      %v1052 = vld [vmem:[#allocation2 + $0x171] sm:$0xff]
      %v1053 = vpack.c.bf16 %v1022, %v1021
      %v1054 = vpack.c.bf16 %v1024, %v1023
      %v1055 = vpack.c.bf16 %v1026, %v1025
      %v1056 = vpack.c.bf16 %v1028, %v1027
      %v1057 = vpack.c.bf16 %v1030, %v1029
      %v1058 = vpack.c.bf16 %v1032, %v1031
      %v1059 = vpack.c.bf16 %v1034, %v1033
      %v1060 = vpack.c.bf16 %v1036, %v1035
      %v1061 = vpack.c.bf16 %v1038, %v1037
      %v1062 = vpack.c.bf16 %v1040, %v1039
      %v1063 = vpack.c.bf16 %v1042, %v1041
      %v1064 = vpack.c.bf16 %v1044, %v1043
      %v1065 = vpack.c.bf16 %v1046, %v1045
      %v1066 = vpack.c.bf16 %v1048, %v1047
      %v1067 = vpack.c.bf16 %v1050, %v1049
      %v1068 = vpack.c.bf16 %v1052, %v1051
      %1085 = vrot.lane.b32.xlu0 %v1053, 4
      %v1086 = vpop.permute.xlu0 %1085
      %1087 = vrot.lane.b32.xlu0 %v1054, 4
      %v1088 = vpop.permute.xlu0 %1087
      %1089 = vrot.lane.b32.xlu0 %v1055, 4
      %v1090 = vpop.permute.xlu0 %1089
      %1091 = vrot.lane.b32.xlu0 %v1056, 4
      %v1092 = vpop.permute.xlu0 %1091
      %1093 = vrot.lane.b32.xlu0 %v1057, 4
      %v1094 = vpop.permute.xlu0 %1093
      %1095 = vrot.lane.b32.xlu0 %v1058, 4
      %v1096 = vpop.permute.xlu0 %1095
      %1097 = vrot.lane.b32.xlu0 %v1059, 4
      %v1098 = vpop.permute.xlu0 %1097
      %1099 = vrot.lane.b32.xlu0 %v1060, 4
      %v1100 = vpop.permute.xlu0 %1099
      %1101 = vrot.lane.b32.xlu0 %v1061, 4
      %v1102 = vpop.permute.xlu0 %1101
      %1103 = vrot.lane.b32.xlu0 %v1062, 4
      %v1104 = vpop.permute.xlu0 %1103
      %1105 = vrot.lane.b32.xlu0 %v1063, 4
      %v1106 = vpop.permute.xlu0 %1105
      %1107 = vrot.lane.b32.xlu0 %v1064, 4
      %v1108 = vpop.permute.xlu0 %1107
      %1109 = vrot.lane.b32.xlu0 %v1065, 4
      %v1110 = vpop.permute.xlu0 %1109
      %1111 = vrot.lane.b32.xlu0 %v1066, 4
      %v1112 = vpop.permute.xlu0 %1111
      %1113 = vrot.lane.b32.xlu0 %v1067, 4
      %v1114 = vpop.permute.xlu0 %1113
      %1115 = vrot.lane.b32.xlu0 %v1068, 4
      %v1116 = vpop.permute.xlu0 %1115
      %vm1133 = vcmask 64544
      %1134 = vst.msk [vmem:[#allocation3] sm:$0xff] %vm1133, %v1086
      %1135 = vst.msk [vmem:[#allocation3 + $0x8] sm:$0xff] %vm1133, %v1088
      %1136 = vst.msk [vmem:[#allocation3 + $0x10] sm:$0xff] %vm1133, %v1090
      %1137 = vst.msk [vmem:[#allocation3 + $0x18] sm:$0xff] %vm1133, %v1092
      %1138 = vst.msk [vmem:[#allocation3 + $0x20] sm:$0xff] %vm1133, %v1094
      %1139 = vst.msk [vmem:[#allocation3 + $0x28] sm:$0xff] %vm1133, %v1096
      %1140 = vst.msk [vmem:[#allocation3 + $0x30] sm:$0xff] %vm1133, %v1098
      %1141 = vst.msk [vmem:[#allocation3 + $0x38] sm:$0xff] %vm1133, %v1100
      %1142 = vst.msk [vmem:[#allocation3 + $0x40] sm:$0xff] %vm1133, %v1102
      %1143 = vst.msk [vmem:[#allocation3 + $0x48] sm:$0xff] %vm1133, %v1104
      %1144 = vst.msk [vmem:[#allocation3 + $0x50] sm:$0xff] %vm1133, %v1106
      %1145 = vst.msk [vmem:[#allocation3 + $0x58] sm:$0xff] %vm1133, %v1108
      %1146 = vst.msk [vmem:[#allocation3 + $0x60] sm:$0xff] %vm1133, %v1110
      %1147 = vst.msk [vmem:[#allocation3 + $0x68] sm:$0xff] %vm1133, %v1112
      %1148 = vst.msk [vmem:[#allocation3 + $0x70] sm:$0xff] %vm1133, %v1114
      %1149 = vst.msk [vmem:[#allocation3 + $0x78] sm:$0xff] %vm1133, %v1116
      %v1150 = vld [vmem:[#allocation2 + $0x2] sm:$0xff]
      %v1151 = vld [vmem:[#allocation2 + $0xa] sm:$0xff]
      %v1152 = vld [vmem:[#allocation2 + $0x1a] sm:$0xff]
      %v1153 = vld [vmem:[#allocation2 + $0x22] sm:$0xff]
      %v1154 = vld [vmem:[#allocation2 + $0x32] sm:$0xff]
      %v1155 = vld [vmem:[#allocation2 + $0x3a] sm:$0xff]
      %v1156 = vld [vmem:[#allocation2 + $0x4a] sm:$0xff]
      %v1157 = vld [vmem:[#allocation2 + $0x52] sm:$0xff]
      %v1158 = vld [vmem:[#allocation2 + $0x62] sm:$0xff]
      %v1159 = vld [vmem:[#allocation2 + $0x6a] sm:$0xff]
      %v1160 = vld [vmem:[#allocation2 + $0x7a] sm:$0xff]
      %v1161 = vld [vmem:[#allocation2 + $0x82] sm:$0xff]
      %v1162 = vld [vmem:[#allocation2 + $0x92] sm:$0xff]
      %v1163 = vld [vmem:[#allocation2 + $0x9a] sm:$0xff]
      %v1164 = vld [vmem:[#allocation2 + $0xaa] sm:$0xff]
      %v1165 = vld [vmem:[#allocation2 + $0xb2] sm:$0xff]
      %v1166 = vld [vmem:[#allocation2 + $0xc2] sm:$0xff]
      %v1167 = vld [vmem:[#allocation2 + $0xca] sm:$0xff]
      %v1168 = vld [vmem:[#allocation2 + $0xda] sm:$0xff]
      %v1169 = vld [vmem:[#allocation2 + $0xe2] sm:$0xff]
      %v1170 = vld [vmem:[#allocation2 + $0xf2] sm:$0xff]
      %v1171 = vld [vmem:[#allocation2 + $0xfa] sm:$0xff]
      %v1172 = vld [vmem:[#allocation2 + $0x10a] sm:$0xff]
      %v1173 = vld [vmem:[#allocation2 + $0x112] sm:$0xff]
      %v1174 = vld [vmem:[#allocation2 + $0x122] sm:$0xff]
      %v1175 = vld [vmem:[#allocation2 + $0x12a] sm:$0xff]
      %v1176 = vld [vmem:[#allocation2 + $0x13a] sm:$0xff]
      %v1177 = vld [vmem:[#allocation2 + $0x142] sm:$0xff]
      %v1178 = vld [vmem:[#allocation2 + $0x152] sm:$0xff]
      %v1179 = vld [vmem:[#allocation2 + $0x15a] sm:$0xff]
      %v1180 = vld [vmem:[#allocation2 + $0x16a] sm:$0xff]
      %v1181 = vld [vmem:[#allocation2 + $0x172] sm:$0xff]
      %v1182 = vpack.c.bf16 %v1151, %v1150
      %v1183 = vpack.c.bf16 %v1153, %v1152
      %v1184 = vpack.c.bf16 %v1155, %v1154
      %v1185 = vpack.c.bf16 %v1157, %v1156
      %v1186 = vpack.c.bf16 %v1159, %v1158
      %v1187 = vpack.c.bf16 %v1161, %v1160
      %v1188 = vpack.c.bf16 %v1163, %v1162
      %v1189 = vpack.c.bf16 %v1165, %v1164
      %v1190 = vpack.c.bf16 %v1167, %v1166
      %v1191 = vpack.c.bf16 %v1169, %v1168
      %v1192 = vpack.c.bf16 %v1171, %v1170
      %v1193 = vpack.c.bf16 %v1173, %v1172
      %v1194 = vpack.c.bf16 %v1175, %v1174
      %v1195 = vpack.c.bf16 %v1177, %v1176
      %v1196 = vpack.c.bf16 %v1179, %v1178
      %v1197 = vpack.c.bf16 %v1181, %v1180
      %1214 = vrot.lane.b32.xlu0 %v1182, 8
      %v1215 = vpop.permute.xlu0 %1214
      %1216 = vrot.lane.b32.xlu0 %v1183, 8
      %v1217 = vpop.permute.xlu0 %1216
      %1218 = vrot.lane.b32.xlu0 %v1184, 8
      %v1219 = vpop.permute.xlu0 %1218
      %1220 = vrot.lane.b32.xlu0 %v1185, 8
      %v1221 = vpop.permute.xlu0 %1220
      %1222 = vrot.lane.b32.xlu0 %v1186, 8
      %v1223 = vpop.permute.xlu0 %1222
      %1224 = vrot.lane.b32.xlu0 %v1187, 8
      %v1225 = vpop.permute.xlu0 %1224
      %1226 = vrot.lane.b32.xlu0 %v1188, 8
      %v1227 = vpop.permute.xlu0 %1226
      %1228 = vrot.lane.b32.xlu0 %v1189, 8
      %v1229 = vpop.permute.xlu0 %1228
      %1230 = vrot.lane.b32.xlu0 %v1190, 8
      %v1231 = vpop.permute.xlu0 %1230
      %1232 = vrot.lane.b32.xlu0 %v1191, 8
      %v1233 = vpop.permute.xlu0 %1232
      %1234 = vrot.lane.b32.xlu0 %v1192, 8
      %v1235 = vpop.permute.xlu0 %1234
      %1236 = vrot.lane.b32.xlu0 %v1193, 8
      %v1237 = vpop.permute.xlu0 %1236
      %1238 = vrot.lane.b32.xlu0 %v1194, 8
      %v1239 = vpop.permute.xlu0 %1238
      %1240 = vrot.lane.b32.xlu0 %v1195, 8
      %v1241 = vpop.permute.xlu0 %1240
      %1242 = vrot.lane.b32.xlu0 %v1196, 8
      %v1243 = vpop.permute.xlu0 %1242
      %1244 = vrot.lane.b32.xlu0 %v1197, 8
      %v1245 = vpop.permute.xlu0 %1244
      %vm1262 = vcmask 97344
      %1263 = vst.msk [vmem:[#allocation3] sm:$0xff] %vm1262, %v1215
      %1264 = vst.msk [vmem:[#allocation3 + $0x8] sm:$0xff] %vm1262, %v1217
      %1265 = vst.msk [vmem:[#allocation3 + $0x10] sm:$0xff] %vm1262, %v1219
      %1266 = vst.msk [vmem:[#allocation3 + $0x18] sm:$0xff] %vm1262, %v1221
      %1267 = vst.msk [vmem:[#allocation3 + $0x20] sm:$0xff] %vm1262, %v1223
      %1268 = vst.msk [vmem:[#allocation3 + $0x28] sm:$0xff] %vm1262, %v1225
      %1269 = vst.msk [vmem:[#allocation3 + $0x30] sm:$0xff] %vm1262, %v1227
      %1270 = vst.msk [vmem:[#allocation3 + $0x38] sm:$0xff] %vm1262, %v1229
      %1271 = vst.msk [vmem:[#allocation3 + $0x40] sm:$0xff] %vm1262, %v1231
      %1272 = vst.msk [vmem:[#allocation3 + $0x48] sm:$0xff] %vm1262, %v1233
      %1273 = vst.msk [vmem:[#allocation3 + $0x50] sm:$0xff] %vm1262, %v1235
      %1274 = vst.msk [vmem:[#allocation3 + $0x58] sm:$0xff] %vm1262, %v1237
      %1275 = vst.msk [vmem:[#allocation3 + $0x60] sm:$0xff] %vm1262, %v1239
      %1276 = vst.msk [vmem:[#allocation3 + $0x68] sm:$0xff] %vm1262, %v1241
      %1277 = vst.msk [vmem:[#allocation3 + $0x70] sm:$0xff] %vm1262, %v1243
      %1278 = vst.msk [vmem:[#allocation3 + $0x78] sm:$0xff] %vm1262, %v1245
      %v1279 = vld [vmem:[%s924] sm:$0xff]
      %v1280 = vld [vmem:[%s924 + $0x8] sm:$0xff]
      %v1281 = vld [vmem:[%s924 + $0x18] sm:$0xff]
      %v1282 = vld [vmem:[%s924 + $0x20] sm:$0xff]
      %v1283 = vld [vmem:[%s924 + $0x30] sm:$0xff]
      %v1284 = vld [vmem:[%s924 + $0x38] sm:$0xff]
      %v1285 = vld [vmem:[%s924 + $0x48] sm:$0xff]
      %v1286 = vld [vmem:[%s924 + $0x50] sm:$0xff]
      %v1287 = vld [vmem:[%s924 + $0x60] sm:$0xff]
      %v1288 = vld [vmem:[%s924 + $0x68] sm:$0xff]
      %v1289 = vld [vmem:[%s924 + $0x78] sm:$0xff]
      %v1290 = vld [vmem:[%s924 + $0x80] sm:$0xff]
      %v1291 = vld [vmem:[%s924 + $0x90] sm:$0xff]
      %v1292 = vld [vmem:[%s924 + $0x98] sm:$0xff]
      %v1293 = vld [vmem:[%s924 + $0xa8] sm:$0xff]
      %v1294 = vld [vmem:[%s924 + $0xb0] sm:$0xff]
      %v1295 = vld [vmem:[%s924 + $0xc0] sm:$0xff]
      %v1296 = vld [vmem:[%s924 + $0xc8] sm:$0xff]
      %v1297 = vld [vmem:[%s924 + $0xd8] sm:$0xff]
      %v1298 = vld [vmem:[%s924 + $0xe0] sm:$0xff]
      %v1299 = vld [vmem:[%s924 + $0xf0] sm:$0xff]
      %v1300 = vld [vmem:[%s924 + $0xf8] sm:$0xff]
      %v1301 = vld [vmem:[%s924 + $0x108] sm:$0xff]
      %v1302 = vld [vmem:[%s924 + $0x110] sm:$0xff]
      %v1303 = vld [vmem:[%s924 + $0x120] sm:$0xff]
      %v1304 = vld [vmem:[%s924 + $0x128] sm:$0xff]
      %v1305 = vld [vmem:[%s924 + $0x138] sm:$0xff]
      %v1306 = vld [vmem:[%s924 + $0x140] sm:$0xff]
      %v1307 = vld [vmem:[%s924 + $0x150] sm:$0xff]
      %v1308 = vld [vmem:[%s924 + $0x158] sm:$0xff]
      %v1309 = vld [vmem:[%s924 + $0x168] sm:$0xff]
      %v1310 = vld [vmem:[%s924 + $0x170] sm:$0xff]
      %v1311 = vpack.c.bf16 %v1280, %v1279
      %v1312 = vpack.c.bf16 %v1282, %v1281
      %v1313 = vpack.c.bf16 %v1284, %v1283
      %v1314 = vpack.c.bf16 %v1286, %v1285
      %v1315 = vpack.c.bf16 %v1288, %v1287
      %v1316 = vpack.c.bf16 %v1290, %v1289
      %v1317 = vpack.c.bf16 %v1292, %v1291
      %v1318 = vpack.c.bf16 %v1294, %v1293
      %v1319 = vpack.c.bf16 %v1296, %v1295
      %v1320 = vpack.c.bf16 %v1298, %v1297
      %v1321 = vpack.c.bf16 %v1300, %v1299
      %v1322 = vpack.c.bf16 %v1302, %v1301
      %v1323 = vpack.c.bf16 %v1304, %v1303
      %v1324 = vpack.c.bf16 %v1306, %v1305
      %v1325 = vpack.c.bf16 %v1308, %v1307
      %v1326 = vpack.c.bf16 %v1310, %v1309
      %1343 = vrot.lane.b32.xlu0 %v1311, 12
      %v1344 = vpop.permute.xlu0 %1343
      %1345 = vrot.lane.b32.xlu0 %v1312, 12
      %v1346 = vpop.permute.xlu0 %1345
      %1347 = vrot.lane.b32.xlu0 %v1313, 12
      %v1348 = vpop.permute.xlu0 %1347
      %1349 = vrot.lane.b32.xlu0 %v1314, 12
      %v1350 = vpop.permute.xlu0 %1349
      %1351 = vrot.lane.b32.xlu0 %v1315, 12
      %v1352 = vpop.permute.xlu0 %1351
      %1353 = vrot.lane.b32.xlu0 %v1316, 12
      %v1354 = vpop.permute.xlu0 %1353
      %1355 = vrot.lane.b32.xlu0 %v1317, 12
      %v1356 = vpop.permute.xlu0 %1355
      %1357 = vrot.lane.b32.xlu0 %v1318, 12
      %v1358 = vpop.permute.xlu0 %1357
      %1359 = vrot.lane.b32.xlu0 %v1319, 12
      %v1360 = vpop.permute.xlu0 %1359
      %1361 = vrot.lane.b32.xlu0 %v1320, 12
      %v1362 = vpop.permute.xlu0 %1361
      %1363 = vrot.lane.b32.xlu0 %v1321, 12
      %v1364 = vpop.permute.xlu0 %1363
      %1365 = vrot.lane.b32.xlu0 %v1322, 12
      %v1366 = vpop.permute.xlu0 %1365
      %1367 = vrot.lane.b32.xlu0 %v1323, 12
      %v1368 = vpop.permute.xlu0 %1367
      %1369 = vrot.lane.b32.xlu0 %v1324, 12
      %v1370 = vpop.permute.xlu0 %1369
      %1371 = vrot.lane.b32.xlu0 %v1325, 12
      %v1372 = vpop.permute.xlu0 %1371
      %1373 = vrot.lane.b32.xlu0 %v1326, 12
      %v1374 = vpop.permute.xlu0 %1373
      %vm1391 = vcmask 130144
      %1392 = vst.msk [vmem:[#allocation3] sm:$0xff] %vm1391, %v1344
      %1393 = vst.msk [vmem:[#allocation3 + $0x8] sm:$0xff] %vm1391, %v1346
      %1394 = vst.msk [vmem:[#allocation3 + $0x10] sm:$0xff] %vm1391, %v1348
      %1395 = vst.msk [vmem:[#allocation3 + $0x18] sm:$0xff] %vm1391, %v1350
      %1396 = vst.msk [vmem:[#allocation3 + $0x20] sm:$0xff] %vm1391, %v1352
      %1397 = vst.msk [vmem:[#allocation3 + $0x28] sm:$0xff] %vm1391, %v1354
      %1398 = vst.msk [vmem:[#allocation3 + $0x30] sm:$0xff] %vm1391, %v1356
      %1399 = vst.msk [vmem:[#allocation3 + $0x38] sm:$0xff] %vm1391, %v1358
      %1400 = vst.msk [vmem:[#allocation3 + $0x40] sm:$0xff] %vm1391, %v1360
      %1401 = vst.msk [vmem:[#allocation3 + $0x48] sm:$0xff] %vm1391, %v1362
      %1402 = vst.msk [vmem:[#allocation3 + $0x50] sm:$0xff] %vm1391, %v1364
      %1403 = vst.msk [vmem:[#allocation3 + $0x58] sm:$0xff] %vm1391, %v1366
      %1404 = vst.msk [vmem:[#allocation3 + $0x60] sm:$0xff] %vm1391, %v1368
      %1405 = vst.msk [vmem:[#allocation3 + $0x68] sm:$0xff] %vm1391, %v1370
      %1406 = vst.msk [vmem:[#allocation3 + $0x70] sm:$0xff] %vm1391, %v1372
      %1407 = vst.msk [vmem:[#allocation3 + $0x78] sm:$0xff] %vm1391, %v1374
      %v1408 = vld [vmem:[%s924 + $0x1] sm:$0xff]
      %v1409 = vld [vmem:[%s924 + $0x9] sm:$0xff]
      %v1410 = vld [vmem:[%s924 + $0x19] sm:$0xff]
      %v1411 = vld [vmem:[%s924 + $0x21] sm:$0xff]
      %v1412 = vld [vmem:[%s924 + $0x31] sm:$0xff]
      %v1413 = vld [vmem:[%s924 + $0x39] sm:$0xff]
      %v1414 = vld [vmem:[%s924 + $0x49] sm:$0xff]
      %v1415 = vld [vmem:[%s924 + $0x51] sm:$0xff]
      %v1416 = vld [vmem:[%s924 + $0x61] sm:$0xff]
      %v1417 = vld [vmem:[%s924 + $0x69] sm:$0xff]
      %v1418 = vld [vmem:[%s924 + $0x79] sm:$0xff]
      %v1419 = vld [vmem:[%s924 + $0x81] sm:$0xff]
      %v1420 = vld [vmem:[%s924 + $0x91] sm:$0xff]
      %v1421 = vld [vmem:[%s924 + $0x99] sm:$0xff]
      %v1422 = vld [vmem:[%s924 + $0xa9] sm:$0xff]
      %v1423 = vld [vmem:[%s924 + $0xb1] sm:$0xff]
      %v1424 = vld [vmem:[%s924 + $0xc1] sm:$0xff]
      %v1425 = vld [vmem:[%s924 + $0xc9] sm:$0xff]
      %v1426 = vld [vmem:[%s924 + $0xd9] sm:$0xff]
      %v1427 = vld [vmem:[%s924 + $0xe1] sm:$0xff]
      %v1428 = vld [vmem:[%s924 + $0xf1] sm:$0xff]
      %v1429 = vld [vmem:[%s924 + $0xf9] sm:$0xff]
      %v1430 = vld [vmem:[%s924 + $0x109] sm:$0xff]
      %v1431 = vld [vmem:[%s924 + $0x111] sm:$0xff]
      %v1432 = vld [vmem:[%s924 + $0x121] sm:$0xff]
      %v1433 = vld [vmem:[%s924 + $0x129] sm:$0xff]
      %v1434 = vld [vmem:[%s924 + $0x139] sm:$0xff]
      %v1435 = vld [vmem:[%s924 + $0x141] sm:$0xff]
      %v1436 = vld [vmem:[%s924 + $0x151] sm:$0xff]
      %v1437 = vld [vmem:[%s924 + $0x159] sm:$0xff]
      %v1438 = vld [vmem:[%s924 + $0x169] sm:$0xff]
      %v1439 = vld [vmem:[%s924 + $0x171] sm:$0xff]
      %v1440 = vpack.c.bf16 %v1409, %v1408
      %v1441 = vpack.c.bf16 %v1411, %v1410
      %v1442 = vpack.c.bf16 %v1413, %v1412
      %v1443 = vpack.c.bf16 %v1415, %v1414
      %v1444 = vpack.c.bf16 %v1417, %v1416
      %v1445 = vpack.c.bf16 %v1419, %v1418
      %v1446 = vpack.c.bf16 %v1421, %v1420
      %v1447 = vpack.c.bf16 %v1423, %v1422
      %v1448 = vpack.c.bf16 %v1425, %v1424
      %v1449 = vpack.c.bf16 %v1427, %v1426
      %v1450 = vpack.c.bf16 %v1429, %v1428
      %v1451 = vpack.c.bf16 %v1431, %v1430
      %v1452 = vpack.c.bf16 %v1433, %v1432
      %v1453 = vpack.c.bf16 %v1435, %v1434
      %v1454 = vpack.c.bf16 %v1437, %v1436
      %v1455 = vpack.c.bf16 %v1439, %v1438
      %1472 = vrot.lane.b32.xlu0 %v1440, 16
      %v1473 = vpop.permute.xlu0 %1472
      %1474 = vrot.lane.b32.xlu0 %v1441, 16
      %v1475 = vpop.permute.xlu0 %1474
      %1476 = vrot.lane.b32.xlu0 %v1442, 16
      %v1477 = vpop.permute.xlu0 %1476
      %1478 = vrot.lane.b32.xlu0 %v1443, 16
      %v1479 = vpop.permute.xlu0 %1478
      %1480 = vrot.lane.b32.xlu0 %v1444, 16
      %v1481 = vpop.permute.xlu0 %1480
      %1482 = vrot.lane.b32.xlu0 %v1445, 16
      %v1483 = vpop.permute.xlu0 %1482
      %1484 = vrot.lane.b32.xlu0 %v1446, 16
      %v1485 = vpop.permute.xlu0 %1484
      %1486 = vrot.lane.b32.xlu0 %v1447, 16
      %v1487 = vpop.permute.xlu0 %1486
      %1488 = vrot.lane.b32.xlu0 %v1448, 16
      %v1489 = vpop.permute.xlu0 %1488
      %1490 = vrot.lane.b32.xlu0 %v1449, 16
      %v1491 = vpop.permute.xlu0 %1490
      %1492 = vrot.lane.b32.xlu0 %v1450, 16
      %v1493 = vpop.permute.xlu0 %1492
      %1494 = vrot.lane.b32.xlu0 %v1451, 16
      %v1495 = vpop.permute.xlu0 %1494
      %1496 = vrot.lane.b32.xlu0 %v1452, 16
      %v1497 = vpop.permute.xlu0 %1496
      %1498 = vrot.lane.b32.xlu0 %v1453, 16
      %v1499 = vpop.permute.xlu0 %1498
      %1500 = vrot.lane.b32.xlu0 %v1454, 16
      %v1501 = vpop.permute.xlu0 %1500
      %1502 = vrot.lane.b32.xlu0 %v1455, 16
      %v1503 = vpop.permute.xlu0 %1502
      %vm1520 = vcmask 162944
      %1521 = vst.msk [vmem:[#allocation3] sm:$0xff] %vm1520, %v1473
      %1522 = vst.msk [vmem:[#allocation3 + $0x8] sm:$0xff] %vm1520, %v1475
      %1523 = vst.msk [vmem:[#allocation3 + $0x10] sm:$0xff] %vm1520, %v1477
      %1524 = vst.msk [vmem:[#allocation3 + $0x18] sm:$0xff] %vm1520, %v1479
      %1525 = vst.msk [vmem:[#allocation3 + $0x20] sm:$0xff] %vm1520, %v1481
      %1526 = vst.msk [vmem:[#allocation3 + $0x28] sm:$0xff] %vm1520, %v1483
      %1527 = vst.msk [vmem:[#allocation3 + $0x30] sm:$0xff] %vm1520, %v1485
      %1528 = vst.msk [vmem:[#allocation3 + $0x38] sm:$0xff] %vm1520, %v1487
      %1529 = vst.msk [vmem:[#allocation3 + $0x40] sm:$0xff] %vm1520, %v1489
      %1530 = vst.msk [vmem:[#allocation3 + $0x48] sm:$0xff] %vm1520, %v1491
      %1531 = vst.msk [vmem:[#allocation3 + $0x50] sm:$0xff] %vm1520, %v1493
      %1532 = vst.msk [vmem:[#allocation3 + $0x58] sm:$0xff] %vm1520, %v1495
      %1533 = vst.msk [vmem:[#allocation3 + $0x60] sm:$0xff] %vm1520, %v1497
      %1534 = vst.msk [vmem:[#allocation3 + $0x68] sm:$0xff] %vm1520, %v1499
      %1535 = vst.msk [vmem:[#allocation3 + $0x70] sm:$0xff] %vm1520, %v1501
      %1536 = vst.msk [vmem:[#allocation3 + $0x78] sm:$0xff] %vm1520, %v1503
      %v1537 = vld [vmem:[%s924 + $0x2] sm:$0xff]
      %v1538 = vld [vmem:[%s924 + $0xa] sm:$0xff]
      %v1539 = vld [vmem:[%s924 + $0x1a] sm:$0xff]
      %v1540 = vld [vmem:[%s924 + $0x22] sm:$0xff]
      %v1541 = vld [vmem:[%s924 + $0x32] sm:$0xff]
      %v1542 = vld [vmem:[%s924 + $0x3a] sm:$0xff]
      %v1543 = vld [vmem:[%s924 + $0x4a] sm:$0xff]
      %v1544 = vld [vmem:[%s924 + $0x52] sm:$0xff]
      %v1545 = vld [vmem:[%s924 + $0x62] sm:$0xff]
      %v1546 = vld [vmem:[%s924 + $0x6a] sm:$0xff]
      %v1547 = vld [vmem:[%s924 + $0x7a] sm:$0xff]
      %v1548 = vld [vmem:[%s924 + $0x82] sm:$0xff]
      %v1549 = vld [vmem:[%s924 + $0x92] sm:$0xff]
      %v1550 = vld [vmem:[%s924 + $0x9a] sm:$0xff]
      %v1551 = vld [vmem:[%s924 + $0xaa] sm:$0xff]
      %v1552 = vld [vmem:[%s924 + $0xb2] sm:$0xff]
      %v1553 = vld [vmem:[%s924 + $0xc2] sm:$0xff]
      %v1554 = vld [vmem:[%s924 + $0xca] sm:$0xff]
      %v1555 = vld [vmem:[%s924 + $0xda] sm:$0xff]
      %v1556 = vld [vmem:[%s924 + $0xe2] sm:$0xff]
      %v1557 = vld [vmem:[%s924 + $0xf2] sm:$0xff]
      %v1558 = vld [vmem:[%s924 + $0xfa] sm:$0xff]
      %v1559 = vld [vmem:[%s924 + $0x10a] sm:$0xff]
      %v1560 = vld [vmem:[%s924 + $0x112] sm:$0xff]
      %v1561 = vld [vmem:[%s924 + $0x122] sm:$0xff]
      %v1562 = vld [vmem:[%s924 + $0x12a] sm:$0xff]
      %v1563 = vld [vmem:[%s924 + $0x13a] sm:$0xff]
      %v1564 = vld [vmem:[%s924 + $0x142] sm:$0xff]
      %v1565 = vld [vmem:[%s924 + $0x152] sm:$0xff]
      %v1566 = vld [vmem:[%s924 + $0x15a] sm:$0xff]
      %v1567 = vld [vmem:[%s924 + $0x16a] sm:$0xff]
      %v1568 = vld [vmem:[%s924 + $0x172] sm:$0xff]
      %v1569 = vpack.c.bf16 %v1538, %v1537
      %v1570 = vpack.c.bf16 %v1540, %v1539
      %v1571 = vpack.c.bf16 %v1542, %v1541
      %v1572 = vpack.c.bf16 %v1544, %v1543
      %v1573 = vpack.c.bf16 %v1546, %v1545
      %v1574 = vpack.c.bf16 %v1548, %v1547
      %v1575 = vpack.c.bf16 %v1550, %v1549
      %v1576 = vpack.c.bf16 %v1552, %v1551
      %v1577 = vpack.c.bf16 %v1554, %v1553
      %v1578 = vpack.c.bf16 %v1556, %v1555
      %v1579 = vpack.c.bf16 %v1558, %v1557
      %v1580 = vpack.c.bf16 %v1560, %v1559
      %v1581 = vpack.c.bf16 %v1562, %v1561
      %v1582 = vpack.c.bf16 %v1564, %v1563
      %v1583 = vpack.c.bf16 %v1566, %v1565
      %v1584 = vpack.c.bf16 %v1568, %v1567
      %1601 = vrot.lane.b32.xlu0 %v1569, 20
      %v1602 = vpop.permute.xlu0 %1601
      %1603 = vrot.lane.b32.xlu0 %v1570, 20
      %v1604 = vpop.permute.xlu0 %1603
      %1605 = vrot.lane.b32.xlu0 %v1571, 20
      %v1606 = vpop.permute.xlu0 %1605
      %1607 = vrot.lane.b32.xlu0 %v1572, 20
      %v1608 = vpop.permute.xlu0 %1607
      %1609 = vrot.lane.b32.xlu0 %v1573, 20
      %v1610 = vpop.permute.xlu0 %1609
      %1611 = vrot.lane.b32.xlu0 %v1574, 20
      %v1612 = vpop.permute.xlu0 %1611
      %1613 = vrot.lane.b32.xlu0 %v1575, 20
      %v1614 = vpop.permute.xlu0 %1613
      %1615 = vrot.lane.b32.xlu0 %v1576, 20
      %v1616 = vpop.permute.xlu0 %1615
      %1617 = vrot.lane.b32.xlu0 %v1577, 20
      %v1618 = vpop.permute.xlu0 %1617
      %1619 = vrot.lane.b32.xlu0 %v1578, 20
      %v1620 = vpop.permute.xlu0 %1619
      %1621 = vrot.lane.b32.xlu0 %v1579, 20
      %v1622 = vpop.permute.xlu0 %1621
      %1623 = vrot.lane.b32.xlu0 %v1580, 20
      %v1624 = vpop.permute.xlu0 %1623
      %1625 = vrot.lane.b32.xlu0 %v1581, 20
      %v1626 = vpop.permute.xlu0 %1625
      %1627 = vrot.lane.b32.xlu0 %v1582, 20
      %v1628 = vpop.permute.xlu0 %1627
      %1629 = vrot.lane.b32.xlu0 %v1583, 20
      %v1630 = vpop.permute.xlu0 %1629
      %1631 = vrot.lane.b32.xlu0 %v1584, 20
      %v1632 = vpop.permute.xlu0 %1631
      %vm1649 = vcmask 195744
      %1650 = vst.msk [vmem:[#allocation3] sm:$0xff] %vm1649, %v1602
      %1651 = vst.msk [vmem:[#allocation3 + $0x8] sm:$0xff] %vm1649, %v1604
      %1652 = vst.msk [vmem:[#allocation3 + $0x10] sm:$0xff] %vm1649, %v1606
      %1653 = vst.msk [vmem:[#allocation3 + $0x18] sm:$0xff] %vm1649, %v1608
      %1654 = vst.msk [vmem:[#allocation3 + $0x20] sm:$0xff] %vm1649, %v1610
      %1655 = vst.msk [vmem:[#allocation3 + $0x28] sm:$0xff] %vm1649, %v1612
      %1656 = vst.msk [vmem:[#allocation3 + $0x30] sm:$0xff] %vm1649, %v1614
      %1657 = vst.msk [vmem:[#allocation3 + $0x38] sm:$0xff] %vm1649, %v1616
      %1658 = vst.msk [vmem:[#allocation3 + $0x40] sm:$0xff] %vm1649, %v1618
      %1659 = vst.msk [vmem:[#allocation3 + $0x48] sm:$0xff] %vm1649, %v1620
      %1660 = vst.msk [vmem:[#allocation3 + $0x50] sm:$0xff] %vm1649, %v1622
      %1661 = vst.msk [vmem:[#allocation3 + $0x58] sm:$0xff] %vm1649, %v1624
      %1662 = vst.msk [vmem:[#allocation3 + $0x60] sm:$0xff] %vm1649, %v1626
      %1663 = vst.msk [vmem:[#allocation3 + $0x68] sm:$0xff] %vm1649, %v1628
      %1664 = vst.msk [vmem:[#allocation3 + $0x70] sm:$0xff] %vm1649, %v1630
      %1665 = vst.msk [vmem:[#allocation3 + $0x78] sm:$0xff] %vm1649, %v1632
      %s1666 = scalar_lea.vmem [#allocation2], 48
      %v1667 = vld [vmem:[%s1666] sm:$0xff]
      %v1668 = vld [vmem:[%s1666 + $0x8] sm:$0xff]
      %v1669 = vld [vmem:[%s1666 + $0x18] sm:$0xff]
      %v1670 = vld [vmem:[%s1666 + $0x20] sm:$0xff]
      %v1671 = vld [vmem:[%s1666 + $0x30] sm:$0xff]
      %v1672 = vld [vmem:[%s1666 + $0x38] sm:$0xff]
      %v1673 = vld [vmem:[%s1666 + $0x48] sm:$0xff]
      %v1674 = vld [vmem:[%s1666 + $0x50] sm:$0xff]
      %v1675 = vld [vmem:[%s1666 + $0x60] sm:$0xff]
      %v1676 = vld [vmem:[%s1666 + $0x68] sm:$0xff]
      %v1677 = vld [vmem:[%s1666 + $0x78] sm:$0xff]
      %v1678 = vld [vmem:[%s1666 + $0x80] sm:$0xff]
      %v1679 = vld [vmem:[%s1666 + $0x90] sm:$0xff]
      %v1680 = vld [vmem:[%s1666 + $0x98] sm:$0xff]
      %v1681 = vld [vmem:[%s1666 + $0xa8] sm:$0xff]
      %v1682 = vld [vmem:[%s1666 + $0xb0] sm:$0xff]
      %v1683 = vld [vmem:[%s1666 + $0xc0] sm:$0xff]
      %v1684 = vld [vmem:[%s1666 + $0xc8] sm:$0xff]
      %v1685 = vld [vmem:[%s1666 + $0xd8] sm:$0xff]
      %v1686 = vld [vmem:[%s1666 + $0xe0] sm:$0xff]
      %v1687 = vld [vmem:[%s1666 + $0xf0] sm:$0xff]
      %v1688 = vld [vmem:[%s1666 + $0xf8] sm:$0xff]
      %v1689 = vld [vmem:[%s1666 + $0x108] sm:$0xff]
      %v1690 = vld [vmem:[%s1666 + $0x110] sm:$0xff]
      %v1691 = vld [vmem:[%s1666 + $0x120] sm:$0xff]
      %v1692 = vld [vmem:[%s1666 + $0x128] sm:$0xff]
      %v1693 = vld [vmem:[%s1666 + $0x138] sm:$0xff]
      %v1694 = vld [vmem:[%s1666 + $0x140] sm:$0xff]
      %v1695 = vld [vmem:[%s1666 + $0x150] sm:$0xff]
      %v1696 = vld [vmem:[%s1666 + $0x158] sm:$0xff]
      %v1697 = vld [vmem:[%s1666 + $0x168] sm:$0xff]
      %v1698 = vld [vmem:[%s1666 + $0x170] sm:$0xff]
      %v1699 = vpack.c.bf16 %v1668, %v1667
      %v1700 = vpack.c.bf16 %v1670, %v1669
      %v1701 = vpack.c.bf16 %v1672, %v1671
      %v1702 = vpack.c.bf16 %v1674, %v1673
      %v1703 = vpack.c.bf16 %v1676, %v1675
      %v1704 = vpack.c.bf16 %v1678, %v1677
      %v1705 = vpack.c.bf16 %v1680, %v1679
      %v1706 = vpack.c.bf16 %v1682, %v1681
      %v1707 = vpack.c.bf16 %v1684, %v1683
      %v1708 = vpack.c.bf16 %v1686, %v1685
      %v1709 = vpack.c.bf16 %v1688, %v1687
      %v1710 = vpack.c.bf16 %v1690, %v1689
      %v1711 = vpack.c.bf16 %v1692, %v1691
      %v1712 = vpack.c.bf16 %v1694, %v1693
      %v1713 = vpack.c.bf16 %v1696, %v1695
      %v1714 = vpack.c.bf16 %v1698, %v1697
      %1731 = vrot.lane.b32.xlu0 %v1699, 24
      %v1732 = vpop.permute.xlu0 %1731
      %1733 = vrot.lane.b32.xlu0 %v1700, 24
      %v1734 = vpop.permute.xlu0 %1733
      %1735 = vrot.lane.b32.xlu0 %v1701, 24
      %v1736 = vpop.permute.xlu0 %1735
      %1737 = vrot.lane.b32.xlu0 %v1702, 24
      %v1738 = vpop.permute.xlu0 %1737
      %1739 = vrot.lane.b32.xlu0 %v1703, 24
      %v1740 = vpop.permute.xlu0 %1739
      %1741 = vrot.lane.b32.xlu0 %v1704, 24
      %v1742 = vpop.permute.xlu0 %1741
      %1743 = vrot.lane.b32.xlu0 %v1705, 24
      %v1744 = vpop.permute.xlu0 %1743
      %1745 = vrot.lane.b32.xlu0 %v1706, 24
      %v1746 = vpop.permute.xlu0 %1745
      %1747 = vrot.lane.b32.xlu0 %v1707, 24
      %v1748 = vpop.permute.xlu0 %1747
      %1749 = vrot.lane.b32.xlu0 %v1708, 24
      %v1750 = vpop.permute.xlu0 %1749
      %1751 = vrot.lane.b32.xlu0 %v1709, 24
      %v1752 = vpop.permute.xlu0 %1751
      %1753 = vrot.lane.b32.xlu0 %v1710, 24
      %v1754 = vpop.permute.xlu0 %1753
      %1755 = vrot.lane.b32.xlu0 %v1711, 24
      %v1756 = vpop.permute.xlu0 %1755
      %1757 = vrot.lane.b32.xlu0 %v1712, 24
      %v1758 = vpop.permute.xlu0 %1757
      %1759 = vrot.lane.b32.xlu0 %v1713, 24
      %v1760 = vpop.permute.xlu0 %1759
      %1761 = vrot.lane.b32.xlu0 %v1714, 24
      %v1762 = vpop.permute.xlu0 %1761
      %vm1779 = vcmask 228544
      %1780 = vst.msk [vmem:[#allocation3] sm:$0xff] %vm1779, %v1732
      %1781 = vst.msk [vmem:[#allocation3 + $0x8] sm:$0xff] %vm1779, %v1734
      %1782 = vst.msk [vmem:[#allocation3 + $0x10] sm:$0xff] %vm1779, %v1736
      %1783 = vst.msk [vmem:[#allocation3 + $0x18] sm:$0xff] %vm1779, %v1738
      %1784 = vst.msk [vmem:[#allocation3 + $0x20] sm:$0xff] %vm1779, %v1740
      %1785 = vst.msk [vmem:[#allocation3 + $0x28] sm:$0xff] %vm1779, %v1742
      %1786 = vst.msk [vmem:[#allocation3 + $0x30] sm:$0xff] %vm1779, %v1744
      %1787 = vst.msk [vmem:[#allocation3 + $0x38] sm:$0xff] %vm1779, %v1746
      %1788 = vst.msk [vmem:[#allocation3 + $0x40] sm:$0xff] %vm1779, %v1748
      %1789 = vst.msk [vmem:[#allocation3 + $0x48] sm:$0xff] %vm1779, %v1750
      %1790 = vst.msk [vmem:[#allocation3 + $0x50] sm:$0xff] %vm1779, %v1752
      %1791 = vst.msk [vmem:[#allocation3 + $0x58] sm:$0xff] %vm1779, %v1754
      %1792 = vst.msk [vmem:[#allocation3 + $0x60] sm:$0xff] %vm1779, %v1756
      %1793 = vst.msk [vmem:[#allocation3 + $0x68] sm:$0xff] %vm1779, %v1758
      %1794 = vst.msk [vmem:[#allocation3 + $0x70] sm:$0xff] %vm1779, %v1760
      %1795 = vst.msk [vmem:[#allocation3 + $0x78] sm:$0xff] %vm1779, %v1762
      %v1796 = vld [vmem:[%s1666 + $0x1] sm:$0xff]
      %v1797 = vld [vmem:[%s1666 + $0x9] sm:$0xff]
      %v1798 = vld [vmem:[%s1666 + $0x19] sm:$0xff]
      %v1799 = vld [vmem:[%s1666 + $0x21] sm:$0xff]
      %v1800 = vld [vmem:[%s1666 + $0x31] sm:$0xff]
      %v1801 = vld [vmem:[%s1666 + $0x39] sm:$0xff]
      %v1802 = vld [vmem:[%s1666 + $0x49] sm:$0xff]
      %v1803 = vld [vmem:[%s1666 + $0x51] sm:$0xff]
      %v1804 = vld [vmem:[%s1666 + $0x61] sm:$0xff]
      %v1805 = vld [vmem:[%s1666 + $0x69] sm:$0xff]
      %v1806 = vld [vmem:[%s1666 + $0x79] sm:$0xff]
      %v1807 = vld [vmem:[%s1666 + $0x81] sm:$0xff]
      %v1808 = vld [vmem:[%s1666 + $0x91] sm:$0xff]
      %v1809 = vld [vmem:[%s1666 + $0x99] sm:$0xff]
      %v1810 = vld [vmem:[%s1666 + $0xa9] sm:$0xff]
      %v1811 = vld [vmem:[%s1666 + $0xb1] sm:$0xff]
      %v1812 = vld [vmem:[%s1666 + $0xc1] sm:$0xff]
      %v1813 = vld [vmem:[%s1666 + $0xc9] sm:$0xff]
      %v1814 = vld [vmem:[%s1666 + $0xd9] sm:$0xff]
      %v1815 = vld [vmem:[%s1666 + $0xe1] sm:$0xff]
      %v1816 = vld [vmem:[%s1666 + $0xf1] sm:$0xff]
      %v1817 = vld [vmem:[%s1666 + $0xf9] sm:$0xff]
      %v1818 = vld [vmem:[%s1666 + $0x109] sm:$0xff]
      %v1819 = vld [vmem:[%s1666 + $0x111] sm:$0xff]
      %v1820 = vld [vmem:[%s1666 + $0x121] sm:$0xff]
      %v1821 = vld [vmem:[%s1666 + $0x129] sm:$0xff]
      %v1822 = vld [vmem:[%s1666 + $0x139] sm:$0xff]
      %v1823 = vld [vmem:[%s1666 + $0x141] sm:$0xff]
      %v1824 = vld [vmem:[%s1666 + $0x151] sm:$0xff]
      %v1825 = vld [vmem:[%s1666 + $0x159] sm:$0xff]
      %v1826 = vld [vmem:[%s1666 + $0x169] sm:$0xff]
      %v1827 = vld [vmem:[%s1666 + $0x171] sm:$0xff]
      %v1828 = vpack.c.bf16 %v1797, %v1796
      %v1829 = vpack.c.bf16 %v1799, %v1798
      %v1830 = vpack.c.bf16 %v1801, %v1800
      %v1831 = vpack.c.bf16 %v1803, %v1802
      %v1832 = vpack.c.bf16 %v1805, %v1804
      %v1833 = vpack.c.bf16 %v1807, %v1806
      %v1834 = vpack.c.bf16 %v1809, %v1808
      %v1835 = vpack.c.bf16 %v1811, %v1810
      %v1836 = vpack.c.bf16 %v1813, %v1812
      %v1837 = vpack.c.bf16 %v1815, %v1814
      %v1838 = vpack.c.bf16 %v1817, %v1816
      %v1839 = vpack.c.bf16 %v1819, %v1818
      %v1840 = vpack.c.bf16 %v1821, %v1820
      %v1841 = vpack.c.bf16 %v1823, %v1822
      %v1842 = vpack.c.bf16 %v1825, %v1824
      %v1843 = vpack.c.bf16 %v1827, %v1826
      %1860 = vrot.lane.b32.xlu0 %v1828, 28
      %v1861 = vpop.permute.xlu0 %1860
      %1862 = vrot.lane.b32.xlu0 %v1829, 28
      %v1863 = vpop.permute.xlu0 %1862
      %1864 = vrot.lane.b32.xlu0 %v1830, 28
      %v1865 = vpop.permute.xlu0 %1864
      %1866 = vrot.lane.b32.xlu0 %v1831, 28
      %v1867 = vpop.permute.xlu0 %1866
      %1868 = vrot.lane.b32.xlu0 %v1832, 28
      %v1869 = vpop.permute.xlu0 %1868
      %1870 = vrot.lane.b32.xlu0 %v1833, 28
      %v1871 = vpop.permute.xlu0 %1870
      %1872 = vrot.lane.b32.xlu0 %v1834, 28
      %v1873 = vpop.permute.xlu0 %1872
      %1874 = vrot.lane.b32.xlu0 %v1835, 28
      %v1875 = vpop.permute.xlu0 %1874
      %1876 = vrot.lane.b32.xlu0 %v1836, 28
      %v1877 = vpop.permute.xlu0 %1876
      %1878 = vrot.lane.b32.xlu0 %v1837, 28
      %v1879 = vpop.permute.xlu0 %1878
      %1880 = vrot.lane.b32.xlu0 %v1838, 28
      %v1881 = vpop.permute.xlu0 %1880
      %1882 = vrot.lane.b32.xlu0 %v1839, 28
      %v1883 = vpop.permute.xlu0 %1882
      %1884 = vrot.lane.b32.xlu0 %v1840, 28
      %v1885 = vpop.permute.xlu0 %1884
      %1886 = vrot.lane.b32.xlu0 %v1841, 28
      %v1887 = vpop.permute.xlu0 %1886
      %1888 = vrot.lane.b32.xlu0 %v1842, 28
      %v1889 = vpop.permute.xlu0 %1888
      %1890 = vrot.lane.b32.xlu0 %v1843, 28
      %v1891 = vpop.permute.xlu0 %1890
      %vm1908 = vcmask 261344
      %1909 = vst.msk [vmem:[#allocation3] sm:$0xff] %vm1908, %v1861
      %1910 = vst.msk [vmem:[#allocation3 + $0x8] sm:$0xff] %vm1908, %v1863
      %1911 = vst.msk [vmem:[#allocation3 + $0x10] sm:$0xff] %vm1908, %v1865
      %1912 = vst.msk [vmem:[#allocation3 + $0x18] sm:$0xff] %vm1908, %v1867
      %1913 = vst.msk [vmem:[#allocation3 + $0x20] sm:$0xff] %vm1908, %v1869
      %1914 = vst.msk [vmem:[#allocation3 + $0x28] sm:$0xff] %vm1908, %v1871
      %1915 = vst.msk [vmem:[#allocation3 + $0x30] sm:$0xff] %vm1908, %v1873
      %1916 = vst.msk [vmem:[#allocation3 + $0x38] sm:$0xff] %vm1908, %v1875
      %1917 = vst.msk [vmem:[#allocation3 + $0x40] sm:$0xff] %vm1908, %v1877
      %1918 = vst.msk [vmem:[#allocation3 + $0x48] sm:$0xff] %vm1908, %v1879
      %1919 = vst.msk [vmem:[#allocation3 + $0x50] sm:$0xff] %vm1908, %v1881
      %1920 = vst.msk [vmem:[#allocation3 + $0x58] sm:$0xff] %vm1908, %v1883
      %1921 = vst.msk [vmem:[#allocation3 + $0x60] sm:$0xff] %vm1908, %v1885
      %1922 = vst.msk [vmem:[#allocation3 + $0x68] sm:$0xff] %vm1908, %v1887
      %1923 = vst.msk [vmem:[#allocation3 + $0x70] sm:$0xff] %vm1908, %v1889
      %1924 = vst.msk [vmem:[#allocation3 + $0x78] sm:$0xff] %vm1908, %v1891
      %v1925 = vld [vmem:[%s1666 + $0x2] sm:$0xff]
      %v1926 = vld [vmem:[%s1666 + $0xa] sm:$0xff]
      %v1927 = vld [vmem:[%s1666 + $0x1a] sm:$0xff]
      %v1928 = vld [vmem:[%s1666 + $0x22] sm:$0xff]
      %v1929 = vld [vmem:[%s1666 + $0x32] sm:$0xff]
      %v1930 = vld [vmem:[%s1666 + $0x3a] sm:$0xff]
      %v1931 = vld [vmem:[%s1666 + $0x4a] sm:$0xff]
      %v1932 = vld [vmem:[%s1666 + $0x52] sm:$0xff]
      %v1933 = vld [vmem:[%s1666 + $0x62] sm:$0xff]
      %v1934 = vld [vmem:[%s1666 + $0x6a] sm:$0xff]
      %v1935 = vld [vmem:[%s1666 + $0x7a] sm:$0xff]
      %v1936 = vld [vmem:[%s1666 + $0x82] sm:$0xff]
      %v1937 = vld [vmem:[%s1666 + $0x92] sm:$0xff]
      %v1938 = vld [vmem:[%s1666 + $0x9a] sm:$0xff]
      %v1939 = vld [vmem:[%s1666 + $0xaa] sm:$0xff]
      %v1940 = vld [vmem:[%s1666 + $0xb2] sm:$0xff]
      %v1941 = vld [vmem:[%s1666 + $0xc2] sm:$0xff]
      %v1942 = vld [vmem:[%s1666 + $0xca] sm:$0xff]
      %v1943 = vld [vmem:[%s1666 + $0xda] sm:$0xff]
      %v1944 = vld [vmem:[%s1666 + $0xe2] sm:$0xff]
      %v1945 = vld [vmem:[%s1666 + $0xf2] sm:$0xff]
      %v1946 = vld [vmem:[%s1666 + $0xfa] sm:$0xff]
      %v1947 = vld [vmem:[%s1666 + $0x10a] sm:$0xff]
      %v1948 = vld [vmem:[%s1666 + $0x112] sm:$0xff]
      %v1949 = vld [vmem:[%s1666 + $0x122] sm:$0xff]
      %v1950 = vld [vmem:[%s1666 + $0x12a] sm:$0xff]
      %v1951 = vld [vmem:[%s1666 + $0x13a] sm:$0xff]
      %v1952 = vld [vmem:[%s1666 + $0x142] sm:$0xff]
      %v1953 = vld [vmem:[%s1666 + $0x152] sm:$0xff]
      %v1954 = vld [vmem:[%s1666 + $0x15a] sm:$0xff]
      %v1955 = vld [vmem:[%s1666 + $0x16a] sm:$0xff]
      %v1956 = vld [vmem:[%s1666 + $0x172] sm:$0xff]
      %v1957 = vpack.c.bf16 %v1926, %v1925
      %v1958 = vpack.c.bf16 %v1928, %v1927
      %v1959 = vpack.c.bf16 %v1930, %v1929
      %v1960 = vpack.c.bf16 %v1932, %v1931
      %v1961 = vpack.c.bf16 %v1934, %v1933
      %v1962 = vpack.c.bf16 %v1936, %v1935
      %v1963 = vpack.c.bf16 %v1938, %v1937
      %v1964 = vpack.c.bf16 %v1940, %v1939
      %v1965 = vpack.c.bf16 %v1942, %v1941
      %v1966 = vpack.c.bf16 %v1944, %v1943
      %v1967 = vpack.c.bf16 %v1946, %v1945
      %v1968 = vpack.c.bf16 %v1948, %v1947
      %v1969 = vpack.c.bf16 %v1950, %v1949
      %v1970 = vpack.c.bf16 %v1952, %v1951
      %v1971 = vpack.c.bf16 %v1954, %v1953
      %v1972 = vpack.c.bf16 %v1956, %v1955
      %1989 = vrot.lane.b32.xlu0 %v1957, 32
      %v1990 = vpop.permute.xlu0 %1989
      %1991 = vrot.lane.b32.xlu0 %v1958, 32
      %v1992 = vpop.permute.xlu0 %1991
      %1993 = vrot.lane.b32.xlu0 %v1959, 32
      %v1994 = vpop.permute.xlu0 %1993
      %1995 = vrot.lane.b32.xlu0 %v1960, 32
      %v1996 = vpop.permute.xlu0 %1995
      %1997 = vrot.lane.b32.xlu0 %v1961, 32
      %v1998 = vpop.permute.xlu0 %1997
      %1999 = vrot.lane.b32.xlu0 %v1962, 32
      %v2000 = vpop.permute.xlu0 %1999
      %2001 = vrot.lane.b32.xlu0 %v1963, 32
      %v2002 = vpop.permute.xlu0 %2001
      %2003 = vrot.lane.b32.xlu0 %v1964, 32
      %v2004 = vpop.permute.xlu0 %2003
      %2005 = vrot.lane.b32.xlu0 %v1965, 32
      %v2006 = vpop.permute.xlu0 %2005
      %2007 = vrot.lane.b32.xlu0 %v1966, 32
      %v2008 = vpop.permute.xlu0 %2007
      %2009 = vrot.lane.b32.xlu0 %v1967, 32
      %v2010 = vpop.permute.xlu0 %2009
      %2011 = vrot.lane.b32.xlu0 %v1968, 32
      %v2012 = vpop.permute.xlu0 %2011
      %2013 = vrot.lane.b32.xlu0 %v1969, 32
      %v2014 = vpop.permute.xlu0 %2013
      %2015 = vrot.lane.b32.xlu0 %v1970, 32
      %v2016 = vpop.permute.xlu0 %2015
      %2017 = vrot.lane.b32.xlu0 %v1971, 32
      %v2018 = vpop.permute.xlu0 %2017
      %2019 = vrot.lane.b32.xlu0 %v1972, 32
      %v2020 = vpop.permute.xlu0 %2019
      %vm2037 = vcmask 294144
      %2038 = vst.msk [vmem:[#allocation3] sm:$0xff] %vm2037, %v1990
      %2039 = vst.msk [vmem:[#allocation3 + $0x8] sm:$0xff] %vm2037, %v1992
      %2040 = vst.msk [vmem:[#allocation3 + $0x10] sm:$0xff] %vm2037, %v1994
      %2041 = vst.msk [vmem:[#allocation3 + $0x18] sm:$0xff] %vm2037, %v1996
      %2042 = vst.msk [vmem:[#allocation3 + $0x20] sm:$0xff] %vm2037, %v1998
      %2043 = vst.msk [vmem:[#allocation3 + $0x28] sm:$0xff] %vm2037, %v2000
      %2044 = vst.msk [vmem:[#allocation3 + $0x30] sm:$0xff] %vm2037, %v2002
      %2045 = vst.msk [vmem:[#allocation3 + $0x38] sm:$0xff] %vm2037, %v2004
      %2046 = vst.msk [vmem:[#allocation3 + $0x40] sm:$0xff] %vm2037, %v2006
      %2047 = vst.msk [vmem:[#allocation3 + $0x48] sm:$0xff] %vm2037, %v2008
      %2048 = vst.msk [vmem:[#allocation3 + $0x50] sm:$0xff] %vm2037, %v2010
      %2049 = vst.msk [vmem:[#allocation3 + $0x58] sm:$0xff] %vm2037, %v2012
      %2050 = vst.msk [vmem:[#allocation3 + $0x60] sm:$0xff] %vm2037, %v2014
      %2051 = vst.msk [vmem:[#allocation3 + $0x68] sm:$0xff] %vm2037, %v2016
      %2052 = vst.msk [vmem:[#allocation3 + $0x70] sm:$0xff] %vm2037, %v2018
      %2053 = vst.msk [vmem:[#allocation3 + $0x78] sm:$0xff] %vm2037, %v2020
      %v2054 = vld [vmem:[#allocation3] sm:$0xff]
      %v2055 = vld [vmem:[#allocation3 + $0x8] sm:$0xff]
      %v2056 = vld [vmem:[#allocation3 + $0x10] sm:$0xff]
      %v2057 = vld [vmem:[#allocation3 + $0x18] sm:$0xff]
      %v2058 = vld [vmem:[#allocation3 + $0x20] sm:$0xff]
      %v2059 = vld [vmem:[#allocation3 + $0x28] sm:$0xff]
      %v2060 = vld [vmem:[#allocation3 + $0x30] sm:$0xff]
      %v2061 = vld [vmem:[#allocation3 + $0x38] sm:$0xff]
      %v2062 = vld [vmem:[#allocation3 + $0x40] sm:$0xff]
      %v2063 = vld [vmem:[#allocation3 + $0x48] sm:$0xff]
      %v2064 = vld [vmem:[#allocation3 + $0x50] sm:$0xff]
      %v2065 = vld [vmem:[#allocation3 + $0x58] sm:$0xff]
      %v2066 = vld [vmem:[#allocation3 + $0x60] sm:$0xff]
      %v2067 = vld [vmem:[#allocation3 + $0x68] sm:$0xff]
      %v2068 = vld [vmem:[#allocation3 + $0x70] sm:$0xff]
      %v2069 = vld [vmem:[#allocation3 + $0x78] sm:$0xff]
      %v2070 = vld [vmem:[%s4] sm:$0xf]
      %v2071 = vld [vmem:[%s4 + $0x4] sm:$0xf]
      %v2072 = vld [vmem:[%s4 + $0x8] sm:$0xf]
      %v2073 = vld [vmem:[%s4 + $0xc] sm:$0xf]
      %v2074 = vld [vmem:[%s4 + $0x10] sm:$0x3]
      %v2080 = vunpack.c.l.b16 %v2070
      %v2081 = vunpack.c.l.b16 %v2071
      %v2082 = vunpack.c.l.b16 %v2072
      %v2083 = vunpack.c.l.b16 %v2073
      %v2084 = vunpack.c.l.b16 %v2074
      %v2085 = vpack.c.b16 %v2081, %v2080
      %v2086 = vpack.c.b16 %v2083, %v2082
      %v2087 = vpack.c.b16 %v2084, %v2084
      %vm2090 = vcmask 293888
      %v2092 = vsel %vm2090, %v2054, 0
      %v2095 = vsel %vm2090, %v2055, 0
      %v2098 = vsel %vm2090, %v2056, 0
      %v2101 = vsel %vm2090, %v2057, 0
      %v2104 = vsel %vm2090, %v2058, 0
      %v2107 = vsel %vm2090, %v2059, 0
      %v2110 = vsel %vm2090, %v2060, 0
      %v2113 = vsel %vm2090, %v2061, 0
      %v2116 = vsel %vm2090, %v2062, 0
      %v2119 = vsel %vm2090, %v2063, 0
      %v2122 = vsel %vm2090, %v2064, 0
      %v2125 = vsel %vm2090, %v2065, 0
      %v2128 = vsel %vm2090, %v2066, 0
      %v2131 = vsel %vm2090, %v2067, 0
      %v2134 = vsel %vm2090, %v2068, 0
      %v2137 = vsel %vm2090, %v2069, 0
      %v2140 = vsel %vm604, %v2087, 0
      %2142 = vmatprep.subr.bf16.mxu0 0
      %2143 = vmatpush1.bf16.msra.mxu0 %v2085
      %2144 = vmatprep.subr.bf16.mxu0 0
      %2145 = vmatpush1.bf16.msra.mxu0 %v2086
      %2146 = vmatprep.subr.bf16.mxu0 0
      %2147 = vmatpush1.bf16.msra.mxu0 %v2140
      %2148 = vmatprep.subr.bf16.mxu0 0
      %2149 = vmatpush1.bf16.msra.mxu0 0
      %2150 = vmatprep.subr.bf16.mxu0 0
      %2151 = vmatpush1.bf16.msra.mxu0 0
      %2152 = vmatprep.subr.bf16.mxu0 0
      %2153 = vmatpush1.bf16.msra.mxu0 0
      %2154 = vmatprep.subr.bf16.mxu0 0
      %2155 = vmatpush1.bf16.msra.mxu0 0
      %2156 = vmatprep.subr.bf16.mxu0 0
      %2157 = vmatpush1.bf16.msra.mxu0 0
      %2158 = vmatprep.subr.bf16.mxu0 0
      %2159 = vmatpush1.bf16.msra.mxu0 0
      %2160 = vmatprep.subr.bf16.mxu0 0
      %2161 = vmatpush1.bf16.msra.mxu0 0
      %2162 = vmatprep.subr.bf16.mxu0 0
      %2163 = vmatpush1.bf16.msra.mxu0 0
      %2164 = vmatprep.subr.bf16.mxu0 0
      %2165 = vmatpush1.bf16.msra.mxu0 0
      %2166 = vmatprep.subr.bf16.mxu0 0
      %2167 = vmatpush1.bf16.msra.mxu0 0
      %2168 = vmatprep.subr.bf16.mxu0 0
      %2169 = vmatpush1.bf16.msra.mxu0 0
      %2170 = vmatprep.subr.bf16.mxu0 0
      %2171 = vmatpush1.bf16.msra.mxu0 0
      %2172 = vmatprep.subr.bf16.mxu0 0
      %2173 = vmatpush1.bf16.msra.mxu0 0
      %2174 = vmatprep.mubr.bf16.mxu0 0
      %2175 = vmatmul.mubr.bf16.gmra.mrb[0].mxu0 %v2092
      %v2176 = vpop.f32.mrb[0].mxu0
      %v2177 = vadd.f32 0.0, %v2176
      %v2178 = vpop.f32.mrb[0].mxu0
      %v2179 = vpop.f32.mrb[0].mxu0
      %v2180 = vadd.f32 0.0, %v2179
      %v2181 = vpop.f32.mrb[0].mxu0
      %2182 = vmatprep.mubr.bf16.mxu0 0
      %2183 = vmatmul.mubr.bf16.gmra.mrb[0].mxu0 %v2095
      %v2184 = vpop.f32.mrb[0].mxu0
      %v2185 = vadd.f32 0.0, %v2184
      %v2186 = vpop.f32.mrb[0].mxu0
      %v2187 = vpop.f32.mrb[0].mxu0
      %v2188 = vadd.f32 0.0, %v2187
      %v2189 = vpop.f32.mrb[0].mxu0
      %2190 = vmatprep.mubr.bf16.mxu0 0
      %2191 = vmatmul.mubr.bf16.gmra.mrb[0].mxu0 %v2098
      %v2192 = vpop.f32.mrb[0].mxu0
      %v2193 = vadd.f32 0.0, %v2192
      %v2194 = vpop.f32.mrb[0].mxu0
      %v2195 = vpop.f32.mrb[0].mxu0
      %v2196 = vadd.f32 0.0, %v2195
      %v2197 = vpop.f32.mrb[0].mxu0
      %2198 = vmatprep.mubr.bf16.mxu0 0
      %2199 = vmatmul.mubr.bf16.gmra.mrb[0].mxu0 %v2101
      %v2200 = vpop.f32.mrb[0].mxu0
      %v2201 = vadd.f32 0.0, %v2200
      %v2202 = vpop.f32.mrb[0].mxu0
      %v2203 = vpop.f32.mrb[0].mxu0
      %v2204 = vadd.f32 0.0, %v2203
      %v2205 = vpop.f32.mrb[0].mxu0
      %2206 = vmatprep.mubr.bf16.mxu0 0
      %2207 = vmatmul.mubr.bf16.gmra.mrb[0].mxu0 %v2104
      %v2208 = vpop.f32.mrb[0].mxu0
      %v2209 = vadd.f32 0.0, %v2208
      %v2210 = vpop.f32.mrb[0].mxu0
      %v2211 = vpop.f32.mrb[0].mxu0
      %v2212 = vadd.f32 0.0, %v2211
      %v2213 = vpop.f32.mrb[0].mxu0
      %2214 = vmatprep.mubr.bf16.mxu0 0
      %2215 = vmatmul.mubr.bf16.gmra.mrb[0].mxu0 %v2107
      %v2216 = vpop.f32.mrb[0].mxu0
      %v2217 = vadd.f32 0.0, %v2216
      %v2218 = vpop.f32.mrb[0].mxu0
      %v2219 = vpop.f32.mrb[0].mxu0
      %v2220 = vadd.f32 0.0, %v2219
      %v2221 = vpop.f32.mrb[0].mxu0
      %2222 = vmatprep.mubr.bf16.mxu0 0
      %2223 = vmatmul.mubr.bf16.gmra.mrb[0].mxu0 %v2110
      %v2224 = vpop.f32.mrb[0].mxu0
      %v2225 = vadd.f32 0.0, %v2224
      %v2226 = vpop.f32.mrb[0].mxu0
      %v2227 = vpop.f32.mrb[0].mxu0
      %v2228 = vadd.f32 0.0, %v2227
      %v2229 = vpop.f32.mrb[0].mxu0
      %2230 = vmatprep.mubr.bf16.mxu0 0
      %2231 = vmatmul.mubr.bf16.gmra.mrb[0].mxu0 %v2113
      %v2232 = vpop.f32.mrb[0].mxu0
      %v2233 = vadd.f32 0.0, %v2232
      %v2234 = vpop.f32.mrb[0].mxu0
      %v2235 = vpop.f32.mrb[0].mxu0
      %v2236 = vadd.f32 0.0, %v2235
      %v2237 = vpop.f32.mrb[0].mxu0
      %2238 = vmatprep.mubr.bf16.mxu0 0
      %2239 = vmatmul.mubr.bf16.gmra.mrb[0].mxu0 %v2116
      %v2240 = vpop.f32.mrb[0].mxu0
      %v2241 = vadd.f32 0.0, %v2240
      %v2242 = vpop.f32.mrb[0].mxu0
      %v2243 = vpop.f32.mrb[0].mxu0
      %v2244 = vadd.f32 0.0, %v2243
      %v2245 = vpop.f32.mrb[0].mxu0
      %2246 = vmatprep.mubr.bf16.mxu0 0
      %2247 = vmatmul.mubr.bf16.gmra.mrb[0].mxu0 %v2119
      %v2248 = vpop.f32.mrb[0].mxu0
      %v2249 = vadd.f32 0.0, %v2248
      %v2250 = vpop.f32.mrb[0].mxu0
      %v2251 = vpop.f32.mrb[0].mxu0
      %v2252 = vadd.f32 0.0, %v2251
      %v2253 = vpop.f32.mrb[0].mxu0
      %2254 = vmatprep.mubr.bf16.mxu0 0
      %2255 = vmatmul.mubr.bf16.gmra.mrb[0].mxu0 %v2122
      %v2256 = vpop.f32.mrb[0].mxu0
      %v2257 = vadd.f32 0.0, %v2256
      %v2258 = vpop.f32.mrb[0].mxu0
      %v2259 = vpop.f32.mrb[0].mxu0
      %v2260 = vadd.f32 0.0, %v2259
      %v2261 = vpop.f32.mrb[0].mxu0
      %2262 = vmatprep.mubr.bf16.mxu0 0
      %2263 = vmatmul.mubr.bf16.gmra.mrb[0].mxu0 %v2125
      %v2264 = vpop.f32.mrb[0].mxu0
      %v2265 = vadd.f32 0.0, %v2264
      %v2266 = vpop.f32.mrb[0].mxu0
      %v2267 = vpop.f32.mrb[0].mxu0
      %v2268 = vadd.f32 0.0, %v2267
      %v2269 = vpop.f32.mrb[0].mxu0
      %2270 = vmatprep.mubr.bf16.mxu0 0
      %2271 = vmatmul.mubr.bf16.gmra.mrb[0].mxu0 %v2128
      %v2272 = vpop.f32.mrb[0].mxu0
      %v2273 = vadd.f32 0.0, %v2272
      %v2274 = vpop.f32.mrb[0].mxu0
      %v2275 = vpop.f32.mrb[0].mxu0
      %v2276 = vadd.f32 0.0, %v2275
      %v2277 = vpop.f32.mrb[0].mxu0
      %2278 = vmatprep.mubr.bf16.mxu0 0
      %2279 = vmatmul.mubr.bf16.gmra.mrb[0].mxu0 %v2131
      %v2280 = vpop.f32.mrb[0].mxu0
      %v2281 = vadd.f32 0.0, %v2280
      %v2282 = vpop.f32.mrb[0].mxu0
      %v2283 = vpop.f32.mrb[0].mxu0
      %v2284 = vadd.f32 0.0, %v2283
      %v2285 = vpop.f32.mrb[0].mxu0
      %2286 = vmatprep.mubr.bf16.mxu0 0
      %2287 = vmatmul.mubr.bf16.gmra.mrb[0].mxu0 %v2134
      %v2288 = vpop.f32.mrb[0].mxu0
      %v2289 = vadd.f32 0.0, %v2288
      %v2290 = vpop.f32.mrb[0].mxu0
      %v2291 = vpop.f32.mrb[0].mxu0
      %v2292 = vadd.f32 0.0, %v2291
      %v2293 = vpop.f32.mrb[0].mxu0
      %2294 = vmatprep.mubr.bf16.mxu0 0
      %2295 = vmatmul.mubr.bf16.gmra.mrb[0].mxu0 %v2137
      %v2296 = vpop.f32.mrb[0].mxu0
      %v2297 = vadd.f32 0.0, %v2296
      %v2298 = vpop.f32.mrb[0].mxu0
      %v2299 = vpop.f32.mrb[0].mxu0
      %v2300 = vadd.f32 0.0, %v2299
      %v2301 = vpop.f32.mrb[0].mxu0
      %2302 = vdwg.mxu0
      %v2303 = vld [vmem:[%s5] sm:$0x1]
      %v2305 = vlaneseq
      %v2306 = vshrl.u32 %v2305, 7
      %v2307 = vsub.s32 0, %v2306
      %v2308 = vrot.slane %v2303, %v2307
      %v2310 = vmul.f32 %v2177, %v2308
      %v2311 = vmul.f32 %v2180, %v2308
      %v2312 = vmul.f32 %v2185, %v2308
      %v2313 = vmul.f32 %v2188, %v2308
      %v2314 = vmul.f32 %v2193, %v2308
      %v2315 = vmul.f32 %v2196, %v2308
      %v2316 = vmul.f32 %v2201, %v2308
      %v2317 = vmul.f32 %v2204, %v2308
      %v2318 = vmul.f32 %v2209, %v2308
      %v2319 = vmul.f32 %v2212, %v2308
      %v2320 = vmul.f32 %v2217, %v2308
      %v2321 = vmul.f32 %v2220, %v2308
      %v2322 = vmul.f32 %v2225, %v2308
      %v2323 = vmul.f32 %v2228, %v2308
      %v2324 = vmul.f32 %v2233, %v2308
      %v2325 = vmul.f32 %v2236, %v2308
      %v2326 = vmul.f32 %v2241, %v2308
      %v2327 = vmul.f32 %v2244, %v2308
      %v2328 = vmul.f32 %v2249, %v2308
      %v2329 = vmul.f32 %v2252, %v2308
      %v2330 = vmul.f32 %v2257, %v2308
      %v2331 = vmul.f32 %v2260, %v2308
      %v2332 = vmul.f32 %v2265, %v2308
      %v2333 = vmul.f32 %v2268, %v2308
      %v2334 = vmul.f32 %v2273, %v2308
      %v2335 = vmul.f32 %v2276, %v2308
      %v2336 = vmul.f32 %v2281, %v2308
      %v2337 = vmul.f32 %v2284, %v2308
      %v2338 = vmul.f32 %v2289, %v2308
      %v2339 = vmul.f32 %v2292, %v2308
      %v2340 = vmul.f32 %v2297, %v2308
      %v2341 = vmul.f32 %v2300, %v2308
      %v2342 = vld [vmem:[%s6] sm:$0x1]
      %v2344 = vlaneseq
      %v2345 = vshrl.u32 %v2344, 7
      %v2346 = vsub.s32 0, %v2345
      %v2347 = vrot.slane %v2342, %v2346
      %v2349 = vadd.f32 %v2310, %v2347
      %v2350 = vadd.f32 %v2311, %v2347
      %v2351 = vadd.f32 %v2312, %v2347
      %v2352 = vadd.f32 %v2313, %v2347
      %v2353 = vadd.f32 %v2314, %v2347
      %v2354 = vadd.f32 %v2315, %v2347
      %v2355 = vadd.f32 %v2316, %v2347
      %v2356 = vadd.f32 %v2317, %v2347
      %v2357 = vadd.f32 %v2318, %v2347
      %v2358 = vadd.f32 %v2319, %v2347
      %v2359 = vadd.f32 %v2320, %v2347
      %v2360 = vadd.f32 %v2321, %v2347
      %v2361 = vadd.f32 %v2322, %v2347
      %v2362 = vadd.f32 %v2323, %v2347
      %v2363 = vadd.f32 %v2324, %v2347
      %v2364 = vadd.f32 %v2325, %v2347
      %v2365 = vadd.f32 %v2326, %v2347
      %v2366 = vadd.f32 %v2327, %v2347
      %v2367 = vadd.f32 %v2328, %v2347
      %v2368 = vadd.f32 %v2329, %v2347
      %v2369 = vadd.f32 %v2330, %v2347
      %v2370 = vadd.f32 %v2331, %v2347
      %v2371 = vadd.f32 %v2332, %v2347
      %v2372 = vadd.f32 %v2333, %v2347
      %v2373 = vadd.f32 %v2334, %v2347
      %v2374 = vadd.f32 %v2335, %v2347
      %v2375 = vadd.f32 %v2336, %v2347
      %v2376 = vadd.f32 %v2337, %v2347
      %v2377 = vadd.f32 %v2338, %v2347
      %v2378 = vadd.f32 %v2339, %v2347
      %v2379 = vadd.f32 %v2340, %v2347
      %v2380 = vadd.f32 %v2341, %v2347
      %v2381 = vmax.f32 %v2349, 0.0
      %v2382 = vmax.f32 %v2350, 0.0
      %v2383 = vmax.f32 %v2351, 0.0
      %v2384 = vmax.f32 %v2352, 0.0
      %v2385 = vmax.f32 %v2353, 0.0
      %v2386 = vmax.f32 %v2354, 0.0
      %v2387 = vmax.f32 %v2355, 0.0
      %v2388 = vmax.f32 %v2356, 0.0
      %v2389 = vmax.f32 %v2357, 0.0
      %v2390 = vmax.f32 %v2358, 0.0
      %v2391 = vmax.f32 %v2359, 0.0
      %v2392 = vmax.f32 %v2360, 0.0
      %v2393 = vmax.f32 %v2361, 0.0
      %v2394 = vmax.f32 %v2362, 0.0
      %v2395 = vmax.f32 %v2363, 0.0
      %v2396 = vmax.f32 %v2364, 0.0
      %v2397 = vmax.f32 %v2365, 0.0
      %v2398 = vmax.f32 %v2366, 0.0
      %v2399 = vmax.f32 %v2367, 0.0
      %v2400 = vmax.f32 %v2368, 0.0
      %v2401 = vmax.f32 %v2369, 0.0
      %v2402 = vmax.f32 %v2370, 0.0
      %v2403 = vmax.f32 %v2371, 0.0
      %v2404 = vmax.f32 %v2372, 0.0
      %v2405 = vmax.f32 %v2373, 0.0
      %v2406 = vmax.f32 %v2374, 0.0
      %v2407 = vmax.f32 %v2375, 0.0
      %v2408 = vmax.f32 %v2376, 0.0
      %v2409 = vmax.f32 %v2377, 0.0
      %v2410 = vmax.f32 %v2378, 0.0
      %v2411 = vmax.f32 %v2379, 0.0
      %v2412 = vmax.f32 %v2380, 0.0
      %v2413 = vpack.c.bf16 %v2382, %v2381
      %v2414 = vpack.c.bf16 %v2384, %v2383
      %v2415 = vpack.c.bf16 %v2386, %v2385
      %v2416 = vpack.c.bf16 %v2388, %v2387
      %v2417 = vpack.c.bf16 %v2390, %v2389
      %v2418 = vpack.c.bf16 %v2392, %v2391
      %v2419 = vpack.c.bf16 %v2394, %v2393
      %v2420 = vpack.c.bf16 %v2396, %v2395
      %v2421 = vpack.c.bf16 %v2398, %v2397
      %v2422 = vpack.c.bf16 %v2400, %v2399
      %v2423 = vpack.c.bf16 %v2402, %v2401
      %v2424 = vpack.c.bf16 %v2404, %v2403
      %v2425 = vpack.c.bf16 %v2406, %v2405
      %v2426 = vpack.c.bf16 %v2408, %v2407
      %v2427 = vpack.c.bf16 %v2410, %v2409
      %v2428 = vpack.c.bf16 %v2412, %v2411
      %v2429 = vld [vmem:[%s7] sm:$0x3]
      %v2431 = vsel %vm555, %v2413, 0
      %v2434 = vsel %vm555, %v2414, 0
      %v2437 = vsel %vm555, %v2415, 0
      %v2440 = vsel %vm555, %v2416, 0
      %v2443 = vsel %vm555, %v2417, 0
      %v2446 = vsel %vm555, %v2418, 0
      %v2449 = vsel %vm555, %v2419, 0
      %v2452 = vsel %vm555, %v2420, 0
      %v2455 = vsel %vm555, %v2421, 0
      %v2458 = vsel %vm555, %v2422, 0
      %v2461 = vsel %vm555, %v2423, 0
      %v2464 = vsel %vm555, %v2424, 0
      %v2467 = vsel %vm555, %v2425, 0
      %v2470 = vsel %vm555, %v2426, 0
      %v2473 = vsel %vm555, %v2427, 0
      %v2476 = vsel %vm555, %v2428, 0
      %v2479 = vsel %vm604, %v2429, 0
      %2481 = vmatprep.subr.bf16.mxu0 0
      %2482 = vmatpush1.bf16.msra.mxu0 %v2479
      %2483 = vmatprep.subr.bf16.mxu0 0
      %2484 = vmatpush1.bf16.msra.mxu0 0
      %2485 = vmatprep.subr.bf16.mxu0 0
      %2486 = vmatpush1.bf16.msra.mxu0 0
      %2487 = vmatprep.subr.bf16.mxu0 0
      %2488 = vmatpush1.bf16.msra.mxu0 0
      %2489 = vmatprep.subr.bf16.mxu0 0
      %2490 = vmatpush1.bf16.msra.mxu0 0
      %2491 = vmatprep.subr.bf16.mxu0 0
      %2492 = vmatpush1.bf16.msra.mxu0 0
      %2493 = vmatprep.subr.bf16.mxu0 0
      %2494 = vmatpush1.bf16.msra.mxu0 0
      %2495 = vmatprep.subr.bf16.mxu0 0
      %2496 = vmatpush1.bf16.msra.mxu0 0
      %2497 = vmatprep.subr.bf16.mxu0 0
      %2498 = vmatpush1.bf16.msra.mxu0 0
      %2499 = vmatprep.subr.bf16.mxu0 0
      %2500 = vmatpush1.bf16.msra.mxu0 0
      %2501 = vmatprep.subr.bf16.mxu0 0
      %2502 = vmatpush1.bf16.msra.mxu0 0
      %2503 = vmatprep.subr.bf16.mxu0 0
      %2504 = vmatpush1.bf16.msra.mxu0 0
      %2505 = vmatprep.subr.bf16.mxu0 0
      %2506 = vmatpush1.bf16.msra.mxu0 0
      %2507 = vmatprep.subr.bf16.mxu0 0
      %2508 = vmatpush1.bf16.msra.mxu0 0
      %2509 = vmatprep.subr.bf16.mxu0 0
      %2510 = vmatpush1.bf16.msra.mxu0 0
      %2511 = vmatprep.subr.bf16.mxu0 0
      %2512 = vmatpush1.bf16.msra.mxu0 0
      %2513 = vmatprep.mubr.bf16.mxu0 0
      %2514 = vmatmul.mubr.bf16.gmra.mrb[0].mxu0 %v2431
      %v2515 = vpop.f32.mrb[0].mxu0
      %v2516 = vadd.f32 0.0, %v2515
      %v2517 = vpop.f32.mrb[0].mxu0
      %v2518 = vpop.f32.mrb[0].mxu0
      %v2519 = vadd.f32 0.0, %v2518
      %v2520 = vpop.f32.mrb[0].mxu0
      %2521 = vmatprep.mubr.bf16.mxu0 0
      %2522 = vmatmul.mubr.bf16.gmra.mrb[0].mxu0 %v2434
      %v2523 = vpop.f32.mrb[0].mxu0
      %v2524 = vadd.f32 0.0, %v2523
      %v2525 = vpop.f32.mrb[0].mxu0
      %v2526 = vpop.f32.mrb[0].mxu0
      %v2527 = vadd.f32 0.0, %v2526
      %v2528 = vpop.f32.mrb[0].mxu0
      %2529 = vmatprep.mubr.bf16.mxu0 0
      %2530 = vmatmul.mubr.bf16.gmra.mrb[0].mxu0 %v2437
      %v2531 = vpop.f32.mrb[0].mxu0
      %v2532 = vadd.f32 0.0, %v2531
      %v2533 = vpop.f32.mrb[0].mxu0
      %v2534 = vpop.f32.mrb[0].mxu0
      %v2535 = vadd.f32 0.0, %v2534
      %v2536 = vpop.f32.mrb[0].mxu0
      %2537 = vmatprep.mubr.bf16.mxu0 0
      %2538 = vmatmul.mubr.bf16.gmra.mrb[0].mxu0 %v2440
      %v2539 = vpop.f32.mrb[0].mxu0
      %v2540 = vadd.f32 0.0, %v2539
      %v2541 = vpop.f32.mrb[0].mxu0
      %v2542 = vpop.f32.mrb[0].mxu0
      %v2543 = vadd.f32 0.0, %v2542
      %v2544 = vpop.f32.mrb[0].mxu0
      %2545 = vmatprep.mubr.bf16.mxu0 0
      %2546 = vmatmul.mubr.bf16.gmra.mrb[0].mxu0 %v2443
      %v2547 = vpop.f32.mrb[0].mxu0
      %v2548 = vadd.f32 0.0, %v2547
      %v2549 = vpop.f32.mrb[0].mxu0
      %v2550 = vpop.f32.mrb[0].mxu0
      %v2551 = vadd.f32 0.0, %v2550
      %v2552 = vpop.f32.mrb[0].mxu0
      %2553 = vmatprep.mubr.bf16.mxu0 0
      %2554 = vmatmul.mubr.bf16.gmra.mrb[0].mxu0 %v2446
      %v2555 = vpop.f32.mrb[0].mxu0
      %v2556 = vadd.f32 0.0, %v2555
      %v2557 = vpop.f32.mrb[0].mxu0
      %v2558 = vpop.f32.mrb[0].mxu0
      %v2559 = vadd.f32 0.0, %v2558
      %v2560 = vpop.f32.mrb[0].mxu0
      %2561 = vmatprep.mubr.bf16.mxu0 0
      %2562 = vmatmul.mubr.bf16.gmra.mrb[0].mxu0 %v2449
      %v2563 = vpop.f32.mrb[0].mxu0
      %v2564 = vadd.f32 0.0, %v2563
      %v2565 = vpop.f32.mrb[0].mxu0
      %v2566 = vpop.f32.mrb[0].mxu0
      %v2567 = vadd.f32 0.0, %v2566
      %v2568 = vpop.f32.mrb[0].mxu0
      %2569 = vmatprep.mubr.bf16.mxu0 0
      %2570 = vmatmul.mubr.bf16.gmra.mrb[0].mxu0 %v2452
      %v2571 = vpop.f32.mrb[0].mxu0
      %v2572 = vadd.f32 0.0, %v2571
      %v2573 = vpop.f32.mrb[0].mxu0
      %v2574 = vpop.f32.mrb[0].mxu0
      %v2575 = vadd.f32 0.0, %v2574
      %v2576 = vpop.f32.mrb[0].mxu0
      %2577 = vmatprep.mubr.bf16.mxu0 0
      %2578 = vmatmul.mubr.bf16.gmra.mrb[0].mxu0 %v2455
      %v2579 = vpop.f32.mrb[0].mxu0
      %v2580 = vadd.f32 0.0, %v2579
      %v2581 = vpop.f32.mrb[0].mxu0
      %v2582 = vpop.f32.mrb[0].mxu0
      %v2583 = vadd.f32 0.0, %v2582
      %v2584 = vpop.f32.mrb[0].mxu0
      %2585 = vmatprep.mubr.bf16.mxu0 0
      %2586 = vmatmul.mubr.bf16.gmra.mrb[0].mxu0 %v2458
      %v2587 = vpop.f32.mrb[0].mxu0
      %v2588 = vadd.f32 0.0, %v2587
      %v2589 = vpop.f32.mrb[0].mxu0
      %v2590 = vpop.f32.mrb[0].mxu0
      %v2591 = vadd.f32 0.0, %v2590
      %v2592 = vpop.f32.mrb[0].mxu0
      %2593 = vmatprep.mubr.bf16.mxu0 0
      %2594 = vmatmul.mubr.bf16.gmra.mrb[0].mxu0 %v2461
      %v2595 = vpop.f32.mrb[0].mxu0
      %v2596 = vadd.f32 0.0, %v2595
      %v2597 = vpop.f32.mrb[0].mxu0
      %v2598 = vpop.f32.mrb[0].mxu0
      %v2599 = vadd.f32 0.0, %v2598
      %v2600 = vpop.f32.mrb[0].mxu0
      %2601 = vmatprep.mubr.bf16.mxu0 0
      %2602 = vmatmul.mubr.bf16.gmra.mrb[0].mxu0 %v2464
      %v2603 = vpop.f32.mrb[0].mxu0
      %v2604 = vadd.f32 0.0, %v2603
      %v2605 = vpop.f32.mrb[0].mxu0
      %v2606 = vpop.f32.mrb[0].mxu0
      %v2607 = vadd.f32 0.0, %v2606
      %v2608 = vpop.f32.mrb[0].mxu0
      %2609 = vmatprep.mubr.bf16.mxu0 0
      %2610 = vmatmul.mubr.bf16.gmra.mrb[0].mxu0 %v2467
      %v2611 = vpop.f32.mrb[0].mxu0
      %v2612 = vadd.f32 0.0, %v2611
      %v2613 = vpop.f32.mrb[0].mxu0
      %v2614 = vpop.f32.mrb[0].mxu0
      %v2615 = vadd.f32 0.0, %v2614
      %v2616 = vpop.f32.mrb[0].mxu0
      %2617 = vmatprep.mubr.bf16.mxu0 0
      %2618 = vmatmul.mubr.bf16.gmra.mrb[0].mxu0 %v2470
      %v2619 = vpop.f32.mrb[0].mxu0
      %v2620 = vadd.f32 0.0, %v2619
      %v2621 = vpop.f32.mrb[0].mxu0
      %v2622 = vpop.f32.mrb[0].mxu0
      %v2623 = vadd.f32 0.0, %v2622
      %v2624 = vpop.f32.mrb[0].mxu0
      %2625 = vmatprep.mubr.bf16.mxu0 0
      %2626 = vmatmul.mubr.bf16.gmra.mrb[0].mxu0 %v2473
      %v2627 = vpop.f32.mrb[0].mxu0
      %v2628 = vadd.f32 0.0, %v2627
      %v2629 = vpop.f32.mrb[0].mxu0
      %v2630 = vpop.f32.mrb[0].mxu0
      %v2631 = vadd.f32 0.0, %v2630
      %v2632 = vpop.f32.mrb[0].mxu0
      %2633 = vmatprep.mubr.bf16.mxu0 0
      %2634 = vmatmul.mubr.bf16.gmra.mrb[0].mxu0 %v2476
      %v2635 = vpop.f32.mrb[0].mxu0
      %v2636 = vadd.f32 0.0, %v2635
      %v2637 = vpop.f32.mrb[0].mxu0
      %v2638 = vpop.f32.mrb[0].mxu0
      %v2639 = vadd.f32 0.0, %v2638
      %v2640 = vpop.f32.mrb[0].mxu0
      %2641 = vdwg.mxu0
      %v2642 = vld [vmem:[%s8] sm:$0x1]
      %v2644 = vlaneseq
      %v2645 = vshrl.u32 %v2644, 7
      %v2646 = vsub.s32 0, %v2645
      %v2647 = vrot.slane %v2642, %v2646
      %v2649 = vmul.f32 %v2516, %v2647
      %v2650 = vmul.f32 %v2519, %v2647
      %v2651 = vmul.f32 %v2524, %v2647
      %v2652 = vmul.f32 %v2527, %v2647
      %v2653 = vmul.f32 %v2532, %v2647
      %v2654 = vmul.f32 %v2535, %v2647
      %v2655 = vmul.f32 %v2540, %v2647
      %v2656 = vmul.f32 %v2543, %v2647
      %v2657 = vmul.f32 %v2548, %v2647
      %v2658 = vmul.f32 %v2551, %v2647
      %v2659 = vmul.f32 %v2556, %v2647
      %v2660 = vmul.f32 %v2559, %v2647
      %v2661 = vmul.f32 %v2564, %v2647
      %v2662 = vmul.f32 %v2567, %v2647
      %v2663 = vmul.f32 %v2572, %v2647
      %v2664 = vmul.f32 %v2575, %v2647
      %v2665 = vmul.f32 %v2580, %v2647
      %v2666 = vmul.f32 %v2583, %v2647
      %v2667 = vmul.f32 %v2588, %v2647
      %v2668 = vmul.f32 %v2591, %v2647
      %v2669 = vmul.f32 %v2596, %v2647
      %v2670 = vmul.f32 %v2599, %v2647
      %v2671 = vmul.f32 %v2604, %v2647
      %v2672 = vmul.f32 %v2607, %v2647
      %v2673 = vmul.f32 %v2612, %v2647
      %v2674 = vmul.f32 %v2615, %v2647
      %v2675 = vmul.f32 %v2620, %v2647
      %v2676 = vmul.f32 %v2623, %v2647
      %v2677 = vmul.f32 %v2628, %v2647
      %v2678 = vmul.f32 %v2631, %v2647
      %v2679 = vmul.f32 %v2636, %v2647
      %v2680 = vmul.f32 %v2639, %v2647
      %v2681 = vld [vmem:[%s9] sm:$0x1]
      %v2683 = vlaneseq
      %v2684 = vshrl.u32 %v2683, 7
      %v2685 = vsub.s32 0, %v2684
      %v2686 = vrot.slane %v2681, %v2685
      %v2688 = vadd.f32 %v2649, %v2686
      %v2689 = vadd.f32 %v2650, %v2686
      %v2690 = vadd.f32 %v2651, %v2686
      %v2691 = vadd.f32 %v2652, %v2686
      %v2692 = vadd.f32 %v2653, %v2686
      %v2693 = vadd.f32 %v2654, %v2686
      %v2694 = vadd.f32 %v2655, %v2686
      %v2695 = vadd.f32 %v2656, %v2686
      %v2696 = vadd.f32 %v2657, %v2686
      %v2697 = vadd.f32 %v2658, %v2686
      %v2698 = vadd.f32 %v2659, %v2686
      %v2699 = vadd.f32 %v2660, %v2686
      %v2700 = vadd.f32 %v2661, %v2686
      %v2701 = vadd.f32 %v2662, %v2686
      %v2702 = vadd.f32 %v2663, %v2686
      %v2703 = vadd.f32 %v2664, %v2686
      %v2704 = vadd.f32 %v2665, %v2686
      %v2705 = vadd.f32 %v2666, %v2686
      %v2706 = vadd.f32 %v2667, %v2686
      %v2707 = vadd.f32 %v2668, %v2686
      %v2708 = vadd.f32 %v2669, %v2686
      %v2709 = vadd.f32 %v2670, %v2686
      %v2710 = vadd.f32 %v2671, %v2686
      %v2711 = vadd.f32 %v2672, %v2686
      %v2712 = vadd.f32 %v2673, %v2686
      %v2713 = vadd.f32 %v2674, %v2686
      %v2714 = vadd.f32 %v2675, %v2686
      %v2715 = vadd.f32 %v2676, %v2686
      %v2716 = vadd.f32 %v2677, %v2686
      %v2717 = vadd.f32 %v2678, %v2686
      %v2718 = vadd.f32 %v2679, %v2686
      %v2719 = vadd.f32 %v2680, %v2686
      %v2720 = vld [vmem:[%s10] sm:$0x3]
      %v2722 = vsel %vm604, %v2720, 0
      %2724 = vmatprep.subr.bf16.mxu0 0
      %2725 = vmatpush1.bf16.msra.mxu0 %v2722
      %2726 = vmatprep.subr.bf16.mxu0 0
      %2727 = vmatpush1.bf16.msra.mxu0 0
      %2728 = vmatprep.subr.bf16.mxu0 0
      %2729 = vmatpush1.bf16.msra.mxu0 0
      %2730 = vmatprep.subr.bf16.mxu0 0
      %2731 = vmatpush1.bf16.msra.mxu0 0
      %2732 = vmatprep.subr.bf16.mxu0 0
      %2733 = vmatpush1.bf16.msra.mxu0 0
      %2734 = vmatprep.subr.bf16.mxu0 0
      %2735 = vmatpush1.bf16.msra.mxu0 0
      %2736 = vmatprep.subr.bf16.mxu0 0
      %2737 = vmatpush1.bf16.msra.mxu0 0
      %2738 = vmatprep.subr.bf16.mxu0 0
      %2739 = vmatpush1.bf16.msra.mxu0 0
      %2740 = vmatprep.subr.bf16.mxu0 0
      %2741 = vmatpush1.bf16.msra.mxu0 0
      %2742 = vmatprep.subr.bf16.mxu0 0
      %2743 = vmatpush1.bf16.msra.mxu0 0
      %2744 = vmatprep.subr.bf16.mxu0 0
      %2745 = vmatpush1.bf16.msra.mxu0 0
      %2746 = vmatprep.subr.bf16.mxu0 0
      %2747 = vmatpush1.bf16.msra.mxu0 0
      %2748 = vmatprep.subr.bf16.mxu0 0
      %2749 = vmatpush1.bf16.msra.mxu0 0
      %2750 = vmatprep.subr.bf16.mxu0 0
      %2751 = vmatpush1.bf16.msra.mxu0 0
      %2752 = vmatprep.subr.bf16.mxu0 0
      %2753 = vmatpush1.bf16.msra.mxu0 0
      %2754 = vmatprep.subr.bf16.mxu0 0
      %2755 = vmatpush1.bf16.msra.mxu0 0
      %2756 = vmatprep.mubr.bf16.mxu0 0
      %2757 = vmatmul.mubr.bf16.gmra.mrb[0].mxu0 %v557
      %v2758 = vpop.f32.mrb[0].mxu0
      %v2759 = vadd.f32 0.0, %v2758
      %v2760 = vpop.f32.mrb[0].mxu0
      %v2761 = vpop.f32.mrb[0].mxu0
      %v2762 = vadd.f32 0.0, %v2761
      %v2763 = vpop.f32.mrb[0].mxu0
      %2764 = vmatprep.mubr.bf16.mxu0 0
      %2765 = vmatmul.mubr.bf16.gmra.mrb[0].mxu0 %v560
      %v2766 = vpop.f32.mrb[0].mxu0
      %v2767 = vadd.f32 0.0, %v2766
      %v2768 = vpop.f32.mrb[0].mxu0
      %v2769 = vpop.f32.mrb[0].mxu0
      %v2770 = vadd.f32 0.0, %v2769
      %v2771 = vpop.f32.mrb[0].mxu0
      %2772 = vmatprep.mubr.bf16.mxu0 0
      %2773 = vmatmul.mubr.bf16.gmra.mrb[0].mxu0 %v563
      %v2774 = vpop.f32.mrb[0].mxu0
      %v2775 = vadd.f32 0.0, %v2774
      %v2776 = vpop.f32.mrb[0].mxu0
      %v2777 = vpop.f32.mrb[0].mxu0
      %v2778 = vadd.f32 0.0, %v2777
      %v2779 = vpop.f32.mrb[0].mxu0
      %2780 = vmatprep.mubr.bf16.mxu0 0
      %2781 = vmatmul.mubr.bf16.gmra.mrb[0].mxu0 %v566
      %v2782 = vpop.f32.mrb[0].mxu0
      %v2783 = vadd.f32 0.0, %v2782
      %v2784 = vpop.f32.mrb[0].mxu0
      %v2785 = vpop.f32.mrb[0].mxu0
      %v2786 = vadd.f32 0.0, %v2785
      %v2787 = vpop.f32.mrb[0].mxu0
      %2788 = vmatprep.mubr.bf16.mxu0 0
      %2789 = vmatmul.mubr.bf16.gmra.mrb[0].mxu0 %v569
      %v2790 = vpop.f32.mrb[0].mxu0
      %v2791 = vadd.f32 0.0, %v2790
      %v2792 = vpop.f32.mrb[0].mxu0
      %v2793 = vpop.f32.mrb[0].mxu0
      %v2794 = vadd.f32 0.0, %v2793
      %v2795 = vpop.f32.mrb[0].mxu0
      %2796 = vmatprep.mubr.bf16.mxu0 0
      %2797 = vmatmul.mubr.bf16.gmra.mrb[0].mxu0 %v572
      %v2798 = vpop.f32.mrb[0].mxu0
      %v2799 = vadd.f32 0.0, %v2798
      %v2800 = vpop.f32.mrb[0].mxu0
      %v2801 = vpop.f32.mrb[0].mxu0
      %v2802 = vadd.f32 0.0, %v2801
      %v2803 = vpop.f32.mrb[0].mxu0
      %2804 = vmatprep.mubr.bf16.mxu0 0
      %2805 = vmatmul.mubr.bf16.gmra.mrb[0].mxu0 %v575
      %v2806 = vpop.f32.mrb[0].mxu0
      %v2807 = vadd.f32 0.0, %v2806
      %v2808 = vpop.f32.mrb[0].mxu0
      %v2809 = vpop.f32.mrb[0].mxu0
      %v2810 = vadd.f32 0.0, %v2809
      %v2811 = vpop.f32.mrb[0].mxu0
      %2812 = vmatprep.mubr.bf16.mxu0 0
      %2813 = vmatmul.mubr.bf16.gmra.mrb[0].mxu0 %v578
      %v2814 = vpop.f32.mrb[0].mxu0
      %v2815 = vadd.f32 0.0, %v2814
      %v2816 = vpop.f32.mrb[0].mxu0
      %v2817 = vpop.f32.mrb[0].mxu0
      %v2818 = vadd.f32 0.0, %v2817
      %v2819 = vpop.f32.mrb[0].mxu0
      %2820 = vmatprep.mubr.bf16.mxu0 0
      %2821 = vmatmul.mubr.bf16.gmra.mrb[0].mxu0 %v581
      %v2822 = vpop.f32.mrb[0].mxu0
      %v2823 = vadd.f32 0.0, %v2822
      %v2824 = vpop.f32.mrb[0].mxu0
      %v2825 = vpop.f32.mrb[0].mxu0
      %v2826 = vadd.f32 0.0, %v2825
      %v2827 = vpop.f32.mrb[0].mxu0
      %2828 = vmatprep.mubr.bf16.mxu0 0
      %2829 = vmatmul.mubr.bf16.gmra.mrb[0].mxu0 %v584
      %v2830 = vpop.f32.mrb[0].mxu0
      %v2831 = vadd.f32 0.0, %v2830
      %v2832 = vpop.f32.mrb[0].mxu0
      %v2833 = vpop.f32.mrb[0].mxu0
      %v2834 = vadd.f32 0.0, %v2833
      %v2835 = vpop.f32.mrb[0].mxu0
      %2836 = vmatprep.mubr.bf16.mxu0 0
      %2837 = vmatmul.mubr.bf16.gmra.mrb[0].mxu0 %v587
      %v2838 = vpop.f32.mrb[0].mxu0
      %v2839 = vadd.f32 0.0, %v2838
      %v2840 = vpop.f32.mrb[0].mxu0
      %v2841 = vpop.f32.mrb[0].mxu0
      %v2842 = vadd.f32 0.0, %v2841
      %v2843 = vpop.f32.mrb[0].mxu0
      %2844 = vmatprep.mubr.bf16.mxu0 0
      %2845 = vmatmul.mubr.bf16.gmra.mrb[0].mxu0 %v590
      %v2846 = vpop.f32.mrb[0].mxu0
      %v2847 = vadd.f32 0.0, %v2846
      %v2848 = vpop.f32.mrb[0].mxu0
      %v2849 = vpop.f32.mrb[0].mxu0
      %v2850 = vadd.f32 0.0, %v2849
      %v2851 = vpop.f32.mrb[0].mxu0
      %2852 = vmatprep.mubr.bf16.mxu0 0
      %2853 = vmatmul.mubr.bf16.gmra.mrb[0].mxu0 %v593
      %v2854 = vpop.f32.mrb[0].mxu0
      %v2855 = vadd.f32 0.0, %v2854
      %v2856 = vpop.f32.mrb[0].mxu0
      %v2857 = vpop.f32.mrb[0].mxu0
      %v2858 = vadd.f32 0.0, %v2857
      %v2859 = vpop.f32.mrb[0].mxu0
      %2860 = vmatprep.mubr.bf16.mxu0 0
      %2861 = vmatmul.mubr.bf16.gmra.mrb[0].mxu0 %v596
      %v2862 = vpop.f32.mrb[0].mxu0
      %v2863 = vadd.f32 0.0, %v2862
      %v2864 = vpop.f32.mrb[0].mxu0
      %v2865 = vpop.f32.mrb[0].mxu0
      %v2866 = vadd.f32 0.0, %v2865
      %v2867 = vpop.f32.mrb[0].mxu0
      %2868 = vmatprep.mubr.bf16.mxu0 0
      %2869 = vmatmul.mubr.bf16.gmra.mrb[0].mxu0 %v599
      %v2870 = vpop.f32.mrb[0].mxu0
      %v2871 = vadd.f32 0.0, %v2870
      %v2872 = vpop.f32.mrb[0].mxu0
      %v2873 = vpop.f32.mrb[0].mxu0
      %v2874 = vadd.f32 0.0, %v2873
      %v2875 = vpop.f32.mrb[0].mxu0
      %2876 = vmatprep.mubr.bf16.mxu0 0
      %2877 = vmatmul.mubr.bf16.gmra.mrb[0].mxu0 %v602
      %v2878 = vpop.f32.mrb[0].mxu0
      %v2879 = vadd.f32 0.0, %v2878
      %v2880 = vpop.f32.mrb[0].mxu0
      %v2881 = vpop.f32.mrb[0].mxu0
      %v2882 = vadd.f32 0.0, %v2881
      %v2883 = vpop.f32.mrb[0].mxu0
      %2884 = vdwg.mxu0
      %v2885 = vld [vmem:[%s11] sm:$0x1]
      %v2887 = vlaneseq
      %v2888 = vshrl.u32 %v2887, 7
      %v2889 = vsub.s32 0, %v2888
      %v2890 = vrot.slane %v2885, %v2889
      %v2892 = vmul.f32 %v2759, %v2890
      %v2893 = vmul.f32 %v2762, %v2890
      %v2894 = vmul.f32 %v2767, %v2890
      %v2895 = vmul.f32 %v2770, %v2890
      %v2896 = vmul.f32 %v2775, %v2890
      %v2897 = vmul.f32 %v2778, %v2890
      %v2898 = vmul.f32 %v2783, %v2890
      %v2899 = vmul.f32 %v2786, %v2890
      %v2900 = vmul.f32 %v2791, %v2890
      %v2901 = vmul.f32 %v2794, %v2890
      %v2902 = vmul.f32 %v2799, %v2890
      %v2903 = vmul.f32 %v2802, %v2890
      %v2904 = vmul.f32 %v2807, %v2890
      %v2905 = vmul.f32 %v2810, %v2890
      %v2906 = vmul.f32 %v2815, %v2890
      %v2907 = vmul.f32 %v2818, %v2890
      %v2908 = vmul.f32 %v2823, %v2890
      %v2909 = vmul.f32 %v2826, %v2890
      %v2910 = vmul.f32 %v2831, %v2890
      %v2911 = vmul.f32 %v2834, %v2890
      %v2912 = vmul.f32 %v2839, %v2890
      %v2913 = vmul.f32 %v2842, %v2890
      %v2914 = vmul.f32 %v2847, %v2890
      %v2915 = vmul.f32 %v2850, %v2890
      %v2916 = vmul.f32 %v2855, %v2890
      %v2917 = vmul.f32 %v2858, %v2890
      %v2918 = vmul.f32 %v2863, %v2890
      %v2919 = vmul.f32 %v2866, %v2890
      %v2920 = vmul.f32 %v2871, %v2890
      %v2921 = vmul.f32 %v2874, %v2890
      %v2922 = vmul.f32 %v2879, %v2890
      %v2923 = vmul.f32 %v2882, %v2890
      %v2924 = vld [vmem:[%s12] sm:$0x1]
      %v2926 = vlaneseq
      %v2927 = vshrl.u32 %v2926, 7
      %v2928 = vsub.s32 0, %v2927
      %v2929 = vrot.slane %v2924, %v2928
      %v2931 = vadd.f32 %v2892, %v2929
      %v2932 = vadd.f32 %v2893, %v2929
      %v2933 = vadd.f32 %v2894, %v2929
      %v2934 = vadd.f32 %v2895, %v2929
      %v2935 = vadd.f32 %v2896, %v2929
      %v2936 = vadd.f32 %v2897, %v2929
      %v2937 = vadd.f32 %v2898, %v2929
      %v2938 = vadd.f32 %v2899, %v2929
      %v2939 = vadd.f32 %v2900, %v2929
      %v2940 = vadd.f32 %v2901, %v2929
      %v2941 = vadd.f32 %v2902, %v2929
      %v2942 = vadd.f32 %v2903, %v2929
      %v2943 = vadd.f32 %v2904, %v2929
      %v2944 = vadd.f32 %v2905, %v2929
      %v2945 = vadd.f32 %v2906, %v2929
      %v2946 = vadd.f32 %v2907, %v2929
      %v2947 = vadd.f32 %v2908, %v2929
      %v2948 = vadd.f32 %v2909, %v2929
      %v2949 = vadd.f32 %v2910, %v2929
      %v2950 = vadd.f32 %v2911, %v2929
      %v2951 = vadd.f32 %v2912, %v2929
      %v2952 = vadd.f32 %v2913, %v2929
      %v2953 = vadd.f32 %v2914, %v2929
      %v2954 = vadd.f32 %v2915, %v2929
      %v2955 = vadd.f32 %v2916, %v2929
      %v2956 = vadd.f32 %v2917, %v2929
      %v2957 = vadd.f32 %v2918, %v2929
      %v2958 = vadd.f32 %v2919, %v2929
      %v2959 = vadd.f32 %v2920, %v2929
      %v2960 = vadd.f32 %v2921, %v2929
      %v2961 = vadd.f32 %v2922, %v2929
      %v2962 = vadd.f32 %v2923, %v2929
      %v2963 = vadd.f32 %v2688, %v2931
      %v2964 = vadd.f32 %v2689, %v2932
      %v2965 = vadd.f32 %v2690, %v2933
      %v2966 = vadd.f32 %v2691, %v2934
      %v2967 = vadd.f32 %v2692, %v2935
      %v2968 = vadd.f32 %v2693, %v2936
      %v2969 = vadd.f32 %v2694, %v2937
      %v2970 = vadd.f32 %v2695, %v2938
      %v2971 = vadd.f32 %v2696, %v2939
      %v2972 = vadd.f32 %v2697, %v2940
      %v2973 = vadd.f32 %v2698, %v2941
      %v2974 = vadd.f32 %v2699, %v2942
      %v2975 = vadd.f32 %v2700, %v2943
      %v2976 = vadd.f32 %v2701, %v2944
      %v2977 = vadd.f32 %v2702, %v2945
      %v2978 = vadd.f32 %v2703, %v2946
      %v2979 = vadd.f32 %v2704, %v2947
      %v2980 = vadd.f32 %v2705, %v2948
      %v2981 = vadd.f32 %v2706, %v2949
      %v2982 = vadd.f32 %v2707, %v2950
      %v2983 = vadd.f32 %v2708, %v2951
      %v2984 = vadd.f32 %v2709, %v2952
      %v2985 = vadd.f32 %v2710, %v2953
      %v2986 = vadd.f32 %v2711, %v2954
      %v2987 = vadd.f32 %v2712, %v2955
      %v2988 = vadd.f32 %v2713, %v2956
      %v2989 = vadd.f32 %v2714, %v2957
      %v2990 = vadd.f32 %v2715, %v2958
      %v2991 = vadd.f32 %v2716, %v2959
      %v2992 = vadd.f32 %v2717, %v2960
      %v2993 = vadd.f32 %v2718, %v2961
      %v2994 = vadd.f32 %v2719, %v2962
      %v2995 = vmax.f32 %v2963, 0.0
      %v2996 = vmax.f32 %v2964, 0.0
      %v2997 = vmax.f32 %v2965, 0.0
      %v2998 = vmax.f32 %v2966, 0.0
      %v2999 = vmax.f32 %v2967, 0.0
      %v3000 = vmax.f32 %v2968, 0.0
      %v3001 = vmax.f32 %v2969, 0.0
      %v3002 = vmax.f32 %v2970, 0.0
      %v3003 = vmax.f32 %v2971, 0.0
      %v3004 = vmax.f32 %v2972, 0.0
      %v3005 = vmax.f32 %v2973, 0.0
      %v3006 = vmax.f32 %v2974, 0.0
      %v3007 = vmax.f32 %v2975, 0.0
      %v3008 = vmax.f32 %v2976, 0.0
      %v3009 = vmax.f32 %v2977, 0.0
      %v3010 = vmax.f32 %v2978, 0.0
      %v3011 = vmax.f32 %v2979, 0.0
      %v3012 = vmax.f32 %v2980, 0.0
      %v3013 = vmax.f32 %v2981, 0.0
      %v3014 = vmax.f32 %v2982, 0.0
      %v3015 = vmax.f32 %v2983, 0.0
      %v3016 = vmax.f32 %v2984, 0.0
      %v3017 = vmax.f32 %v2985, 0.0
      %v3018 = vmax.f32 %v2986, 0.0
      %v3019 = vmax.f32 %v2987, 0.0
      %v3020 = vmax.f32 %v2988, 0.0
      %v3021 = vmax.f32 %v2989, 0.0
      %v3022 = vmax.f32 %v2990, 0.0
      %v3023 = vmax.f32 %v2991, 0.0
      %v3024 = vmax.f32 %v2992, 0.0
      %v3025 = vmax.f32 %v2993, 0.0
      %v3026 = vmax.f32 %v2994, 0.0
      %vm3027 = vcmask 130048
      %3028 = vst.msk [vmem:[%s440] sm:$0xff] %vm3027, %v2995
      %3029 = vst.msk [vmem:[%s440 + $0x8] sm:$0xff] %vm3027, %v2996
      %3030 = vst.msk [vmem:[%s440 + $0x10] sm:$0xff] %vm3027, %v2997
      %3031 = vst.msk [vmem:[%s440 + $0x18] sm:$0xff] %vm3027, %v2998
      %3032 = vst.msk [vmem:[%s440 + $0x20] sm:$0xff] %vm3027, %v2999
      %3033 = vst.msk [vmem:[%s440 + $0x28] sm:$0xff] %vm3027, %v3000
      %3034 = vst.msk [vmem:[%s440 + $0x30] sm:$0xff] %vm3027, %v3001
      %3035 = vst.msk [vmem:[%s440 + $0x38] sm:$0xff] %vm3027, %v3002
      %3036 = vst.msk [vmem:[%s440 + $0x40] sm:$0xff] %vm3027, %v3003
      %3037 = vst.msk [vmem:[%s440 + $0x48] sm:$0xff] %vm3027, %v3004
      %3038 = vst.msk [vmem:[%s440 + $0x50] sm:$0xff] %vm3027, %v3005
      %3039 = vst.msk [vmem:[%s440 + $0x58] sm:$0xff] %vm3027, %v3006
      %3040 = vst.msk [vmem:[%s440 + $0x60] sm:$0xff] %vm3027, %v3007
      %3041 = vst.msk [vmem:[%s440 + $0x68] sm:$0xff] %vm3027, %v3008
      %3042 = vst.msk [vmem:[%s440 + $0x70] sm:$0xff] %vm3027, %v3009
      %3043 = vst.msk [vmem:[%s440 + $0x78] sm:$0xff] %vm3027, %v3010
      %3044 = vst.msk [vmem:[%s440 + $0x80] sm:$0xff] %vm3027, %v3011
      %3045 = vst.msk [vmem:[%s440 + $0x88] sm:$0xff] %vm3027, %v3012
      %3046 = vst.msk [vmem:[%s440 + $0x90] sm:$0xff] %vm3027, %v3013
      %3047 = vst.msk [vmem:[%s440 + $0x98] sm:$0xff] %vm3027, %v3014
      %3048 = vst.msk [vmem:[%s440 + $0xa0] sm:$0xff] %vm3027, %v3015
      %3049 = vst.msk [vmem:[%s440 + $0xa8] sm:$0xff] %vm3027, %v3016
      %3050 = vst.msk [vmem:[%s440 + $0xb0] sm:$0xff] %vm3027, %v3017
      %3051 = vst.msk [vmem:[%s440 + $0xb8] sm:$0xff] %vm3027, %v3018
      %3052 = vst.msk [vmem:[%s440 + $0xc0] sm:$0xff] %vm3027, %v3019
      %3053 = vst.msk [vmem:[%s440 + $0xc8] sm:$0xff] %vm3027, %v3020
      %3054 = vst.msk [vmem:[%s440 + $0xd0] sm:$0xff] %vm3027, %v3021
      %3055 = vst.msk [vmem:[%s440 + $0xd8] sm:$0xff] %vm3027, %v3022
      %3056 = vst.msk [vmem:[%s440 + $0xe0] sm:$0xff] %vm3027, %v3023
      %3057 = vst.msk [vmem:[%s440 + $0xe8] sm:$0xff] %vm3027, %v3024
      %3058 = vst.msk [vmem:[%s440 + $0xf0] sm:$0xff] %vm3027, %v3025
      %3059 = vst.msk [vmem:[%s440 + $0xf8] sm:$0xff] %vm3027, %v3026
      %p3060 = scmp.lt.s32.totalorder %s24, 1
      %s3061 = scalar_select %p3060, %s24, 1
      %s3062 = smul.addr %s3061, 32
      %s3063 = smul.addr %s3062, 8
      %s3064 = scalar_lea.vmem %s13, %s3063
      // Predicated region
      $region73: #{tpu_custom_call.1} parent=71 // pred_check
        %p3065 = pneg %p320
      $region74: #{tpu_custom_call.1} parent=71 // pred_check_branch
        %3067 = sbr.rel (%p3065) target = $region76
      $region75: #{tpu_custom_call.1} parent=71 // pred_region
        _
      $region76: #{tpu_custom_call.1} parent=71 // pred_fallthru
        _
    $region72: #{tpu_custom_call.1} parent=5 // pred_fallthru
      _
    %p3068 = scmp.le.s32.totalorder 2, %s19
    // Predicated region
    $region77: #{tpu_custom_call.1} parent=5 // pred_check
      %p3069 = pneg %p3068
    $region78: #{tpu_custom_call.1} parent=5 // pred_check_branch
      %3071 = sbr.rel (%p3069) target = $region80
    $region79: #{tpu_custom_call.1} parent=5 // pred_region
      %s3072 = ssub.s32 %s19, 2
      // Predicated region
      $region81: #{tpu_custom_call.1} parent=79 // pred_check
        %p3073 = pneg %p326
      $region82: #{tpu_custom_call.1} parent=79 // pred_check_branch
        %3075 = sbr.rel (%p3073) target = $region84
      $region83: #{tpu_custom_call.1} parent=79 // pred_region
        %p3076 = scmp.lt.s32.totalorder %s25, 1
        %s3077 = scalar_select %p3076, %s25, 1
        %s3078 = smul.addr %s3077, 32
        %s3079 = smul.addr %s3078, 8
        %s3080 = scalar_lea.vmem %s13, %s3079
      $region84: #{tpu_custom_call.1} parent=79 // pred_fallthru
        _
    $region80: #{tpu_custom_call.1} parent=5 // pred_fallthru
      _
  $region6: #{tpu_custom_call.1} parent=0 // loop_footer
    %s23 = sadd.s32 1, %s19
  $region7: #{tpu_custom_call.1} parent=0 // loop_footer_branch
    %18 = sbr.rel target = $region3
  $region8: #{tpu_custom_call.1} parent=0 // loop_exit
    _

</llo_original>
